<compile_context>
chip_gen: v5e
topology: v5e:2x2
jax: 0.10.0
libtpu: 0.0.40
codegen_flags: <defaults>
</compile_context>

<pallas_src>
import math
from functools import partial

import numpy as np
import jax
import jax.numpy as jnp
from jax.experimental import pallas as pl
from jax.experimental.pallas import tpu as pltpu


_VMEM_LIMIT = 64 * 1024 * 1024  # raised per review (re-derive on v7x: 64MiB/TC)


def _pick_tile(dim, preferred, quantum):
    """Largest tile <= preferred that divides `dim` and is a multiple of
    `quantum`; falls back to the full extent (a block equal to the array dim is
    always a legal TPU block shape), so no operand ever needs padding."""
    if dim <= preferred:
        return dim
    t = (preferred // quantum) * quantum
    while t >= quantum:
        if dim % t == 0:
            return t
        t -= quantum
    return dim


# ----------------------------------------------------------------------------
# Tiled linear kernel: y = act(LN?(x) @ w + b) [+ residual]
# ----------------------------------------------------------------------------
def _linear_kernel(*refs, activation, gk, has_residual, has_ln, eps):
    it = iter(refs)
    x_ref = next(it)
    w_ref = next(it)
    b_ref = next(it)
    lng_ref = next(it) if has_ln else None
    lnb_ref = next(it) if has_ln else None
    res_ref = next(it) if has_residual else None
    o_ref = next(it)
    acc_ref = next(it)

    k = pl.program_id(2)

    @pl.when(k == 0)
    def _():
        acc_ref[...] = jnp.zeros_like(acc_ref)

    xv = x_ref[...]                                   # bf16 tile (cast upstream)
    if has_ln:                                        # fused LayerNorm (gk == 1)
        xf = xv.astype(jnp.float32)
        mean = jnp.mean(xf, axis=-1, keepdims=True)
        var = jnp.mean(jnp.square(xf - mean), axis=-1, keepdims=True)
        xv = ((xf - mean) * jax.lax.rsqrt(var + eps) * lng_ref[...]
              + lnb_ref[...]).astype(jnp.bfloat16)

    acc_ref[...] += jnp.dot(xv, w_ref[...], preferred_element_type=jnp.float32)

    @pl.when(k == gk - 1)
    def _():
        y = acc_ref[...] + b_ref[...]
        if activation == "gelu":
            # TODO(synk): reference nn.GELU is exact erf-based; tanh approx here.
            c = 0.7978845608028654  # sqrt(2/pi)
            y = 0.5 * y * (1.0 + jnp.tanh(c * (y + 0.044715 * y * y * y)))
        elif activation == "softmax":
            m = jnp.max(y, axis=-1, keepdims=True)
            e = jnp.exp(y - m)
            y = e / jnp.sum(e, axis=-1, keepdims=True)      # exact division
        if has_residual:
            y = y + res_ref[...].astype(jnp.float32)
        o_ref[...] = y.astype(o_ref.dtype)


def linear_pallas(x, w, b, *, activation="none", residual=None, ln=None,
                  ln_eps=1e-6, out_dtype=jnp.bfloat16,
                  tm=512, tn=512, tk=1024):
    """x:(M,K), w:(K,N), b:(N,) -> (M,N).  bf16 MXU operands, f32 accumulator.

    ln=(gamma, beta) fuses a row LayerNorm on x (requires a single K tile).
    residual (M,N) is added in the epilogue.  activation in {none, gelu, softmax}.
    """
    x = x.astype(jnp.bfloat16)          # wrapper-side cast: bf16 LHS DMA stream
    w = w.astype(jnp.bfloat16)
    M, K = x.shape
    Kw, N = w.shape
    assert K == Kw
    tm = _pick_tile(M, tm, 8)
    tn = _pick_tile(N, tn, 128)
    tk = K if ln is not None else _pick_tile(K, tk, 128)
    gm, gn, gk = M // tm, N // tn, K // tk
    if activation == "softmax":
        assert gn == 1, "fused softmax needs a single N tile"
    if ln is not None:
        assert gk == 1, "fused LayerNorm needs a single K tile"

    b2 = b.reshape(1, N).astype(jnp.float32)
    in_specs = [
        pl.BlockSpec((tm, tk), lambda i, j, k: (i, k)),
        pl.BlockSpec((tk, tn), lambda i, j, k: (k, j)),
        pl.BlockSpec((1, tn), lambda i, j, k: (0, j)),
    ]
    args = [x, w, b2]
    has_ln = ln is not None
    if has_ln:
        g, bb = ln
        in_specs.append(pl.BlockSpec((1, tk), lambda i, j, k: (0, k)))
        in_specs.append(pl.BlockSpec((1, tk), lambda i, j, k: (0, k)))
        args += [g.reshape(1, K).astype(jnp.float32),
                 bb.reshape(1, K).astype(jnp.float32)]
    has_residual = residual is not None
    if has_residual:
        in_specs.append(pl.BlockSpec((tm, tn), lambda i, j, k: (i, j)))
        args.append(residual)

    return pl.pallas_call(
        partial(_linear_kernel, activation=activation, gk=gk,
                has_residual=has_residual, has_ln=has_ln, eps=ln_eps),
        out_shape=jax.ShapeDtypeStruct((M, N), out_dtype),
        grid=(gm, gn, gk),
        in_specs=in_specs,
        out_specs=pl.BlockSpec((tm, tn), lambda i, j, k: (i, j)),
        scratch_shapes=[pltpu.VMEM((tm, tn), jnp.float32)],
        compiler_params=pltpu.CompilerParams(
            dimension_semantics=("parallel", "parallel", "arbitrary"),
            vmem_limit_bytes=_VMEM_LIMIT),
    )(*args)


# ----------------------------------------------------------------------------
# Fused MHA block kernel: LN1 -> batched QKV -> per-head attn -> out-proj -> +x
# ----------------------------------------------------------------------------
def _mha_block_kernel(x_ref, wqkv_ref, bqkv_ref, wo_ref, bo_ref, g_ref, b_ref,
                      o_ref, acc_sc, *, num_heads, head_dim, eps, scale):
    E = num_heads * head_dim
    x = x_ref[0].astype(jnp.float32)                       # (S, E)
    mean = jnp.mean(x, axis=-1, keepdims=True)
    var = jnp.mean(jnp.square(x - mean), axis=-1, keepdims=True)
    xn = ((x - mean) * jax.lax.rsqrt(var + eps) * g_ref[...] + b_ref[...]
          ).astype(jnp.bfloat16)                           # (S, E) bf16

    # Batched QKV projection: one full-lane-width (S,E)x(E,3E) MXU matmul
    # instead of 3*num_heads width-Dh matmuls.
    qkv = jnp.dot(xn, wqkv_ref[...],
                  preferred_element_type=jnp.float32) + bqkv_ref[...]   # (S,3E)

    for h in range(num_heads):
        lo = h * head_dim
        q = (qkv[:, lo:lo + head_dim] * scale).astype(jnp.bfloat16)
        k = qkv[:, E + lo:E + lo + head_dim].astype(jnp.bfloat16)
        v = qkv[:, 2 * E + lo:2 * E + lo + head_dim].astype(jnp.bfloat16)
        s = jax.lax.dot_general(q, k, (((1,), (1,)), ((), ())),
                                preferred_element_type=jnp.float32)     # (S,S)
        m = jnp.max(s, axis=-1, keepdims=True)
        p = jnp.exp(s - m)
        p = p / jnp.sum(p, axis=-1, keepdims=True)          # exact normalisation
        o_h = jnp.dot(p.astype(jnp.bfloat16), v,
                      preferred_element_type=jnp.float32)               # (S,Dh)
        # Out-projection accumulated head-by-head into a VMEM scratch so no
        # (S,E) accumulator is register-carried across the head loop.
        # TODO(synk): batch the out-proj into one (S,E)x(E,E) matmul (needs
        # lane-offset scratch stores) and flash-tile over KV for long S / v7x.
        contrib = jnp.dot(o_h.astype(jnp.bfloat16), wo_ref[h],
                          preferred_element_type=jnp.float32)           # (S,E)
        if h == 0:
            acc_sc[...] = contrib
        else:
            acc_sc[...] += contrib

    o_ref[0] = (x_ref[0].astype(jnp.float32) + acc_sc[...] + bo_ref[...]
                ).astype(o_ref.dtype)


def mha_block_pallas(x, wqkv, bqkv, wo, bo, ln_g, ln_b, *, num_heads, eps=1e-6):
    """x:(N,S,E) bf16 -> x + MHA(LN1(x)), fused per batch element."""
    N, S, E = x.shape
    Dh = E // num_heads
    scale = 1.0 / math.sqrt(Dh)
    return pl.pallas_call(
        partial(_mha_block_kernel, num_heads=num_heads, head_dim=Dh,
                eps=eps, scale=scale),
        out_shape=jax.ShapeDtypeStruct((N, S, E), jnp.bfloat16),
        grid=(N,),
        in_specs=[
            pl.BlockSpec((1, S, E), lambda n: (n, 0, 0)),
            pl.BlockSpec((E, 3 * E), lambda n: (0, 0)),
            pl.BlockSpec((1, 3 * E), lambda n: (0, 0)),
            pl.BlockSpec((num_heads, Dh, E), lambda n: (0, 0, 0)),
            pl.BlockSpec((1, E), lambda n: (0, 0)),
            pl.BlockSpec((1, E), lambda n: (0, 0)),
            pl.BlockSpec((1, E), lambda n: (0, 0)),
        ],
        out_specs=pl.BlockSpec((1, S, E), lambda n: (n, 0, 0)),
        scratch_shapes=[pltpu.VMEM((S, E), jnp.float32)],
        compiler_params=pltpu.CompilerParams(
            dimension_semantics=("parallel",),
            vmem_limit_bytes=_VMEM_LIMIT),
    )(x, wqkv, bqkv, wo, bo, ln_g, ln_b)


# ----------------------------------------------------------------------------
# Host-side parameter prep (init-time only)
# ----------------------------------------------------------------------------
def _resize_axis(w, axis, out_len):
    """1-D linear interpolation along `axis` (PyTorch align_corners=False)."""
    in_len = w.shape[axis]
    if in_len == out_len:
        return w
    src = (np.arange(out_len) + 0.5) * in_len / out_len - 0.5
    src = np.clip(src, 0.0, in_len - 1)
    lo = np.floor(src).astype(np.int64)
    hi = np.minimum(lo + 1, in_len - 1)
    frac = (src - lo).astype(np.float32)
    a = np.take(w, lo, axis=axis)
    b = np.take(w, hi, axis=axis)
    shape = [1] * w.ndim
    shape[axis] = out_len
    f = frac.reshape(shape)
    return a * (1.0 - f) + b * f


def trilinear_resize(w, out_size):
    w = _resize_axis(w, 2, out_size[0])
    w = _resize_axis(w, 3, out_size[1])
    w = _resize_axis(w, 4, out_size[2])
    return w.astype(np.float32)


def calc_conv_shape(video_shape, hidden_dim, kernel_size, stride, offset):
    ks, st, off = np.array(kernel_size), np.array(stride), np.array(offset)
    out = np.ceil((np.array(video_shape[1:]) - off - ks + 1) / st).astype(int)
    return np.concatenate([np.array([hidden_dim // 6]), out]).astype(int)


def generate_position_embedding(video_shape, hidden_dim, kernel_sizes, strides, offsets):
    tau = 10000.0
    pieces = [np.zeros((hidden_dim, 1), np.float32)]
    for i in range(len(kernel_sizes)):
        shape = calc_conv_shape(video_shape, hidden_dim, kernel_sizes[i], strides[i], offsets[i])
        tmp = np.zeros((hidden_dim, shape[1], shape[2], shape[3]), np.float32)
        for j in range(shape[0]):
            w = 1.0 / (tau ** j)
            for t in range(shape[1]):
                for x in range(shape[2]):
                    for y in range(shape[3]):
                        tt = t * strides[i][0] + offsets[i][0] + kernel_sizes[i][0] // 2
                        xx = x * strides[i][1] + offsets[i][1] + kernel_sizes[i][1] // 2
                        yy = y * strides[i][2] + offsets[i][2] + kernel_sizes[i][2] // 2
                        tmp[6 * j:6 * (j + 1), t, x, y] = [
                            math.sin(tt * w), math.cos(tt * w),
                            math.sin(xx * w), math.cos(xx * w),
                            math.sin(yy * w), math.cos(yy * w),
                        ]
        pieces.append(tmp.reshape(hidden_dim, -1))
    pos = np.concatenate(pieces, axis=-1)   # (hidden, 1 + total_tokens)
    return jnp.asarray(pos.T)               # (1 + total_tokens, hidden)


# ----------------------------------------------------------------------------
# Model forward
# ----------------------------------------------------------------------------
KERNEL_SIZES = ((8, 8, 8), (16, 4, 4), (4, 12, 12), (1, 16, 16))
STRIDES = ((16, 32, 32), (6, 32, 32), (16, 32, 32), (32, 16, 16))
OFFSETS = ((0, 0, 0), (4, 8, 8), (0, 16, 16), (0, 0, 0))


def sparse_tubes_tokenizer(x, tube_w, conv_b, hidden_dim):
    """x:(N,3,T,H,W) f32 -> tokens (N, P_total, hidden) bf16.

    Patches are extracted features-last (no HBM transpose); feature order is
    (c, kt, kh, kw), matching the flattened conv weight.  The projection runs
    in the tiled Pallas matmul kernel with bf16 operands."""
    N = x.shape[0]
    tubes = []
    for i, (ks, st, off) in enumerate(zip(KERNEL_SIZES, STRIDES, OFFSETS)):
        xs = x[:, :, off[0]:, off[1]:, off[2]:]
        patches = jax.lax.conv_general_dilated_patches(
            xs, filter_shape=ks, window_strides=st, padding="VALID",
            dimension_numbers=("NCTHW", "OITHW", "NTHWC"),
            precision=jax.lax.Precision.HIGHEST)        # (N, T', H', W', C*k)
        _, Ts, Hs, Ws, K = patches.shape
        P = Ts * Hs * Ws
        patches = patches.reshape(N * P, K).astype(jnp.bfloat16)
        out = linear_pallas(patches, tube_w[i], conv_b[i],
                            out_dtype=jnp.bfloat16)
        tubes.append(out.reshape(N, P, hidden_dim))
    return jnp.concatenate(tubes, axis=1)


def encoder_block(x, p, num_heads):
    N, S, E = x.shape
    # Fused: LN1 -> batched QKV -> attention -> out-proj -> +residual
    x = mha_block_pallas(x, p["wqkv"], p["bqkv"], p["wo"], p["bo"],
                         p["ln1_g"], p["ln1_b"], num_heads=num_heads)
    x2 = x.reshape(N * S, E)
    # MLP: LN2 fused into the first matmul, GELU fused in its epilogue,
    # residual fused into the second matmul epilogue.  All bf16 activations.
    y = linear_pallas(x2, p["mlp_w1"], p["mlp_b1"], activation="gelu",
                      ln=(p["ln2_g"], p["ln2_b"]))
    y = linear_pallas(y, p["mlp_w2"], p["mlp_b2"], residual=x2)
    return y.reshape(N, S, E)


def tubevit_forward(x, params, num_heads):
    hidden_dim = params["class_token"].shape[-1]
    tokens = sparse_tubes_tokenizer(x, params["tube_w"], params["conv_b"],
                                    hidden_dim)
    N = tokens.shape[0]
    cls = jnp.broadcast_to(params["class_token"].astype(jnp.bfloat16),
                           (N, 1, hidden_dim))
    h = jnp.concatenate([cls, tokens], axis=1)                 # (N, S, E) bf16
    h = (h.astype(jnp.float32) + params["pos_embedding"]).astype(jnp.bfloat16)

    for lp in params["layers"]:
        h = encoder_block(h, lp, num_heads)

    # Final LN is row-wise and only the cls row feeds the head, so skip the
    # full-sequence LN and fuse it (plus the class softmax) into the head.
    cls_tok = h[:, 0]                                          # (N, E) bf16
    return linear_pallas(cls_tok, params["head_w"], params["head_b"],
                         activation="softmax",
                         ln=(params["ln_g"], params["ln_b"]),
                         out_dtype=jnp.float32)


# ----------------------------------------------------------------------------
# Deterministic parameter init + demo
# ----------------------------------------------------------------------------
def init_params(key, video_shape, hidden_dim, mlp_dim, num_layers, num_heads,
                num_classes):
    assert hidden_dim % num_heads == 0 and hidden_dim % 6 == 0
    E = hidden_dim
    Dh = E // num_heads
    keys = jax.random.split(key, 2 + 4 * num_layers)
    ki = iter(keys)

    # tube projection weights: base (hidden, 3, 8,8,8); resized + flattened ONCE
    conv_w = np.asarray(jax.random.normal(next(ki), (E, 3, *KERNEL_SIZES[0]),
                                          jnp.float32))
    tube_w = []
    for i, ks in enumerate(KERNEL_SIZES):
        w = conv_w if i == 0 else trilinear_resize(conv_w, ks)
        tube_w.append(jnp.asarray(w.reshape(E, -1).T, dtype=jnp.bfloat16))
    conv_b = jnp.zeros((len(KERNEL_SIZES), E), jnp.float32)

    class_token = jnp.zeros((1, 1, E), jnp.float32)
    pos_embedding = generate_position_embedding(video_shape, E, KERNEL_SIZES,
                                                STRIDES, OFFSETS)

    def w_init(k, shape, scale=0.02):
        return (scale * jax.random.normal(k, shape, jnp.float32)).astype(jnp.bfloat16)

    layers = []
    for _ in range(num_layers):
        k_qkv, k_o, k_m1, k_m2 = next(ki), next(ki), next(ki), next(ki)
        layers.append(dict(
            ln1_g=jnp.ones((1, E), jnp.float32),
            ln1_b=jnp.zeros((1, E), jnp.float32),
            # columns ordered [q | k | v], head-major inside each third
            wqkv=w_init(k_qkv, (E, 3 * E)),
            bqkv=jnp.zeros((1, 3 * E), jnp.float32),
            wo=w_init(k_o, (num_heads, Dh, E)),
            bo=jnp.zeros((1, E), jnp.float32),
            ln2_g=jnp.ones((1, E), jnp.float32),
            ln2_b=jnp.zeros((1, E), jnp.float32),
            mlp_w1=w_init(k_m1, (E, mlp_dim)),
            mlp_b1=jnp.zeros((mlp_dim,), jnp.float32),
            mlp_w2=w_init(k_m2, (mlp_dim, E)),
            mlp_b2=jnp.zeros((E,), jnp.float32),
        ))

    return dict(
        tube_w=tube_w,
        conv_b=conv_b,
        class_token=class_token,
        pos_embedding=pos_embedding,
        layers=layers,
        ln_g=jnp.ones((1, E), jnp.float32),
        ln_b=jnp.zeros((1, E), jnp.float32),
        head_w=w_init(next(ki), (E, num_classes)),
        head_b=jnp.zeros((num_classes,), jnp.float32),
    )


if __name__ == "__main__":
    # Small but consistent shapes: video (C=3, T=32, H=32, W=32), batch 2.
    N, C, T, H, W = 2, 3, 32, 32, 32
    hidden_dim, mlp_dim = 48, 96
    num_heads, num_layers, num_classes = 4, 2, 10
    video_shape = (C, T, H, W)

    key = jax.random.PRNGKey(0)
    k_param, k_x = jax.random.split(key)
    params = init_params(k_param, video_shape, hidden_dim, mlp_dim,
                         num_layers, num_heads, num_classes)
    x = jax.random.normal(k_x, (N, C, T, H, W), jnp.float32)

    forward = jax.jit(lambda xv, p: tubevit_forward(xv, p, num_heads))
    out = jax.block_until_ready(forward(x, params))

    assert out.shape == (N, num_classes), out.shape
    out_np = np.asarray(out)
    assert np.isfinite(out_np).all()
    assert np.allclose(out_np.sum(axis=-1), 1.0, atol=1e-4), out_np.sum(axis=-1)
    print("KERNEL_OK")
</pallas_src>

<mosaic_0001>
module attributes {stable_mosaic.version = 11 : i64} {
  func.func @_linear_kernel(%arg0: i32, %arg1: i32, %arg2: i32, %arg3: memref<8x768xbf16, #tpu.memory_space<vmem>>, %arg4: memref<768x48xbf16, #tpu.memory_space<vmem>>, %arg5: memref<1x48xf32, #tpu.memory_space<vmem>>, %arg6: memref<8x48xbf16, #tpu.memory_space<vmem>>, %arg7: memref<8x48xf32, #tpu.memory_space<vmem>>) attributes {dimension_semantics = [#tpu.dimension_semantics<parallel>, #tpu.dimension_semantics<parallel>, #tpu.dimension_semantics<arbitrary>], iteration_bounds = array<i64: 1, 1, 1>, scalar_prefetch = 0 : i64, scratch_operands = 1 : i64, tpu.core_type = #tpu.core_type<tc>, window_params = [{transform_indices = @transform_0, window_bounds = array<i64: 8, 768>}, {transform_indices = @transform_1, window_bounds = array<i64: 768, 48>}, {transform_indices = @transform_2, window_bounds = array<i64: 1, 48>}, {transform_indices = @transform_3, window_bounds = array<i64: 8, 48>}]} {
    %c0_i32 = arith.constant 0 : i32
    %0 = arith.cmpi eq, %arg2, %c0_i32 : i32
    %1 = arith.extui %0 : i1 to i32
    %c0_i32_0 = arith.constant 0 : i32
    %2 = arith.cmpi ne, %1, %c0_i32_0 : i32
    scf.if %2 {
      %cst_10 = arith.constant 0.000000e+00 : f32
      %12 = vector.broadcast %cst_10 : f32 to vector<8x48xf32>
      %c0_11 = arith.constant 0 : index
      %c0_12 = arith.constant 0 : index
      %13 = vector.load %arg7[%c0_11, %c0_12] : memref<8x48xf32, #tpu.memory_space<vmem>>, vector<8x48xf32>
      tpu.vector_store %arg7[%c0_11, %c0_12], %12 {strides = array<i32>} : memref<8x48xf32, #tpu.memory_space<vmem>>, vector<8x48xf32>,
    } else {
    }
    %c0 = arith.constant 0 : index
    %c0_1 = arith.constant 0 : index
    %3 = vector.load %arg3[%c0, %c0_1] : memref<8x768xbf16, #tpu.memory_space<vmem>>, vector<8x768xbf16>
    %c0_2 = arith.constant 0 : index
    %c0_3 = arith.constant 0 : index
    %4 = vector.load %arg7[%c0_2, %c0_3] : memref<8x48xf32, #tpu.memory_space<vmem>>, vector<8x48xf32>
    %c0_4 = arith.constant 0 : index
    %c0_5 = arith.constant 0 : index
    %5 = vector.load %arg4[%c0_4, %c0_5] : memref<768x48xbf16, #tpu.memory_space<vmem>>, vector<768x48xbf16>
    %cst = arith.constant dense<0.000000e+00> : vector<8x48xf32>
    %6 = tpu.matmul %3, %5, %cst {dimension_numbers = #tpu.dot_dimension_numbers<[1], [0], [0], [1], [0, 0, 1, 1], [], []>} : vector<8x768xbf16>, vector<768x48xbf16>, vector<8x48xf32> -> vector<8x48xf32>
    %7 = arith.addf %4, %6 : vector<8x48xf32>
    %c0_6 = arith.constant 0 : index
    %c0_7 = arith.constant 0 : index
    %8 = vector.load %arg7[%c0_6, %c0_7] : memref<8x48xf32, #tpu.memory_space<vmem>>, vector<8x48xf32>
    tpu.vector_store %arg7[%c0_6, %c0_7], %7 {strides = array<i32>} : memref<8x48xf32, #tpu.memory_space<vmem>>, vector<8x48xf32>,
    %c0_i32_8 = arith.constant 0 : i32
    %9 = arith.cmpi eq, %arg2, %c0_i32_8 : i32
    %10 = arith.extui %9 : i1 to i32
    %c0_i32_9 = arith.constant 0 : i32
    %11 = arith.cmpi ne, %10, %c0_i32_9 : i32
    scf.if %11 {
      %c0_10 = arith.constant 0 : index
      %c0_11 = arith.constant 0 : index
      %12 = vector.load %arg7[%c0_10, %c0_11] : memref<8x48xf32, #tpu.memory_space<vmem>>, vector<8x48xf32>
      %c0_12 = arith.constant 0 : index
      %c0_13 = arith.constant 0 : index
      %13 = vector.load %arg5[%c0_12, %c0_13] : memref<1x48xf32, #tpu.memory_space<vmem>>, vector<1x48xf32>
      %14 = vector.broadcast %13 : vector<1x48xf32> to vector<8x48xf32>
      %15 = arith.addf %12, %14 : vector<8x48xf32>
      %16 = arith.truncf %15 : vector<8x48xf32> to vector<8x48xbf16>
      %c0_14 = arith.constant 0 : index
      %c0_15 = arith.constant 0 : index
      %17 = vector.load %arg6[%c0_14, %c0_15] : memref<8x48xbf16, #tpu.memory_space<vmem>>, vector<8x48xbf16>
      tpu.vector_store %arg6[%c0_14, %c0_15], %16 {strides = array<i32>} : memref<8x48xbf16, #tpu.memory_space<vmem>>, vector<8x48xbf16>,
    } else {
    }
    return
  }
  func.func @transform_0(%arg0: i32, %arg1: i32, %arg2: i32) -> (i32, i32) {
    %c0_i32 = arith.constant 0 : i32
    return %arg0, %arg2 : i32, i32
  }
  func.func @transform_1(%arg0: i32, %arg1: i32, %arg2: i32) -> (i32, i32) {
    %c0_i32 = arith.constant 0 : i32
    return %arg2, %arg1 : i32, i32
  }
  func.func @transform_2(%arg0: i32, %arg1: i32, %arg2: i32) -> (i32, i32) {
    %c0_i32 = arith.constant 0 : i32
    %c0_i32_0 = arith.constant 0 : i32
    return %c0_i32, %arg1 : i32, i32
  }
  func.func @transform_3(%arg0: i32, %arg1: i32, %arg2: i32) -> (i32, i32) {
    %c0_i32 = arith.constant 0 : i32
    return %arg0, %arg1 : i32, i32
  }
}

module attributes {stable_mosaic.version = 11 : i64} {
  func.func @_linear_kernel(%arg0: i32, %arg1: i32, %arg2: i32, %arg3: memref<6x768xbf16, #tpu.memory_space<vmem>>, %arg4: memref<768x48xbf16, #tpu.memory_space<vmem>>, %arg5: memref<1x48xf32, #tpu.memory_space<vmem>>, %arg6: memref<6x48xbf16, #tpu.memory_space<vmem>>, %arg7: memref<6x48xf32, #tpu.memory_space<vmem>>) attributes {dimension_semantics = [#tpu.dimension_semantics<parallel>, #tpu.dimension_semantics<parallel>, #tpu.dimension_semantics<arbitrary>], iteration_bounds = array<i64: 1, 1, 1>, scalar_prefetch = 0 : i64, scratch_operands = 1 : i64, tpu.core_type = #tpu.core_type<tc>, window_params = [{transform_indices = @transform_0, window_bounds = array<i64: 6, 768>}, {transform_indices = @transform_1, window_bounds = array<i64: 768, 48>}, {transform_indices = @transform_2, window_bounds = array<i64: 1, 48>}, {transform_indices = @transform_3, window_bounds = array<i64: 6, 48>}]} {
    %c0_i32 = arith.constant 0 : i32
    %0 = arith.cmpi eq, %arg2, %c0_i32 : i32
    %1 = arith.extui %0 : i1 to i32
    %c0_i32_0 = arith.constant 0 : i32
    %2 = arith.cmpi ne, %1, %c0_i32_0 : i32
    scf.if %2 {
      %cst_10 = arith.constant 0.000000e+00 : f32
      %12 = vector.broadcast %cst_10 : f32 to vector<6x48xf32>
      %c0_11 = arith.constant 0 : index
      %c0_12 = arith.constant 0 : index
      %13 = vector.load %arg7[%c0_11, %c0_12] : memref<6x48xf32, #tpu.memory_space<vmem>>, vector<6x48xf32>
      tpu.vector_store %arg7[%c0_11, %c0_12], %12 {strides = array<i32>} : memref<6x48xf32, #tpu.memory_space<vmem>>, vector<6x48xf32>,
    } else {
    }
    %c0 = arith.constant 0 : index
    %c0_1 = arith.constant 0 : index
    %3 = vector.load %arg3[%c0, %c0_1] : memref<6x768xbf16, #tpu.memory_space<vmem>>, vector<6x768xbf16>
    %c0_2 = arith.constant 0 : index
    %c0_3 = arith.constant 0 : index
    %4 = vector.load %arg7[%c0_2, %c0_3] : memref<6x48xf32, #tpu.memory_space<vmem>>, vector<6x48xf32>
    %c0_4 = arith.constant 0 : index
    %c0_5 = arith.constant 0 : index
    %5 = vector.load %arg4[%c0_4, %c0_5] : memref<768x48xbf16, #tpu.memory_space<vmem>>, vector<768x48xbf16>
    %cst = arith.constant dense<0.000000e+00> : vector<6x48xf32>
    %6 = tpu.matmul %3, %5, %cst {dimension_numbers = #tpu.dot_dimension_numbers<[1], [0], [0], [1], [0, 0, 1, 1], [], []>} : vector<6x768xbf16>, vector<768x48xbf16>, vector<6x48xf32> -> vector<6x48xf32>
    %7 = arith.addf %4, %6 : vector<6x48xf32>
    %c0_6 = arith.constant 0 : index
    %c0_7 = arith.constant 0 : index
    %8 = vector.load %arg7[%c0_6, %c0_7] : memref<6x48xf32, #tpu.memory_space<vmem>>, vector<6x48xf32>
    tpu.vector_store %arg7[%c0_6, %c0_7], %7 {strides = array<i32>} : memref<6x48xf32, #tpu.memory_space<vmem>>, vector<6x48xf32>,
    %c0_i32_8 = arith.constant 0 : i32
    %9 = arith.cmpi eq, %arg2, %c0_i32_8 : i32
    %10 = arith.extui %9 : i1 to i32
    %c0_i32_9 = arith.constant 0 : i32
    %11 = arith.cmpi ne, %10, %c0_i32_9 : i32
    scf.if %11 {
      %c0_10 = arith.constant 0 : index
      %c0_11 = arith.constant 0 : index
      %12 = vector.load %arg7[%c0_10, %c0_11] : memref<6x48xf32, #tpu.memory_space<vmem>>, vector<6x48xf32>
      %c0_12 = arith.constant 0 : index
      %c0_13 = arith.constant 0 : index
      %13 = vector.load %arg5[%c0_12, %c0_13] : memref<1x48xf32, #tpu.memory_space<vmem>>, vector<1x48xf32>
      %14 = vector.broadcast %13 : vector<1x48xf32> to vector<6x48xf32>
      %15 = arith.addf %12, %14 : vector<6x48xf32>
      %16 = arith.truncf %15 : vector<6x48xf32> to vector<6x48xbf16>
      %c0_14 = arith.constant 0 : index
      %c0_15 = arith.constant 0 : index
      %17 = vector.load %arg6[%c0_14, %c0_15] : memref<6x48xbf16, #tpu.memory_space<vmem>>, vector<6x48xbf16>
      tpu.vector_store %arg6[%c0_14, %c0_15], %16 {strides = array<i32>} : memref<6x48xbf16, #tpu.memory_space<vmem>>, vector<6x48xbf16>,
    } else {
    }
    return
  }
  func.func @transform_0(%arg0: i32, %arg1: i32, %arg2: i32) -> (i32, i32) {
    %c0_i32 = arith.constant 0 : i32
    return %arg0, %arg2 : i32, i32
  }
  func.func @transform_1(%arg0: i32, %arg1: i32, %arg2: i32) -> (i32, i32) {
    %c0_i32 = arith.constant 0 : i32
    return %arg2, %arg1 : i32, i32
  }
  func.func @transform_2(%arg0: i32, %arg1: i32, %arg2: i32) -> (i32, i32) {
    %c0_i32 = arith.constant 0 : i32
    %c0_i32_0 = arith.constant 0 : i32
    return %c0_i32, %arg1 : i32, i32
  }
  func.func @transform_3(%arg0: i32, %arg1: i32, %arg2: i32) -> (i32, i32) {
    %c0_i32 = arith.constant 0 : i32
    return %arg0, %arg1 : i32, i32
  }
}

module attributes {stable_mosaic.version = 11 : i64} {
  func.func @_linear_kernel(%arg0: i32, %arg1: i32, %arg2: i32, %arg3: memref<4x1728xbf16, #tpu.memory_space<vmem>>, %arg4: memref<1728x48xbf16, #tpu.memory_space<vmem>>, %arg5: memref<1x48xf32, #tpu.memory_space<vmem>>, %arg6: memref<4x48xbf16, #tpu.memory_space<vmem>>, %arg7: memref<4x48xf32, #tpu.memory_space<vmem>>) attributes {dimension_semantics = [#tpu.dimension_semantics<parallel>, #tpu.dimension_semantics<parallel>, #tpu.dimension_semantics<arbitrary>], iteration_bounds = array<i64: 1, 1, 1>, scalar_prefetch = 0 : i64, scratch_operands = 1 : i64, tpu.core_type = #tpu.core_type<tc>, window_params = [{transform_indices = @transform_0, window_bounds = array<i64: 4, 1728>}, {transform_indices = @transform_1, window_bounds = array<i64: 1728, 48>}, {transform_indices = @transform_2, window_bounds = array<i64: 1, 48>}, {transform_indices = @transform_3, window_bounds = array<i64: 4, 48>}]} {
    %c0_i32 = arith.constant 0 : i32
    %0 = arith.cmpi eq, %arg2, %c0_i32 : i32
    %1 = arith.extui %0 : i1 to i32
    %c0_i32_0 = arith.constant 0 : i32
    %2 = arith.cmpi ne, %1, %c0_i32_0 : i32
    scf.if %2 {
      %cst_10 = arith.constant 0.000000e+00 : f32
      %12 = vector.broadcast %cst_10 : f32 to vector<4x48xf32>
      %c0_11 = arith.constant 0 : index
      %c0_12 = arith.constant 0 : index
      %13 = vector.load %arg7[%c0_11, %c0_12] : memref<4x48xf32, #tpu.memory_space<vmem>>, vector<4x48xf32>
      tpu.vector_store %arg7[%c0_11, %c0_12], %12 {strides = array<i32>} : memref<4x48xf32, #tpu.memory_space<vmem>>, vector<4x48xf32>,
    } else {
    }
    %c0 = arith.constant 0 : index
    %c0_1 = arith.constant 0 : index
    %3 = vector.load %arg3[%c0, %c0_1] : memref<4x1728xbf16, #tpu.memory_space<vmem>>, vector<4x1728xbf16>
    %c0_2 = arith.constant 0 : index
    %c0_3 = arith.constant 0 : index
    %4 = vector.load %arg7[%c0_2, %c0_3] : memref<4x48xf32, #tpu.memory_space<vmem>>, vector<4x48xf32>
    %c0_4 = arith.constant 0 : index
    %c0_5 = arith.constant 0 : index
    %5 = vector.load %arg4[%c0_4, %c0_5] : memref<1728x48xbf16, #tpu.memory_space<vmem>>, vector<1728x48xbf16>
    %cst = arith.constant dense<0.000000e+00> : vector<4x48xf32>
    %6 = tpu.matmul %3, %5, %cst {dimension_numbers = #tpu.dot_dimension_numbers<[1], [0], [0], [1], [0, 0, 1, 1], [], []>} : vector<4x1728xbf16>, vector<1728x48xbf16>, vector<4x48xf32> -> vector<4x48xf32>
    %7 = arith.addf %4, %6 : vector<4x48xf32>
    %c0_6 = arith.constant 0 : index
    %c0_7 = arith.constant 0 : index
    %8 = vector.load %arg7[%c0_6, %c0_7] : memref<4x48xf32, #tpu.memory_space<vmem>>, vector<4x48xf32>
    tpu.vector_store %arg7[%c0_6, %c0_7], %7 {strides = array<i32>} : memref<4x48xf32, #tpu.memory_space<vmem>>, vector<4x48xf32>,
    %c0_i32_8 = arith.constant 0 : i32
    %9 = arith.cmpi eq, %arg2, %c0_i32_8 : i32
    %10 = arith.extui %9 : i1 to i32
    %c0_i32_9 = arith.constant 0 : i32
    %11 = arith.cmpi ne, %10, %c0_i32_9 : i32
    scf.if %11 {
      %c0_10 = arith.constant 0 : index
      %c0_11 = arith.constant 0 : index
      %12 = vector.load %arg7[%c0_10, %c0_11] : memref<4x48xf32, #tpu.memory_space<vmem>>, vector<4x48xf32>
      %c0_12 = arith.constant 0 : index
      %c0_13 = arith.constant 0 : index
      %13 = vector.load %arg5[%c0_12, %c0_13] : memref<1x48xf32, #tpu.memory_space<vmem>>, vector<1x48xf32>
      %14 = vector.broadcast %13 : vector<1x48xf32> to vector<4x48xf32>
      %15 = arith.addf %12, %14 : vector<4x48xf32>
      %16 = arith.truncf %15 : vector<4x48xf32> to vector<4x48xbf16>
      %c0_14 = arith.constant 0 : index
      %c0_15 = arith.constant 0 : index
      %17 = vector.load %arg6[%c0_14, %c0_15] : memref<4x48xbf16, #tpu.memory_space<vmem>>, vector<4x48xbf16>
      tpu.vector_store %arg6[%c0_14, %c0_15], %16 {strides = array<i32>} : memref<4x48xbf16, #tpu.memory_space<vmem>>, vector<4x48xbf16>,
    } else {
    }
    return
  }
  func.func @transform_0(%arg0: i32, %arg1: i32, %arg2: i32) -> (i32, i32) {
    %c0_i32 = arith.constant 0 : i32
    return %arg0, %arg2 : i32, i32
  }
  func.func @transform_1(%arg0: i32, %arg1: i32, %arg2: i32) -> (i32, i32) {
    %c0_i32 = arith.constant 0 : i32
    return %arg2, %arg1 : i32, i32
  }
  func.func @transform_2(%arg0: i32, %arg1: i32, %arg2: i32) -> (i32, i32) {
    %c0_i32 = arith.constant 0 : i32
    %c0_i32_0 = arith.constant 0 : i32
    return %c0_i32, %arg1 : i32, i32
  }
  func.func @transform_3(%arg0: i32, %arg1: i32, %arg2: i32) -> (i32, i32) {
    %c0_i32 = arith.constant 0 : i32
    return %arg0, %arg1 : i32, i32
  }
}

module attributes {stable_mosaic.version = 11 : i64} {
  func.func @_linear_kernel(%arg0: i32, %arg1: i32, %arg2: i32, %arg3: memref<4x768xbf16, #tpu.memory_space<vmem>>, %arg4: memref<768x48xbf16, #tpu.memory_space<vmem>>, %arg5: memref<1x48xf32, #tpu.memory_space<vmem>>, %arg6: memref<4x48xbf16, #tpu.memory_space<vmem>>, %arg7: memref<4x48xf32, #tpu.memory_space<vmem>>) attributes {dimension_semantics = [#tpu.dimension_semantics<parallel>, #tpu.dimension_semantics<parallel>, #tpu.dimension_semantics<arbitrary>], iteration_bounds = array<i64: 1, 1, 2>, scalar_prefetch = 0 : i64, scratch_operands = 1 : i64, tpu.core_type = #tpu.core_type<tc>, window_params = [{transform_indices = @transform_0, window_bounds = array<i64: 4, 768>}, {transform_indices = @transform_1, window_bounds = array<i64: 768, 48>}, {transform_indices = @transform_2, window_bounds = array<i64: 1, 48>}, {transform_indices = @transform_3, window_bounds = array<i64: 4, 48>}]} {
    %c0_i32 = arith.constant 0 : i32
    %0 = arith.cmpi eq, %arg2, %c0_i32 : i32
    %1 = arith.extui %0 : i1 to i32
    %c0_i32_0 = arith.constant 0 : i32
    %2 = arith.cmpi ne, %1, %c0_i32_0 : i32
    scf.if %2 {
      %cst_9 = arith.constant 0.000000e+00 : f32
      %12 = vector.broadcast %cst_9 : f32 to vector<4x48xf32>
      %c0_10 = arith.constant 0 : index
      %c0_11 = arith.constant 0 : index
      %13 = vector.load %arg7[%c0_10, %c0_11] : memref<4x48xf32, #tpu.memory_space<vmem>>, vector<4x48xf32>
      tpu.vector_store %arg7[%c0_10, %c0_11], %12 {strides = array<i32>} : memref<4x48xf32, #tpu.memory_space<vmem>>, vector<4x48xf32>,
    } else {
    }
    %c0 = arith.constant 0 : index
    %c0_1 = arith.constant 0 : index
    %3 = vector.load %arg3[%c0, %c0_1] : memref<4x768xbf16, #tpu.memory_space<vmem>>, vector<4x768xbf16>
    %c0_2 = arith.constant 0 : index
    %c0_3 = arith.constant 0 : index
    %4 = vector.load %arg7[%c0_2, %c0_3] : memref<4x48xf32, #tpu.memory_space<vmem>>, vector<4x48xf32>
    %c0_4 = arith.constant 0 : index
    %c0_5 = arith.constant 0 : index
    %5 = vector.load %arg4[%c0_4, %c0_5] : memref<768x48xbf16, #tpu.memory_space<vmem>>, vector<768x48xbf16>
    %cst = arith.constant dense<0.000000e+00> : vector<4x48xf32>
    %6 = tpu.matmul %3, %5, %cst {dimension_numbers = #tpu.dot_dimension_numbers<[1], [0], [0], [1], [0, 0, 1, 1], [], []>} : vector<4x768xbf16>, vector<768x48xbf16>, vector<4x48xf32> -> vector<4x48xf32>
    %7 = arith.addf %4, %6 : vector<4x48xf32>
    %c0_6 = arith.constant 0 : index
    %c0_7 = arith.constant 0 : index
    %8 = vector.load %arg7[%c0_6, %c0_7] : memref<4x48xf32, #tpu.memory_space<vmem>>, vector<4x48xf32>
    tpu.vector_store %arg7[%c0_6, %c0_7], %7 {strides = array<i32>} : memref<4x48xf32, #tpu.memory_space<vmem>>, vector<4x48xf32>,
    %c1_i32 = arith.constant 1 : i32
    %9 = arith.cmpi eq, %arg2, %c1_i32 : i32
    %10 = arith.extui %9 : i1 to i32
    %c0_i32_8 = arith.constant 0 : i32
    %11 = arith.cmpi ne, %10, %c0_i32_8 : i32
    scf.if %11 {
      %c0_9 = arith.constant 0 : index
      %c0_10 = arith.constant 0 : index
      %12 = vector.load %arg7[%c0_9, %c0_10] : memref<4x48xf32, #tpu.memory_space<vmem>>, vector<4x48xf32>
      %c0_11 = arith.constant 0 : index
      %c0_12 = arith.constant 0 : index
      %13 = vector.load %arg5[%c0_11, %c0_12] : memref<1x48xf32, #tpu.memory_space<vmem>>, vector<1x48xf32>
      %14 = vector.broadcast %13 : vector<1x48xf32> to vector<4x48xf32>
      %15 = arith.addf %12, %14 : vector<4x48xf32>
      %16 = arith.truncf %15 : vector<4x48xf32> to vector<4x48xbf16>
      %c0_13 = arith.constant 0 : index
      %c0_14 = arith.constant 0 : index
      %17 = vector.load %arg6[%c0_13, %c0_14] : memref<4x48xbf16, #tpu.memory_space<vmem>>, vector<4x48xbf16>
      tpu.vector_store %arg6[%c0_13, %c0_14], %16 {strides = array<i32>} : memref<4x48xbf16, #tpu.memory_space<vmem>>, vector<4x48xbf16>,
    } else {
    }
    return
  }
  func.func @transform_0(%arg0: i32, %arg1: i32, %arg2: i32) -> (i32, i32) {
    %c0_i32 = arith.constant 0 : i32
    return %arg0, %arg2 : i32, i32
  }
  func.func @transform_1(%arg0: i32, %arg1: i32, %arg2: i32) -> (i32, i32) {
    %c0_i32 = arith.constant 0 : i32
    return %arg2, %arg1 : i32, i32
  }
  func.func @transform_2(%arg0: i32, %arg1: i32, %arg2: i32) -> (i32, i32) {
    %c0_i32 = arith.constant 0 : i32
    %c0_i32_0 = arith.constant 0 : i32
    return %c0_i32, %arg1 : i32, i32
  }
  func.func @transform_3(%arg0: i32, %arg1: i32, %arg2: i32) -> (i32, i32) {
    %c0_i32 = arith.constant 0 : i32
    return %arg0, %arg1 : i32, i32
  }
}

module attributes {stable_mosaic.version = 11 : i64} {
  func.func @_mha_block_kernel(%arg0: i32, %arg1: memref<1x12x48xbf16, #tpu.memory_space<vmem>>, %arg2: memref<48x144xbf16, #tpu.memory_space<vmem>>, %arg3: memref<1x144xf32, #tpu.memory_space<vmem>>, %arg4: memref<4x12x48xbf16, #tpu.memory_space<vmem>>, %arg5: memref<1x48xf32, #tpu.memory_space<vmem>>, %arg6: memref<1x48xf32, #tpu.memory_space<vmem>>, %arg7: memref<1x48xf32, #tpu.memory_space<vmem>>, %arg8: memref<1x12x48xbf16, #tpu.memory_space<vmem>>, %arg9: memref<12x48xf32, #tpu.memory_space<vmem>>) attributes {dimension_semantics = [#tpu.dimension_semantics<parallel>], iteration_bounds = array<i64: 2>, scalar_prefetch = 0 : i64, scratch_operands = 1 : i64, tpu.core_type = #tpu.core_type<tc>, window_params = [{transform_indices = @transform_0, window_bounds = array<i64: 1, 12, 48>}, {pipeline_mode = #tpu.pipeline_mode<synchronous>, transform_indices = @transform_1, window_bounds = array<i64: 48, 144>}, {pipeline_mode = #tpu.pipeline_mode<synchronous>, transform_indices = @transform_2, window_bounds = array<i64: 1, 144>}, {pipeline_mode = #tpu.pipeline_mode<synchronous>, transform_indices = @transform_3, window_bounds = array<i64: 4, 12, 48>}, {pipeline_mode = #tpu.pipeline_mode<synchronous>, transform_indices = @transform_4, window_bounds = array<i64: 1, 48>}, {pipeline_mode = #tpu.pipeline_mode<synchronous>, transform_indices = @transform_5, window_bounds = array<i64: 1, 48>}, {pipeline_mode = #tpu.pipeline_mode<synchronous>, transform_indices = @transform_6, window_bounds = array<i64: 1, 48>}, {transform_indices = @transform_7, window_bounds = array<i64: 1, 12, 48>}]} {
    %c0 = arith.constant 0 : index
    %c0_0 = arith.constant 0 : index
    %c0_1 = arith.constant 0 : index
    %0 = vector.load %arg1[%c0, %c0_0, %c0_1] : memref<1x12x48xbf16, #tpu.memory_space<vmem>>, vector<1x12x48xbf16>
    %1 = vector.shape_cast %0 : vector<1x12x48xbf16> to vector<12x48xbf16>
    %2 = arith.extf %1 : vector<12x48xbf16> to vector<12x48xf32>
    %cst = arith.constant dense<0.000000e+00> : vector<12xf32>
    %3 = vector.multi_reduction <add>, %2, %cst [1] : vector<12x48xf32> to vector<12xf32>
    %4 = vector.shape_cast %3 : vector<12xf32> to vector<12x1xf32>
    %cst_2 = arith.constant 4.800000e+01 : f32
    %5 = vector.broadcast %cst_2 : f32 to vector<12x1xf32>
    %6 = arith.divf %4, %5 : vector<12x1xf32>
    %7 = vector.broadcast %6 : vector<12x1xf32> to vector<12x48xf32>
    %8 = arith.subf %2, %7 : vector<12x48xf32>
    %9 = arith.mulf %8, %8 : vector<12x48xf32>
    %cst_3 = arith.constant dense<0.000000e+00> : vector<12xf32>
    %10 = vector.multi_reduction <add>, %9, %cst_3 [1] : vector<12x48xf32> to vector<12xf32>
    %11 = vector.shape_cast %10 : vector<12xf32> to vector<12x1xf32>
    %cst_4 = arith.constant 4.800000e+01 : f32
    %12 = vector.broadcast %cst_4 : f32 to vector<12x1xf32>
    %13 = arith.divf %11, %12 : vector<12x1xf32>
    %14 = vector.broadcast %6 : vector<12x1xf32> to vector<12x48xf32>
    %15 = arith.subf %2, %14 : vector<12x48xf32>
    %cst_5 = arith.constant 9.99999997E-7 : f32
    %16 = vector.broadcast %cst_5 : f32 to vector<12x1xf32>
    %17 = arith.addf %13, %16 : vector<12x1xf32>
    %18 = math.rsqrt %17 : vector<12x1xf32>
    %19 = vector.broadcast %18 : vector<12x1xf32> to vector<12x48xf32>
    %20 = arith.mulf %15, %19 : vector<12x48xf32>
    %c0_6 = arith.constant 0 : index
    %c0_7 = arith.constant 0 : index
    %21 = vector.load %arg6[%c0_6, %c0_7] : memref<1x48xf32, #tpu.memory_space<vmem>>, vector<1x48xf32>
    %22 = vector.broadcast %21 : vector<1x48xf32> to vector<12x48xf32>
    %23 = arith.mulf %20, %22 : vector<12x48xf32>
    %c0_8 = arith.constant 0 : index
    %c0_9 = arith.constant 0 : index
    %24 = vector.load %arg7[%c0_8, %c0_9] : memref<1x48xf32, #tpu.memory_space<vmem>>, vector<1x48xf32>
    %25 = vector.broadcast %24 : vector<1x48xf32> to vector<12x48xf32>
    %26 = arith.addf %23, %25 : vector<12x48xf32>
    %27 = arith.truncf %26 : vector<12x48xf32> to vector<12x48xbf16>
    %c0_10 = arith.constant 0 : index
    %c0_11 = arith.constant 0 : index
    %28 = vector.load %arg2[%c0_10, %c0_11] : memref<48x144xbf16, #tpu.memory_space<vmem>>, vector<48x144xbf16>
    %cst_12 = arith.constant dense<0.000000e+00> : vector<12x144xf32>
    %29 = tpu.matmul %27, %28, %cst_12 {dimension_numbers = #tpu.dot_dimension_numbers<[1], [0], [0], [1], [0, 0, 1, 1], [], []>} : vector<12x48xbf16>, vector<48x144xbf16>, vector<12x144xf32> -> vector<12x144xf32>
    %c0_13 = arith.constant 0 : index
    %c0_14 = arith.constant 0 : index
    %30 = vector.load %arg3[%c0_13, %c0_14] : memref<1x144xf32, #tpu.memory_space<vmem>>, vector<1x144xf32>
    %31 = vector.broadcast %30 : vector<1x144xf32> to vector<12x144xf32>
    %32 = arith.addf %29, %31 : vector<12x144xf32>
    %33 = vector.extract_strided_slice %32 {offsets = [0, 0], sizes = [12, 12], strides = [1, 1]} : vector<12x144xf32> to vector<12x12xf32>
    %cst_15 = arith.constant 0.288675129 : f32
    %34 = vector.broadcast %cst_15 : f32 to vector<12x12xf32>
    %35 = arith.mulf %33, %34 : vector<12x12xf32>
    %36 = arith.truncf %35 : vector<12x12xf32> to vector<12x12xbf16>
    %37 = vector.extract_strided_slice %32 {offsets = [0, 48], sizes = [12, 12], strides = [1, 1]} : vector<12x144xf32> to vector<12x12xf32>
    %38 = arith.truncf %37 : vector<12x12xf32> to vector<12x12xbf16>
    %39 = vector.extract_strided_slice %32 {offsets = [0, 96], sizes = [12, 12], strides = [1, 1]} : vector<12x144xf32> to vector<12x12xf32>
    %40 = arith.truncf %39 : vector<12x12xf32> to vector<12x12xbf16>
    %cst_16 = arith.constant dense<0.000000e+00> : vector<12x12xf32>
    %41 = tpu.matmul %36, %38, %cst_16 {dimension_numbers = #tpu.dot_dimension_numbers<[1], [1], [0], [0], [0, 0, 1, 0], [], []>} : vector<12x12xbf16>, vector<12x12xbf16>, vector<12x12xf32> -> vector<12x12xf32>
    %cst_17 = arith.constant dense<0xFF800000> : vector<12xf32>
    %42 = vector.multi_reduction <maximumf>, %41, %cst_17 [1] : vector<12x12xf32> to vector<12xf32>
    %43 = vector.shape_cast %42 : vector<12xf32> to vector<12x1xf32>
    %44 = vector.broadcast %43 : vector<12x1xf32> to vector<12x12xf32>
    %45 = arith.subf %41, %44 : vector<12x12xf32>
    %46 = math.exp %45 : vector<12x12xf32>
    %cst_18 = arith.constant dense<0.000000e+00> : vector<12xf32>
    %47 = vector.multi_reduction <add>, %46, %cst_18 [1] : vector<12x12xf32> to vector<12xf32>
    %48 = vector.shape_cast %47 : vector<12xf32> to vector<12x1xf32>
    %49 = vector.broadcast %48 : vector<12x1xf32> to vector<12x12xf32>
    %50 = arith.divf %46, %49 : vector<12x12xf32>
    %51 = arith.truncf %50 : vector<12x12xf32> to vector<12x12xbf16>
    %cst_19 = arith.constant dense<0.000000e+00> : vector<12x12xf32>
    %52 = tpu.matmul %51, %40, %cst_19 {dimension_numbers = #tpu.dot_dimension_numbers<[1], [0], [0], [1], [0, 0, 1, 1], [], []>} : vector<12x12xbf16>, vector<12x12xbf16>, vector<12x12xf32> -> vector<12x12xf32>
    %53 = arith.truncf %52 : vector<12x12xf32> to vector<12x12xbf16>
    %c0_20 = arith.constant 0 : index
    %c0_21 = arith.constant 0 : index
    %c0_22 = arith.constant 0 : index
    %54 = vector.load %arg4[%c0_20, %c0_21, %c0_22] : memref<4x12x48xbf16, #tpu.memory_space<vmem>>, vector<1x12x48xbf16>
    %55 = vector.shape_cast %54 : vector<1x12x48xbf16> to vector<12x48xbf16>
    %cst_23 = arith.constant dense<0.000000e+00> : vector<12x48xf32>
    %56 = tpu.matmul %53, %55, %cst_23 {dimension_numbers = #tpu.dot_dimension_numbers<[1], [0], [0], [1], [0, 0, 1, 1], [], []>} : vector<12x12xbf16>, vector<12x48xbf16>, vector<12x48xf32> -> vector<12x48xf32>
    %c0_24 = arith.constant 0 : index
    %c0_25 = arith.constant 0 : index
    %57 = vector.load %arg9[%c0_24, %c0_25] : memref<12x48xf32, #tpu.memory_space<vmem>>, vector<12x48xf32>
    tpu.vector_store %arg9[%c0_24, %c0_25], %56 {strides = array<i32>} : memref<12x48xf32, #tpu.memory_space<vmem>>, vector<12x48xf32>,
    %58 = vector.extract_strided_slice %32 {offsets = [0, 12], sizes = [12, 12], strides = [1, 1]} : vector<12x144xf32> to vector<12x12xf32>
    %cst_26 = arith.constant 0.288675129 : f32
    %59 = vector.broadcast %cst_26 : f32 to vector<12x12xf32>
    %60 = arith.mulf %58, %59 : vector<12x12xf32>
    %61 = arith.truncf %60 : vector<12x12xf32> to vector<12x12xbf16>
    %62 = vector.extract_strided_slice %32 {offsets = [0, 60], sizes = [12, 12], strides = [1, 1]} : vector<12x144xf32> to vector<12x12xf32>
    %63 = arith.truncf %62 : vector<12x12xf32> to vector<12x12xbf16>
    %64 = vector.extract_strided_slice %32 {offsets = [0, 108], sizes = [12, 12], strides = [1, 1]} : vector<12x144xf32> to vector<12x12xf32>
    %65 = arith.truncf %64 : vector<12x12xf32> to vector<12x12xbf16>
    %cst_27 = arith.constant dense<0.000000e+00> : vector<12x12xf32>
    %66 = tpu.matmul %61, %63, %cst_27 {dimension_numbers = #tpu.dot_dimension_numbers<[1], [1], [0], [0], [0, 0, 1, 0], [], []>} : vector<12x12xbf16>, vector<12x12xbf16>, vector<12x12xf32> -> vector<12x12xf32>
    %cst_28 = arith.constant dense<0xFF800000> : vector<12xf32>
    %67 = vector.multi_reduction <maximumf>, %66, %cst_28 [1] : vector<12x12xf32> to vector<12xf32>
    %68 = vector.shape_cast %67 : vector<12xf32> to vector<12x1xf32>
    %69 = vector.broadcast %68 : vector<12x1xf32> to vector<12x12xf32>
    %70 = arith.subf %66, %69 : vector<12x12xf32>
    %71 = math.exp %70 : vector<12x12xf32>
    %cst_29 = arith.constant dense<0.000000e+00> : vector<12xf32>
    %72 = vector.multi_reduction <add>, %71, %cst_29 [1] : vector<12x12xf32> to vector<12xf32>
    %73 = vector.shape_cast %72 : vector<12xf32> to vector<12x1xf32>
    %74 = vector.broadcast %73 : vector<12x1xf32> to vector<12x12xf32>
    %75 = arith.divf %71, %74 : vector<12x12xf32>
    %76 = arith.truncf %75 : vector<12x12xf32> to vector<12x12xbf16>
    %cst_30 = arith.constant dense<0.000000e+00> : vector<12x12xf32>
    %77 = tpu.matmul %76, %65, %cst_30 {dimension_numbers = #tpu.dot_dimension_numbers<[1], [0], [0], [1], [0, 0, 1, 1], [], []>} : vector<12x12xbf16>, vector<12x12xbf16>, vector<12x12xf32> -> vector<12x12xf32>
    %78 = arith.truncf %77 : vector<12x12xf32> to vector<12x12xbf16>
    %c1 = arith.constant 1 : index
    %c0_31 = arith.constant 0 : index
    %c0_32 = arith.constant 0 : index
    %79 = vector.load %arg4[%c1, %c0_31, %c0_32] : memref<4x12x48xbf16, #tpu.memory_space<vmem>>, vector<1x12x48xbf16>
    %80 = vector.shape_cast %79 : vector<1x12x48xbf16> to vector<12x48xbf16>
    %cst_33 = arith.constant dense<0.000000e+00> : vector<12x48xf32>
    %81 = tpu.matmul %78, %80, %cst_33 {dimension_numbers = #tpu.dot_dimension_numbers<[1], [0], [0], [1], [0, 0, 1, 1], [], []>} : vector<12x12xbf16>, vector<12x48xbf16>, vector<12x48xf32> -> vector<12x48xf32>
    %c0_34 = arith.constant 0 : index
    %c0_35 = arith.constant 0 : index
    %82 = vector.load %arg9[%c0_34, %c0_35] : memref<12x48xf32, #tpu.memory_space<vmem>>, vector<12x48xf32>
    %83 = arith.addf %82, %81 : vector<12x48xf32>
    %c0_36 = arith.constant 0 : index
    %c0_37 = arith.constant 0 : index
    %84 = vector.load %arg9[%c0_36, %c0_37] : memref<12x48xf32, #tpu.memory_space<vmem>>, vector<12x48xf32>
    tpu.vector_store %arg9[%c0_36, %c0_37], %83 {strides = array<i32>} : memref<12x48xf32, #tpu.memory_space<vmem>>, vector<12x48xf32>,
    %85 = vector.extract_strided_slice %32 {offsets = [0, 24], sizes = [12, 12], strides = [1, 1]} : vector<12x144xf32> to vector<12x12xf32>
    %cst_38 = arith.constant 0.288675129 : f32
    %86 = vector.broadcast %cst_38 : f32 to vector<12x12xf32>
    %87 = arith.mulf %85, %86 : vector<12x12xf32>
    %88 = arith.truncf %87 : vector<12x12xf32> to vector<12x12xbf16>
    %89 = vector.extract_strided_slice %32 {offsets = [0, 72], sizes = [12, 12], strides = [1, 1]} : vector<12x144xf32> to vector<12x12xf32>
    %90 = arith.truncf %89 : vector<12x12xf32> to vector<12x12xbf16>
    %91 = vector.extract_strided_slice %32 {offsets = [0, 120], sizes = [12, 12], strides = [1, 1]} : vector<12x144xf32> to vector<12x12xf32>
    %92 = arith.truncf %91 : vector<12x12xf32> to vector<12x12xbf16>
    %cst_39 = arith.constant dense<0.000000e+00> : vector<12x12xf32>
    %93 = tpu.matmul %88, %90, %cst_39 {dimension_numbers = #tpu.dot_dimension_numbers<[1], [1], [0], [0], [0, 0, 1, 0], [], []>} : vector<12x12xbf16>, vector<12x12xbf16>, vector<12x12xf32> -> vector<12x12xf32>
    %cst_40 = arith.constant dense<0xFF800000> : vector<12xf32>
    %94 = vector.multi_reduction <maximumf>, %93, %cst_40 [1] : vector<12x12xf32> to vector<12xf32>
    %95 = vector.shape_cast %94 : vector<12xf32> to vector<12x1xf32>
    %96 = vector.broadcast %95 : vector<12x1xf32> to vector<12x12xf32>
    %97 = arith.subf %93, %96 : vector<12x12xf32>
    %98 = math.exp %97 : vector<12x12xf32>
    %cst_41 = arith.constant dense<0.000000e+00> : vector<12xf32>
    %99 = vector.multi_reduction <add>, %98, %cst_41 [1] : vector<12x12xf32> to vector<12xf32>
    %100 = vector.shape_cast %99 : vector<12xf32> to vector<12x1xf32>
    %101 = vector.broadcast %100 : vector<12x1xf32> to vector<12x12xf32>
    %102 = arith.divf %98, %101 : vector<12x12xf32>
    %103 = arith.truncf %102 : vector<12x12xf32> to vector<12x12xbf16>
    %cst_42 = arith.constant dense<0.000000e+00> : vector<12x12xf32>
    %104 = tpu.matmul %103, %92, %cst_42 {dimension_numbers = #tpu.dot_dimension_numbers<[1], [0], [0], [1], [0, 0, 1, 1], [], []>} : vector<12x12xbf16>, vector<12x12xbf16>, vector<12x12xf32> -> vector<12x12xf32>
    %105 = arith.truncf %104 : vector<12x12xf32> to vector<12x12xbf16>
    %c2 = arith.constant 2 : index
    %c0_43 = arith.constant 0 : index
    %c0_44 = arith.constant 0 : index
    %106 = vector.load %arg4[%c2, %c0_43, %c0_44] : memref<4x12x48xbf16, #tpu.memory_space<vmem>>, vector<1x12x48xbf16>
    %107 = vector.shape_cast %106 : vector<1x12x48xbf16> to vector<12x48xbf16>
    %cst_45 = arith.constant dense<0.000000e+00> : vector<12x48xf32>
    %108 = tpu.matmul %105, %107, %cst_45 {dimension_numbers = #tpu.dot_dimension_numbers<[1], [0], [0], [1], [0, 0, 1, 1], [], []>} : vector<12x12xbf16>, vector<12x48xbf16>, vector<12x48xf32> -> vector<12x48xf32>
    %c0_46 = arith.constant 0 : index
    %c0_47 = arith.constant 0 : index
    %109 = vector.load %arg9[%c0_46, %c0_47] : memref<12x48xf32, #tpu.memory_space<vmem>>, vector<12x48xf32>
    %110 = arith.addf %109, %108 : vector<12x48xf32>
    %c0_48 = arith.constant 0 : index
    %c0_49 = arith.constant 0 : index
    %111 = vector.load %arg9[%c0_48, %c0_49] : memref<12x48xf32, #tpu.memory_space<vmem>>, vector<12x48xf32>
    tpu.vector_store %arg9[%c0_48, %c0_49], %110 {strides = array<i32>} : memref<12x48xf32, #tpu.memory_space<vmem>>, vector<12x48xf32>,
    %112 = vector.extract_strided_slice %32 {offsets = [0, 36], sizes = [12, 12], strides = [1, 1]} : vector<12x144xf32> to vector<12x12xf32>
    %cst_50 = arith.constant 0.288675129 : f32
    %113 = vector.broadcast %cst_50 : f32 to vector<12x12xf32>
    %114 = arith.mulf %112, %113 : vector<12x12xf32>
    %115 = arith.truncf %114 : vector<12x12xf32> to vector<12x12xbf16>
    %116 = vector.extract_strided_slice %32 {offsets = [0, 84], sizes = [12, 12], strides = [1, 1]} : vector<12x144xf32> to vector<12x12xf32>
    %117 = arith.truncf %116 : vector<12x12xf32> to vector<12x12xbf16>
    %118 = vector.extract_strided_slice %32 {offsets = [0, 132], sizes = [12, 12], strides = [1, 1]} : vector<12x144xf32> to vector<12x12xf32>
    %119 = arith.truncf %118 : vector<12x12xf32> to vector<12x12xbf16>
    %cst_51 = arith.constant dense<0.000000e+00> : vector<12x12xf32>
    %120 = tpu.matmul %115, %117, %cst_51 {dimension_numbers = #tpu.dot_dimension_numbers<[1], [1], [0], [0], [0, 0, 1, 0], [], []>} : vector<12x12xbf16>, vector<12x12xbf16>, vector<12x12xf32> -> vector<12x12xf32>
    %cst_52 = arith.constant dense<0xFF800000> : vector<12xf32>
    %121 = vector.multi_reduction <maximumf>, %120, %cst_52 [1] : vector<12x12xf32> to vector<12xf32>
    %122 = vector.shape_cast %121 : vector<12xf32> to vector<12x1xf32>
    %123 = vector.broadcast %122 : vector<12x1xf32> to vector<12x12xf32>
    %124 = arith.subf %120, %123 : vector<12x12xf32>
    %125 = math.exp %124 : vector<12x12xf32>
    %cst_53 = arith.constant dense<0.000000e+00> : vector<12xf32>
    %126 = vector.multi_reduction <add>, %125, %cst_53 [1] : vector<12x12xf32> to vector<12xf32>
    %127 = vector.shape_cast %126 : vector<12xf32> to vector<12x1xf32>
    %128 = vector.broadcast %127 : vector<12x1xf32> to vector<12x12xf32>
    %129 = arith.divf %125, %128 : vector<12x12xf32>
    %130 = arith.truncf %129 : vector<12x12xf32> to vector<12x12xbf16>
    %cst_54 = arith.constant dense<0.000000e+00> : vector<12x12xf32>
    %131 = tpu.matmul %130, %119, %cst_54 {dimension_numbers = #tpu.dot_dimension_numbers<[1], [0], [0], [1], [0, 0, 1, 1], [], []>} : vector<12x12xbf16>, vector<12x12xbf16>, vector<12x12xf32> -> vector<12x12xf32>
    %132 = arith.truncf %131 : vector<12x12xf32> to vector<12x12xbf16>
    %c3 = arith.constant 3 : index
    %c0_55 = arith.constant 0 : index
    %c0_56 = arith.constant 0 : index
    %133 = vector.load %arg4[%c3, %c0_55, %c0_56] : memref<4x12x48xbf16, #tpu.memory_space<vmem>>, vector<1x12x48xbf16>
    %134 = vector.shape_cast %133 : vector<1x12x48xbf16> to vector<12x48xbf16>
    %cst_57 = arith.constant dense<0.000000e+00> : vector<12x48xf32>
    %135 = tpu.matmul %132, %134, %cst_57 {dimension_numbers = #tpu.dot_dimension_numbers<[1], [0], [0], [1], [0, 0, 1, 1], [], []>} : vector<12x12xbf16>, vector<12x48xbf16>, vector<12x48xf32> -> vector<12x48xf32>
    %c0_58 = arith.constant 0 : index
    %c0_59 = arith.constant 0 : index
    %136 = vector.load %arg9[%c0_58, %c0_59] : memref<12x48xf32, #tpu.memory_space<vmem>>, vector<12x48xf32>
    %137 = arith.addf %136, %135 : vector<12x48xf32>
    %c0_60 = arith.constant 0 : index
    %c0_61 = arith.constant 0 : index
    %138 = vector.load %arg9[%c0_60, %c0_61] : memref<12x48xf32, #tpu.memory_space<vmem>>, vector<12x48xf32>
    tpu.vector_store %arg9[%c0_60, %c0_61], %137 {strides = array<i32>} : memref<12x48xf32, #tpu.memory_space<vmem>>, vector<12x48xf32>,
    %c0_62 = arith.constant 0 : index
    %c0_63 = arith.constant 0 : index
    %c0_64 = arith.constant 0 : index
    %139 = vector.load %arg1[%c0_62, %c0_63, %c0_64] : memref<1x12x48xbf16, #tpu.memory_space<vmem>>, vector<1x12x48xbf16>
    %140 = vector.shape_cast %139 : vector<1x12x48xbf16> to vector<12x48xbf16>
    %141 = arith.extf %140 : vector<12x48xbf16> to vector<12x48xf32>
    %c0_65 = arith.constant 0 : index
    %c0_66 = arith.constant 0 : index
    %142 = vector.load %arg9[%c0_65, %c0_66] : memref<12x48xf32, #tpu.memory_space<vmem>>, vector<12x48xf32>
    %143 = arith.addf %141, %142 : vector<12x48xf32>
    %c0_67 = arith.constant 0 : index
    %c0_68 = arith.constant 0 : index
    %144 = vector.load %arg5[%c0_67, %c0_68] : memref<1x48xf32, #tpu.memory_space<vmem>>, vector<1x48xf32>
    %145 = vector.broadcast %144 : vector<1x48xf32> to vector<12x48xf32>
    %146 = arith.addf %143, %145 : vector<12x48xf32>
    %147 = arith.truncf %146 : vector<12x48xf32> to vector<12x48xbf16>
    %c0_69 = arith.constant 0 : index
    %c0_70 = arith.constant 0 : index
    %c0_71 = arith.constant 0 : index
    %148 = vector.load %arg8[%c0_69, %c0_70, %c0_71] : memref<1x12x48xbf16, #tpu.memory_space<vmem>>, vector<1x12x48xbf16>
    %149 = vector.shape_cast %148 : vector<1x12x48xbf16> to vector<12x48xbf16>
    %150 = vector.shape_cast %147 : vector<12x48xbf16> to vector<1x12x48xbf16>
    tpu.vector_store %arg8[%c0_69, %c0_70, %c0_71], %150 {strides = array<i32>} : memref<1x12x48xbf16, #tpu.memory_space<vmem>>, vector<1x12x48xbf16>,
    return
  }
  func.func @transform_0(%arg0: i32) -> (i32, i32, i32) {
    %c0_i32 = arith.constant 0 : i32
    %c0_i32_0 = arith.constant 0 : i32
    %c0_i32_1 = arith.constant 0 : i32
    return %arg0, %c0_i32, %c0_i32_0 : i32, i32, i32
  }
  func.func @transform_1(%arg0: i32) -> (i32, i32) {
    %c0_i32 = arith.constant 0 : i32
    %c0_i32_0 = arith.constant 0 : i32
    %c0_i32_1 = arith.constant 0 : i32
    return %c0_i32, %c0_i32_0 : i32, i32
  }
  func.func @transform_2(%arg0: i32) -> (i32, i32) {
    %c0_i32 = arith.constant 0 : i32
    %c0_i32_0 = arith.constant 0 : i32
    %c0_i32_1 = arith.constant 0 : i32
    return %c0_i32, %c0_i32_0 : i32, i32
  }
  func.func @transform_3(%arg0: i32) -> (i32, i32, i32) {
    %c0_i32 = arith.constant 0 : i32
    %c0_i32_0 = arith.constant 0 : i32
    %c0_i32_1 = arith.constant 0 : i32
    %c0_i32_2 = arith.constant 0 : i32
    return %c0_i32, %c0_i32_0, %c0_i32_1 : i32, i32, i32
  }
  func.func @transform_4(%arg0: i32) -> (i32, i32) {
    %c0_i32 = arith.constant 0 : i32
    %c0_i32_0 = arith.constant 0 : i32
    %c0_i32_1 = arith.constant 0 : i32
    return %c0_i32, %c0_i32_0 : i32, i32
  }
  func.func @transform_5(%arg0: i32) -> (i32, i32) {
    %c0_i32 = arith.constant 0 : i32
    %c0_i32_0 = arith.constant 0 : i32
    %c0_i32_1 = arith.constant 0 : i32
    return %c0_i32, %c0_i32_0 : i32, i32
  }
  func.func @transform_6(%arg0: i32) -> (i32, i32) {
    %c0_i32 = arith.constant 0 : i32
    %c0_i32_0 = arith.constant 0 : i32
    %c0_i32_1 = arith.constant 0 : i32
    return %c0_i32, %c0_i32_0 : i32, i32
  }
  func.func @transform_7(%arg0: i32) -> (i32, i32, i32) {
    %c0_i32 = arith.constant 0 : i32
    %c0_i32_0 = arith.constant 0 : i32
    %c0_i32_1 = arith.constant 0 : i32
    return %arg0, %c0_i32, %c0_i32_0 : i32, i32, i32
  }
}

module attributes {stable_mosaic.version = 11 : i64} {
  func.func @_linear_kernel(%arg0: i32, %arg1: i32, %arg2: i32, %arg3: memref<24x48xbf16, #tpu.memory_space<vmem>>, %arg4: memref<48x96xbf16, #tpu.memory_space<vmem>>, %arg5: memref<1x96xf32, #tpu.memory_space<vmem>>, %arg6: memref<1x48xf32, #tpu.memory_space<vmem>>, %arg7: memref<1x48xf32, #tpu.memory_space<vmem>>, %arg8: memref<24x96xbf16, #tpu.memory_space<vmem>>, %arg9: memref<24x96xf32, #tpu.memory_space<vmem>>) attributes {dimension_semantics = [#tpu.dimension_semantics<parallel>, #tpu.dimension_semantics<parallel>, #tpu.dimension_semantics<arbitrary>], iteration_bounds = array<i64: 1, 1, 1>, scalar_prefetch = 0 : i64, scratch_operands = 1 : i64, tpu.core_type = #tpu.core_type<tc>, window_params = [{transform_indices = @transform_0, window_bounds = array<i64: 24, 48>}, {transform_indices = @transform_1, window_bounds = array<i64: 48, 96>}, {transform_indices = @transform_2, window_bounds = array<i64: 1, 96>}, {transform_indices = @transform_3, window_bounds = array<i64: 1, 48>}, {transform_indices = @transform_4, window_bounds = array<i64: 1, 48>}, {transform_indices = @transform_5, window_bounds = array<i64: 24, 96>}]} {
    %c0_i32 = arith.constant 0 : i32
    %0 = arith.cmpi eq, %arg2, %c0_i32 : i32
    %1 = arith.extui %0 : i1 to i32
    %c0_i32_0 = arith.constant 0 : i32
    %2 = arith.cmpi ne, %1, %c0_i32_0 : i32
    scf.if %2 {
      %cst_19 = arith.constant 0.000000e+00 : f32
      %38 = vector.broadcast %cst_19 : f32 to vector<24x96xf32>
      %c0_20 = arith.constant 0 : index
      %c0_21 = arith.constant 0 : index
      %39 = vector.load %arg9[%c0_20, %c0_21] : memref<24x96xf32, #tpu.memory_space<vmem>>, vector<24x96xf32>
      tpu.vector_store %arg9[%c0_20, %c0_21], %38 {strides = array<i32>} : memref<24x96xf32, #tpu.memory_space<vmem>>, vector<24x96xf32>,
    } else {
    }
    %c0 = arith.constant 0 : index
    %c0_1 = arith.constant 0 : index
    %3 = vector.load %arg3[%c0, %c0_1] : memref<24x48xbf16, #tpu.memory_space<vmem>>, vector<24x48xbf16>
    %4 = arith.extf %3 : vector<24x48xbf16> to vector<24x48xf32>
    %cst = arith.constant dense<0.000000e+00> : vector<24xf32>
    %5 = vector.multi_reduction <add>, %4, %cst [1] : vector<24x48xf32> to vector<24xf32>
    %6 = vector.shape_cast %5 : vector<24xf32> to vector<24x1xf32>
    %cst_2 = arith.constant 4.800000e+01 : f32
    %7 = vector.broadcast %cst_2 : f32 to vector<24x1xf32>
    %8 = arith.divf %6, %7 : vector<24x1xf32>
    %9 = vector.broadcast %8 : vector<24x1xf32> to vector<24x48xf32>
    %10 = arith.subf %4, %9 : vector<24x48xf32>
    %11 = arith.mulf %10, %10 : vector<24x48xf32>
    %cst_3 = arith.constant dense<0.000000e+00> : vector<24xf32>
    %12 = vector.multi_reduction <add>, %11, %cst_3 [1] : vector<24x48xf32> to vector<24xf32>
    %13 = vector.shape_cast %12 : vector<24xf32> to vector<24x1xf32>
    %cst_4 = arith.constant 4.800000e+01 : f32
    %14 = vector.broadcast %cst_4 : f32 to vector<24x1xf32>
    %15 = arith.divf %13, %14 : vector<24x1xf32>
    %16 = vector.broadcast %8 : vector<24x1xf32> to vector<24x48xf32>
    %17 = arith.subf %4, %16 : vector<24x48xf32>
    %cst_5 = arith.constant 9.99999997E-7 : f32
    %18 = vector.broadcast %cst_5 : f32 to vector<24x1xf32>
    %19 = arith.addf %15, %18 : vector<24x1xf32>
    %20 = math.rsqrt %19 : vector<24x1xf32>
    %21 = vector.broadcast %20 : vector<24x1xf32> to vector<24x48xf32>
    %22 = arith.mulf %17, %21 : vector<24x48xf32>
    %c0_6 = arith.constant 0 : index
    %c0_7 = arith.constant 0 : index
    %23 = vector.load %arg6[%c0_6, %c0_7] : memref<1x48xf32, #tpu.memory_space<vmem>>, vector<1x48xf32>
    %24 = vector.broadcast %23 : vector<1x48xf32> to vector<24x48xf32>
    %25 = arith.mulf %22, %24 : vector<24x48xf32>
    %c0_8 = arith.constant 0 : index
    %c0_9 = arith.constant 0 : index
    %26 = vector.load %arg7[%c0_8, %c0_9] : memref<1x48xf32, #tpu.memory_space<vmem>>, vector<1x48xf32>
    %27 = vector.broadcast %26 : vector<1x48xf32> to vector<24x48xf32>
    %28 = arith.addf %25, %27 : vector<24x48xf32>
    %29 = arith.truncf %28 : vector<24x48xf32> to vector<24x48xbf16>
    %c0_10 = arith.constant 0 : index
    %c0_11 = arith.constant 0 : index
    %30 = vector.load %arg9[%c0_10, %c0_11] : memref<24x96xf32, #tpu.memory_space<vmem>>, vector<24x96xf32>
    %c0_12 = arith.constant 0 : index
    %c0_13 = arith.constant 0 : index
    %31 = vector.load %arg4[%c0_12, %c0_13] : memref<48x96xbf16, #tpu.memory_space<vmem>>, vector<48x96xbf16>
    %cst_14 = arith.constant dense<0.000000e+00> : vector<24x96xf32>
    %32 = tpu.matmul %29, %31, %cst_14 {dimension_numbers = #tpu.dot_dimension_numbers<[1], [0], [0], [1], [0, 0, 1, 1], [], []>} : vector<24x48xbf16>, vector<48x96xbf16>, vector<24x96xf32> -> vector<24x96xf32>
    %33 = arith.addf %30, %32 : vector<24x96xf32>
    %c0_15 = arith.constant 0 : index
    %c0_16 = arith.constant 0 : index
    %34 = vector.load %arg9[%c0_15, %c0_16] : memref<24x96xf32, #tpu.memory_space<vmem>>, vector<24x96xf32>
    tpu.vector_store %arg9[%c0_15, %c0_16], %33 {strides = array<i32>} : memref<24x96xf32, #tpu.memory_space<vmem>>, vector<24x96xf32>,
    %c0_i32_17 = arith.constant 0 : i32
    %35 = arith.cmpi eq, %arg2, %c0_i32_17 : i32
    %36 = arith.extui %35 : i1 to i32
    %c0_i32_18 = arith.constant 0 : i32
    %37 = arith.cmpi ne, %36, %c0_i32_18 : i32
    scf.if %37 {
      %c0_19 = arith.constant 0 : index
      %c0_20 = arith.constant 0 : index
      %38 = vector.load %arg9[%c0_19, %c0_20] : memref<24x96xf32, #tpu.memory_space<vmem>>, vector<24x96xf32>
      %c0_21 = arith.constant 0 : index
      %c0_22 = arith.constant 0 : index
      %39 = vector.load %arg5[%c0_21, %c0_22] : memref<1x96xf32, #tpu.memory_space<vmem>>, vector<1x96xf32>
      %40 = vector.broadcast %39 : vector<1x96xf32> to vector<24x96xf32>
      %41 = arith.addf %38, %40 : vector<24x96xf32>
      %cst_23 = arith.constant 5.000000e-01 : f32
      %42 = vector.broadcast %cst_23 : f32 to vector<24x96xf32>
      %43 = arith.mulf %42, %41 : vector<24x96xf32>
      %cst_24 = arith.constant 4.471500e-02 : f32
      %44 = vector.broadcast %cst_24 : f32 to vector<24x96xf32>
      %45 = arith.mulf %44, %41 : vector<24x96xf32>
      %46 = arith.mulf %45, %41 : vector<24x96xf32>
      %47 = arith.mulf %46, %41 : vector<24x96xf32>
      %48 = arith.addf %41, %47 : vector<24x96xf32>
      %cst_25 = arith.constant 0.797884583 : f32
      %49 = vector.broadcast %cst_25 : f32 to vector<24x96xf32>
      %50 = arith.mulf %49, %48 : vector<24x96xf32>
      %51 = math.tanh %50 : vector<24x96xf32>
      %cst_26 = arith.constant 1.000000e+00 : f32
      %52 = vector.broadcast %cst_26 : f32 to vector<24x96xf32>
      %53 = arith.addf %52, %51 : vector<24x96xf32>
      %54 = arith.mulf %43, %53 : vector<24x96xf32>
      %55 = arith.truncf %54 : vector<24x96xf32> to vector<24x96xbf16>
      %c0_27 = arith.constant 0 : index
      %c0_28 = arith.constant 0 : index
      %56 = vector.load %arg8[%c0_27, %c0_28] : memref<24x96xbf16, #tpu.memory_space<vmem>>, vector<24x96xbf16>
      tpu.vector_store %arg8[%c0_27, %c0_28], %55 {strides = array<i32>} : memref<24x96xbf16, #tpu.memory_space<vmem>>, vector<24x96xbf16>,
    } else {
    }
    return
  }
  func.func @transform_0(%arg0: i32, %arg1: i32, %arg2: i32) -> (i32, i32) {
    %c0_i32 = arith.constant 0 : i32
    return %arg0, %arg2 : i32, i32
  }
  func.func @transform_1(%arg0: i32, %arg1: i32, %arg2: i32) -> (i32, i32) {
    %c0_i32 = arith.constant 0 : i32
    return %arg2, %arg1 : i32, i32
  }
  func.func @transform_2(%arg0: i32, %arg1: i32, %arg2: i32) -> (i32, i32) {
    %c0_i32 = arith.constant 0 : i32
    %c0_i32_0 = arith.constant 0 : i32
    return %c0_i32, %arg1 : i32, i32
  }
  func.func @transform_3(%arg0: i32, %arg1: i32, %arg2: i32) -> (i32, i32) {
    %c0_i32 = arith.constant 0 : i32
    %c0_i32_0 = arith.constant 0 : i32
    return %c0_i32, %arg2 : i32, i32
  }
  func.func @transform_4(%arg0: i32, %arg1: i32, %arg2: i32) -> (i32, i32) {
    %c0_i32 = arith.constant 0 : i32
    %c0_i32_0 = arith.constant 0 : i32
    return %c0_i32, %arg2 : i32, i32
  }
  func.func @transform_5(%arg0: i32, %arg1: i32, %arg2: i32) -> (i32, i32) {
    %c0_i32 = arith.constant 0 : i32
    return %arg0, %arg1 : i32, i32
  }
}

module attributes {stable_mosaic.version = 11 : i64} {
  func.func @_linear_kernel(%arg0: i32, %arg1: i32, %arg2: i32, %arg3: memref<24x96xbf16, #tpu.memory_space<vmem>>, %arg4: memref<96x48xbf16, #tpu.memory_space<vmem>>, %arg5: memref<1x48xf32, #tpu.memory_space<vmem>>, %arg6: memref<24x48xbf16, #tpu.memory_space<vmem>>, %arg7: memref<24x48xbf16, #tpu.memory_space<vmem>>, %arg8: memref<24x48xf32, #tpu.memory_space<vmem>>) attributes {dimension_semantics = [#tpu.dimension_semantics<parallel>, #tpu.dimension_semantics<parallel>, #tpu.dimension_semantics<arbitrary>], iteration_bounds = array<i64: 1, 1, 1>, scalar_prefetch = 0 : i64, scratch_operands = 1 : i64, tpu.core_type = #tpu.core_type<tc>, window_params = [{transform_indices = @transform_0, window_bounds = array<i64: 24, 96>}, {transform_indices = @transform_1, window_bounds = array<i64: 96, 48>}, {transform_indices = @transform_2, window_bounds = array<i64: 1, 48>}, {transform_indices = @transform_3, window_bounds = array<i64: 24, 48>}, {transform_indices = @transform_4, window_bounds = array<i64: 24, 48>}]} {
    %c0_i32 = arith.constant 0 : i32
    %0 = arith.cmpi eq, %arg2, %c0_i32 : i32
    %1 = arith.extui %0 : i1 to i32
    %c0_i32_0 = arith.constant 0 : i32
    %2 = arith.cmpi ne, %1, %c0_i32_0 : i32
    scf.if %2 {
      %cst_10 = arith.constant 0.000000e+00 : f32
      %12 = vector.broadcast %cst_10 : f32 to vector<24x48xf32>
      %c0_11 = arith.constant 0 : index
      %c0_12 = arith.constant 0 : index
      %13 = vector.load %arg8[%c0_11, %c0_12] : memref<24x48xf32, #tpu.memory_space<vmem>>, vector<24x48xf32>
      tpu.vector_store %arg8[%c0_11, %c0_12], %12 {strides = array<i32>} : memref<24x48xf32, #tpu.memory_space<vmem>>, vector<24x48xf32>,
    } else {
    }
    %c0 = arith.constant 0 : index
    %c0_1 = arith.constant 0 : index
    %3 = vector.load %arg3[%c0, %c0_1] : memref<24x96xbf16, #tpu.memory_space<vmem>>, vector<24x96xbf16>
    %c0_2 = arith.constant 0 : index
    %c0_3 = arith.constant 0 : index
    %4 = vector.load %arg8[%c0_2, %c0_3] : memref<24x48xf32, #tpu.memory_space<vmem>>, vector<24x48xf32>
    %c0_4 = arith.constant 0 : index
    %c0_5 = arith.constant 0 : index
    %5 = vector.load %arg4[%c0_4, %c0_5] : memref<96x48xbf16, #tpu.memory_space<vmem>>, vector<96x48xbf16>
    %cst = arith.constant dense<0.000000e+00> : vector<24x48xf32>
    %6 = tpu.matmul %3, %5, %cst {dimension_numbers = #tpu.dot_dimension_numbers<[1], [0], [0], [1], [0, 0, 1, 1], [], []>} : vector<24x96xbf16>, vector<96x48xbf16>, vector<24x48xf32> -> vector<24x48xf32>
    %7 = arith.addf %4, %6 : vector<24x48xf32>
    %c0_6 = arith.constant 0 : index
    %c0_7 = arith.constant 0 : index
    %8 = vector.load %arg8[%c0_6, %c0_7] : memref<24x48xf32, #tpu.memory_space<vmem>>, vector<24x48xf32>
    tpu.vector_store %arg8[%c0_6, %c0_7], %7 {strides = array<i32>} : memref<24x48xf32, #tpu.memory_space<vmem>>, vector<24x48xf32>,
    %c0_i32_8 = arith.constant 0 : i32
    %9 = arith.cmpi eq, %arg2, %c0_i32_8 : i32
    %10 = arith.extui %9 : i1 to i32
    %c0_i32_9 = arith.constant 0 : i32
    %11 = arith.cmpi ne, %10, %c0_i32_9 : i32
    scf.if %11 {
      %c0_10 = arith.constant 0 : index
      %c0_11 = arith.constant 0 : index
      %12 = vector.load %arg8[%c0_10, %c0_11] : memref<24x48xf32, #tpu.memory_space<vmem>>, vector<24x48xf32>
      %c0_12 = arith.constant 0 : index
      %c0_13 = arith.constant 0 : index
      %13 = vector.load %arg5[%c0_12, %c0_13] : memref<1x48xf32, #tpu.memory_space<vmem>>, vector<1x48xf32>
      %14 = vector.broadcast %13 : vector<1x48xf32> to vector<24x48xf32>
      %15 = arith.addf %12, %14 : vector<24x48xf32>
      %c0_14 = arith.constant 0 : index
      %c0_15 = arith.constant 0 : index
      %16 = vector.load %arg6[%c0_14, %c0_15] : memref<24x48xbf16, #tpu.memory_space<vmem>>, vector<24x48xbf16>
      %17 = arith.extf %16 : vector<24x48xbf16> to vector<24x48xf32>
      %18 = arith.addf %15, %17 : vector<24x48xf32>
      %19 = arith.truncf %18 : vector<24x48xf32> to vector<24x48xbf16>
      %c0_16 = arith.constant 0 : index
      %c0_17 = arith.constant 0 : index
      %20 = vector.load %arg7[%c0_16, %c0_17] : memref<24x48xbf16, #tpu.memory_space<vmem>>, vector<24x48xbf16>
      tpu.vector_store %arg7[%c0_16, %c0_17], %19 {strides = array<i32>} : memref<24x48xbf16, #tpu.memory_space<vmem>>, vector<24x48xbf16>,
    } else {
    }
    return
  }
  func.func @transform_0(%arg0: i32, %arg1: i32, %arg2: i32) -> (i32, i32) {
    %c0_i32 = arith.constant 0 : i32
    return %arg0, %arg2 : i32, i32
  }
  func.func @transform_1(%arg0: i32, %arg1: i32, %arg2: i32) -> (i32, i32) {
    %c0_i32 = arith.constant 0 : i32
    return %arg2, %arg1 : i32, i32
  }
  func.func @transform_2(%arg0: i32, %arg1: i32, %arg2: i32) -> (i32, i32) {
    %c0_i32 = arith.constant 0 : i32
    %c0_i32_0 = arith.constant 0 : i32
    return %c0_i32, %arg1 : i32, i32
  }
  func.func @transform_3(%arg0: i32, %arg1: i32, %arg2: i32) -> (i32, i32) {
    %c0_i32 = arith.constant 0 : i32
    return %arg0, %arg1 : i32, i32
  }
  func.func @transform_4(%arg0: i32, %arg1: i32, %arg2: i32) -> (i32, i32) {
    %c0_i32 = arith.constant 0 : i32
    return %arg0, %arg1 : i32, i32
  }
}

module attributes {stable_mosaic.version = 11 : i64} {
  func.func @_linear_kernel(%arg0: i32, %arg1: i32, %arg2: i32, %arg3: memref<2x48xbf16, #tpu.memory_space<vmem>>, %arg4: memref<48x10xbf16, #tpu.memory_space<vmem>>, %arg5: memref<1x10xf32, #tpu.memory_space<vmem>>, %arg6: memref<1x48xf32, #tpu.memory_space<vmem>>, %arg7: memref<1x48xf32, #tpu.memory_space<vmem>>, %arg8: memref<2x10xf32, #tpu.memory_space<vmem>>, %arg9: memref<2x10xf32, #tpu.memory_space<vmem>>) attributes {dimension_semantics = [#tpu.dimension_semantics<parallel>, #tpu.dimension_semantics<parallel>, #tpu.dimension_semantics<arbitrary>], iteration_bounds = array<i64: 1, 1, 1>, scalar_prefetch = 0 : i64, scratch_operands = 1 : i64, tpu.core_type = #tpu.core_type<tc>, window_params = [{transform_indices = @transform_0, window_bounds = array<i64: 2, 48>}, {transform_indices = @transform_1, window_bounds = array<i64: 48, 10>}, {transform_indices = @transform_2, window_bounds = array<i64: 1, 10>}, {transform_indices = @transform_3, window_bounds = array<i64: 1, 48>}, {transform_indices = @transform_4, window_bounds = array<i64: 1, 48>}, {transform_indices = @transform_5, window_bounds = array<i64: 2, 10>}]} {
    %c0_i32 = arith.constant 0 : i32
    %0 = arith.cmpi eq, %arg2, %c0_i32 : i32
    %1 = arith.extui %0 : i1 to i32
    %c0_i32_0 = arith.constant 0 : i32
    %2 = arith.cmpi ne, %1, %c0_i32_0 : i32
    scf.if %2 {
      %cst_19 = arith.constant 0.000000e+00 : f32
      %38 = vector.broadcast %cst_19 : f32 to vector<2x10xf32>
      %c0_20 = arith.constant 0 : index
      %c0_21 = arith.constant 0 : index
      %39 = vector.load %arg9[%c0_20, %c0_21] : memref<2x10xf32, #tpu.memory_space<vmem>>, vector<2x10xf32>
      tpu.vector_store %arg9[%c0_20, %c0_21], %38 {strides = array<i32>} : memref<2x10xf32, #tpu.memory_space<vmem>>, vector<2x10xf32>,
    } else {
    }
    %c0 = arith.constant 0 : index
    %c0_1 = arith.constant 0 : index
    %3 = vector.load %arg3[%c0, %c0_1] : memref<2x48xbf16, #tpu.memory_space<vmem>>, vector<2x48xbf16>
    %4 = arith.extf %3 : vector<2x48xbf16> to vector<2x48xf32>
    %cst = arith.constant dense<0.000000e+00> : vector<2xf32>
    %5 = vector.multi_reduction <add>, %4, %cst [1] : vector<2x48xf32> to vector<2xf32>
    %6 = vector.shape_cast %5 : vector<2xf32> to vector<2x1xf32>
    %cst_2 = arith.constant 4.800000e+01 : f32
    %7 = vector.broadcast %cst_2 : f32 to vector<2x1xf32>
    %8 = arith.divf %6, %7 : vector<2x1xf32>
    %9 = vector.broadcast %8 : vector<2x1xf32> to vector<2x48xf32>
    %10 = arith.subf %4, %9 : vector<2x48xf32>
    %11 = arith.mulf %10, %10 : vector<2x48xf32>
    %cst_3 = arith.constant dense<0.000000e+00> : vector<2xf32>
    %12 = vector.multi_reduction <add>, %11, %cst_3 [1] : vector<2x48xf32> to vector<2xf32>
    %13 = vector.shape_cast %12 : vector<2xf32> to vector<2x1xf32>
    %cst_4 = arith.constant 4.800000e+01 : f32
    %14 = vector.broadcast %cst_4 : f32 to vector<2x1xf32>
    %15 = arith.divf %13, %14 : vector<2x1xf32>
    %16 = vector.broadcast %8 : vector<2x1xf32> to vector<2x48xf32>
    %17 = arith.subf %4, %16 : vector<2x48xf32>
    %cst_5 = arith.constant 9.99999997E-7 : f32
    %18 = vector.broadcast %cst_5 : f32 to vector<2x1xf32>
    %19 = arith.addf %15, %18 : vector<2x1xf32>
    %20 = math.rsqrt %19 : vector<2x1xf32>
    %21 = vector.broadcast %20 : vector<2x1xf32> to vector<2x48xf32>
    %22 = arith.mulf %17, %21 : vector<2x48xf32>
    %c0_6 = arith.constant 0 : index
    %c0_7 = arith.constant 0 : index
    %23 = vector.load %arg6[%c0_6, %c0_7] : memref<1x48xf32, #tpu.memory_space<vmem>>, vector<1x48xf32>
    %24 = vector.broadcast %23 : vector<1x48xf32> to vector<2x48xf32>
    %25 = arith.mulf %22, %24 : vector<2x48xf32>
    %c0_8 = arith.constant 0 : index
    %c0_9 = arith.constant 0 : index
    %26 = vector.load %arg7[%c0_8, %c0_9] : memref<1x48xf32, #tpu.memory_space<vmem>>, vector<1x48xf32>
    %27 = vector.broadcast %26 : vector<1x48xf32> to vector<2x48xf32>
    %28 = arith.addf %25, %27 : vector<2x48xf32>
    %29 = arith.truncf %28 : vector<2x48xf32> to vector<2x48xbf16>
    %c0_10 = arith.constant 0 : index
    %c0_11 = arith.constant 0 : index
    %30 = vector.load %arg9[%c0_10, %c0_11] : memref<2x10xf32, #tpu.memory_space<vmem>>, vector<2x10xf32>
    %c0_12 = arith.constant 0 : index
    %c0_13 = arith.constant 0 : index
    %31 = vector.load %arg4[%c0_12, %c0_13] : memref<48x10xbf16, #tpu.memory_space<vmem>>, vector<48x10xbf16>
    %cst_14 = arith.constant dense<0.000000e+00> : vector<2x10xf32>
    %32 = tpu.matmul %29, %31, %cst_14 {dimension_numbers = #tpu.dot_dimension_numbers<[1], [0], [0], [1], [0, 0, 1, 1], [], []>} : vector<2x48xbf16>, vector<48x10xbf16>, vector<2x10xf32> -> vector<2x10xf32>
    %33 = arith.addf %30, %32 : vector<2x10xf32>
    %c0_15 = arith.constant 0 : index
    %c0_16 = arith.constant 0 : index
    %34 = vector.load %arg9[%c0_15, %c0_16] : memref<2x10xf32, #tpu.memory_space<vmem>>, vector<2x10xf32>
    tpu.vector_store %arg9[%c0_15, %c0_16], %33 {strides = array<i32>} : memref<2x10xf32, #tpu.memory_space<vmem>>, vector<2x10xf32>,
    %c0_i32_17 = arith.constant 0 : i32
    %35 = arith.cmpi eq, %arg2, %c0_i32_17 : i32
    %36 = arith.extui %35 : i1 to i32
    %c0_i32_18 = arith.constant 0 : i32
    %37 = arith.cmpi ne, %36, %c0_i32_18 : i32
    scf.if %37 {
      %c0_19 = arith.constant 0 : index
      %c0_20 = arith.constant 0 : index
      %38 = vector.load %arg9[%c0_19, %c0_20] : memref<2x10xf32, #tpu.memory_space<vmem>>, vector<2x10xf32>
      %c0_21 = arith.constant 0 : index
      %c0_22 = arith.constant 0 : index
      %39 = vector.load %arg5[%c0_21, %c0_22] : memref<1x10xf32, #tpu.memory_space<vmem>>, vector<1x10xf32>
      %40 = vector.broadcast %39 : vector<1x10xf32> to vector<2x10xf32>
      %41 = arith.addf %38, %40 : vector<2x10xf32>
      %cst_23 = arith.constant dense<0xFF800000> : vector<2xf32>
      %42 = vector.multi_reduction <maximumf>, %41, %cst_23 [1] : vector<2x10xf32> to vector<2xf32>
      %43 = vector.shape_cast %42 : vector<2xf32> to vector<2x1xf32>
      %44 = vector.broadcast %43 : vector<2x1xf32> to vector<2x10xf32>
      %45 = arith.subf %41, %44 : vector<2x10xf32>
      %46 = math.exp %45 : vector<2x10xf32>
      %cst_24 = arith.constant dense<0.000000e+00> : vector<2xf32>
      %47 = vector.multi_reduction <add>, %46, %cst_24 [1] : vector<2x10xf32> to vector<2xf32>
      %48 = vector.shape_cast %47 : vector<2xf32> to vector<2x1xf32>
      %49 = vector.broadcast %48 : vector<2x1xf32> to vector<2x10xf32>
      %50 = arith.divf %46, %49 : vector<2x10xf32>
      %c0_25 = arith.constant 0 : index
      %c0_26 = arith.constant 0 : index
      %51 = vector.load %arg8[%c0_25, %c0_26] : memref<2x10xf32, #tpu.memory_space<vmem>>, vector<2x10xf32>
      tpu.vector_store %arg8[%c0_25, %c0_26], %50 {strides = array<i32>} : memref<2x10xf32, #tpu.memory_space<vmem>>, vector<2x10xf32>,
    } else {
    }
    return
  }
  func.func @transform_0(%arg0: i32, %arg1: i32, %arg2: i32) -> (i32, i32) {
    %c0_i32 = arith.constant 0 : i32
    return %arg0, %arg2 : i32, i32
  }
  func.func @transform_1(%arg0: i32, %arg1: i32, %arg2: i32) -> (i32, i32) {
    %c0_i32 = arith.constant 0 : i32
    return %arg2, %arg1 : i32, i32
  }
  func.func @transform_2(%arg0: i32, %arg1: i32, %arg2: i32) -> (i32, i32) {
    %c0_i32 = arith.constant 0 : i32
    %c0_i32_0 = arith.constant 0 : i32
    return %c0_i32, %arg1 : i32, i32
  }
  func.func @transform_3(%arg0: i32, %arg1: i32, %arg2: i32) -> (i32, i32) {
    %c0_i32 = arith.constant 0 : i32
    %c0_i32_0 = arith.constant 0 : i32
    return %c0_i32, %arg2 : i32, i32
  }
  func.func @transform_4(%arg0: i32, %arg1: i32, %arg2: i32) -> (i32, i32) {
    %c0_i32 = arith.constant 0 : i32
    %c0_i32_0 = arith.constant 0 : i32
    return %c0_i32, %arg2 : i32, i32
  }
  func.func @transform_5(%arg0: i32, %arg1: i32, %arg2: i32) -> (i32, i32) {
    %c0_i32 = arith.constant 0 : i32
    return %arg0, %arg1 : i32, i32
  }
}

</mosaic_0001>

<llo_original>
// kernel: _lambda_.14
$region0: #{_lambda_.14}
  #allocation0 [shape = 'u32[]', space=smem, size = 0x4, offset = 0x4, fixed_abs, tag = 'smem constant byte address 0x4 - core index']
  #allocation1 [shape = 'u32[72,128]{1,0:T(1,128)}', space=vmem, size = 0x9000, scoped, tag = 'internal scratch']
  #allocation2 [shape = 'f32[8,48]{1,0:T(8,128)}', space=vmem, size = 0x1000, scoped, tag = 'scratch operand']
  %s0 = inlined_call_operand.vmem [shape: bf16[8,768], index: 0, kind: input, shape index: {}]
  %s1 = inlined_call_operand.vmem [shape: bf16[768,48], index: 1, kind: input, shape index: {}]
  %s2 = inlined_call_operand.vmem [shape: f32[1,48], index: 2, kind: input, shape index: {}]
  %s3 = inlined_call_operand.vmem [shape: bf16[8,48], index: 3, kind: output, shape index: {}]
  %s4 = sld [smem:[#allocation0]]
  $region30: #{_lambda_.14} parent=0
    _
  %s6 = ssub.s32 1, %s4
  %s7 = scalar_select 0, %s6, %s4
  // Predicated region
  $region2: #{_lambda_.14} parent=0 // pred_check
    _
  $region3: #{_lambda_.14} parent=0 // pred_check_branch
    %9 = sbr.rel (0) target = $region5
  $region4: #{_lambda_.14} parent=0 // pred_region
    _
  $region5: #{_lambda_.14} parent=0 // pred_fallthru
    _
  // Predicated region
  $region6: #{_lambda_.14} parent=0 // pred_check
    _
  $region7: #{_lambda_.14} parent=0 // pred_check_branch
    %11 = sbr.rel (0) target = $region9
  $region8: #{_lambda_.14} parent=0 // pred_region
    _
  $region9: #{_lambda_.14} parent=0 // pred_fallthru
    _
  // Predicated region
  $region10: #{_lambda_.14} parent=0 // pred_check
    _
  $region11: #{_lambda_.14} parent=0 // pred_check_branch
    %13 = sbr.rel (0) target = $region13
  $region12: #{_lambda_.14} parent=0 // pred_region
    _
  $region13: #{_lambda_.14} parent=0 // pred_fallthru
    _
  %p14 = scmp.eq.s32.totalorder 0, 0
  // Predicated region
  $region14: #{_lambda_.14} parent=0 // pred_check
    %p15 = pneg %p14
  $region15: #{_lambda_.14} parent=0 // pred_check_branch
    %17 = sbr.rel (%p15) target = $region17
  $region16: #{_lambda_.14} parent=0 // pred_region
    %vm18 = vcmask 392192
    %19 = vst.msk [vmem:[#allocation2] sm:$0xff] %vm18, 0.0
  $region17: #{_lambda_.14} parent=0 // pred_fallthru
    _
  %v20 = vld [vmem:[%s0] sm:$0xff]
  %v21 = vld [vmem:[%s0 + $0x8] sm:$0xff]
  %v22 = vld [vmem:[%s0 + $0x10] sm:$0xff]
  %v23 = vld [vmem:[#allocation2] sm:$0xff]
  %v24 = vld [vmem:[%s1] sm:$0xf]
  %v25 = vld [vmem:[%s1 + $0x4] sm:$0xf]
  %v26 = vld [vmem:[%s1 + $0x8] sm:$0xf]
  %v27 = vld [vmem:[%s1 + $0xc] sm:$0xf]
  %v28 = vld [vmem:[%s1 + $0x10] sm:$0xf]
  %v29 = vld [vmem:[%s1 + $0x14] sm:$0xf]
  %v30 = vld [vmem:[%s1 + $0x18] sm:$0xf]
  %v31 = vld [vmem:[%s1 + $0x1c] sm:$0xf]
  %v32 = vld [vmem:[%s1 + $0x20] sm:$0xf]
  %v33 = vld [vmem:[%s1 + $0x24] sm:$0xf]
  %v34 = vld [vmem:[%s1 + $0x28] sm:$0xf]
  %v35 = vld [vmem:[%s1 + $0x2c] sm:$0xf]
  %v36 = vld [vmem:[%s1 + $0x30] sm:$0xf]
  %v37 = vld [vmem:[%s1 + $0x34] sm:$0xf]
  %v38 = vld [vmem:[%s1 + $0x38] sm:$0xf]
  %v39 = vld [vmem:[%s1 + $0x3c] sm:$0xf]
  %v40 = vld [vmem:[%s1 + $0x40] sm:$0xf]
  %v41 = vld [vmem:[%s1 + $0x44] sm:$0xf]
  %v42 = vld [vmem:[%s1 + $0x48] sm:$0xf]
  %v43 = vld [vmem:[%s1 + $0x4c] sm:$0xf]
  %v44 = vld [vmem:[%s1 + $0x50] sm:$0xf]
  %v45 = vld [vmem:[%s1 + $0x54] sm:$0xf]
  %v46 = vld [vmem:[%s1 + $0x58] sm:$0xf]
  %v47 = vld [vmem:[%s1 + $0x5c] sm:$0xf]
  %v48 = vld [vmem:[%s1 + $0x60] sm:$0xf]
  %v49 = vld [vmem:[%s1 + $0x64] sm:$0xf]
  %v50 = vld [vmem:[%s1 + $0x68] sm:$0xf]
  %v51 = vld [vmem:[%s1 + $0x6c] sm:$0xf]
  %v52 = vld [vmem:[%s1 + $0x70] sm:$0xf]
  %v53 = vld [vmem:[%s1 + $0x74] sm:$0xf]
  %v54 = vld [vmem:[%s1 + $0x78] sm:$0xf]
  %v55 = vld [vmem:[%s1 + $0x7c] sm:$0xf]
  %v56 = vld [vmem:[%s1 + $0x80] sm:$0xf]
  %v57 = vld [vmem:[%s1 + $0x84] sm:$0xf]
  %v58 = vld [vmem:[%s1 + $0x88] sm:$0xf]
  %v59 = vld [vmem:[%s1 + $0x8c] sm:$0xf]
  %v60 = vld [vmem:[%s1 + $0x90] sm:$0xf]
  %v61 = vld [vmem:[%s1 + $0x94] sm:$0xf]
  %v62 = vld [vmem:[%s1 + $0x98] sm:$0xf]
  %v63 = vld [vmem:[%s1 + $0x9c] sm:$0xf]
  %v64 = vld [vmem:[%s1 + $0xa0] sm:$0xf]
  %v65 = vld [vmem:[%s1 + $0xa4] sm:$0xf]
  %v66 = vld [vmem:[%s1 + $0xa8] sm:$0xf]
  %v67 = vld [vmem:[%s1 + $0xac] sm:$0xf]
  %v68 = vld [vmem:[%s1 + $0xb0] sm:$0xf]
  %v69 = vld [vmem:[%s1 + $0xb4] sm:$0xf]
  %v70 = vld [vmem:[%s1 + $0xb8] sm:$0xf]
  %v71 = vld [vmem:[%s1 + $0xbc] sm:$0xf]
  %v72 = vld [vmem:[%s1 + $0xc0] sm:$0xf]
  %v73 = vld [vmem:[%s1 + $0xc4] sm:$0xf]
  %v74 = vld [vmem:[%s1 + $0xc8] sm:$0xf]
  %v75 = vld [vmem:[%s1 + $0xcc] sm:$0xf]
  %v76 = vld [vmem:[%s1 + $0xd0] sm:$0xf]
  %v77 = vld [vmem:[%s1 + $0xd4] sm:$0xf]
  %v78 = vld [vmem:[%s1 + $0xd8] sm:$0xf]
  %v79 = vld [vmem:[%s1 + $0xdc] sm:$0xf]
  %v80 = vld [vmem:[%s1 + $0xe0] sm:$0xf]
  %v81 = vld [vmem:[%s1 + $0xe4] sm:$0xf]
  %v82 = vld [vmem:[%s1 + $0xe8] sm:$0xf]
  %v83 = vld [vmem:[%s1 + $0xec] sm:$0xf]
  %v84 = vld [vmem:[%s1 + $0xf0] sm:$0xf]
  %v85 = vld [vmem:[%s1 + $0xf4] sm:$0xf]
  %v86 = vld [vmem:[%s1 + $0xf8] sm:$0xf]
  %v87 = vld [vmem:[%s1 + $0xfc] sm:$0xf]
  %v88 = vld [vmem:[%s1 + $0x100] sm:$0xf]
  %v89 = vld [vmem:[%s1 + $0x104] sm:$0xf]
  %v90 = vld [vmem:[%s1 + $0x108] sm:$0xf]
  %v91 = vld [vmem:[%s1 + $0x10c] sm:$0xf]
  %v92 = vld [vmem:[%s1 + $0x110] sm:$0xf]
  %v93 = vld [vmem:[%s1 + $0x114] sm:$0xf]
  %v94 = vld [vmem:[%s1 + $0x118] sm:$0xf]
  %v95 = vld [vmem:[%s1 + $0x11c] sm:$0xf]
  %v96 = vld [vmem:[%s1 + $0x120] sm:$0xf]
  %v97 = vld [vmem:[%s1 + $0x124] sm:$0xf]
  %v98 = vld [vmem:[%s1 + $0x128] sm:$0xf]
  %v99 = vld [vmem:[%s1 + $0x12c] sm:$0xf]
  %v100 = vld [vmem:[%s1 + $0x130] sm:$0xf]
  %v101 = vld [vmem:[%s1 + $0x134] sm:$0xf]
  %v102 = vld [vmem:[%s1 + $0x138] sm:$0xf]
  %v103 = vld [vmem:[%s1 + $0x13c] sm:$0xf]
  %v104 = vld [vmem:[%s1 + $0x140] sm:$0xf]
  %v105 = vld [vmem:[%s1 + $0x144] sm:$0xf]
  %v106 = vld [vmem:[%s1 + $0x148] sm:$0xf]
  %v107 = vld [vmem:[%s1 + $0x14c] sm:$0xf]
  %v108 = vld [vmem:[%s1 + $0x150] sm:$0xf]
  %v109 = vld [vmem:[%s1 + $0x154] sm:$0xf]
  %v110 = vld [vmem:[%s1 + $0x158] sm:$0xf]
  %v111 = vld [vmem:[%s1 + $0x15c] sm:$0xf]
  %v112 = vld [vmem:[%s1 + $0x160] sm:$0xf]
  %v113 = vld [vmem:[%s1 + $0x164] sm:$0xf]
  %v114 = vld [vmem:[%s1 + $0x168] sm:$0xf]
  %v115 = vld [vmem:[%s1 + $0x16c] sm:$0xf]
  %v116 = vld [vmem:[%s1 + $0x170] sm:$0xf]
  %v117 = vld [vmem:[%s1 + $0x174] sm:$0xf]
  %v118 = vld [vmem:[%s1 + $0x178] sm:$0xf]
  %v119 = vld [vmem:[%s1 + $0x17c] sm:$0xf]
  %v123 = vunpack.c.l.b16 %v20
  %v124 = vunpack.c.h.b16 %v20
  %v125 = vunpack.c.l.b16 %v21
  %v126 = vunpack.c.h.b16 %v21
  %v127 = vunpack.c.l.b16 %v22
  %v128 = vunpack.c.h.b16 %v22
  %v129 = vpack.c.b16 %v123, %v123
  %v130 = vpack.c.b16 %v124, %v124
  %v131 = vpack.c.b16 %v125, %v125
  %v132 = vpack.c.b16 %v126, %v126
  %v133 = vpack.c.b16 %v127, %v127
  %v134 = vpack.c.b16 %v128, %v128
  %v237 = vunpack.c.l.b16 %v24
  %v238 = vunpack.c.l.b16 %v25
  %v239 = vunpack.c.l.b16 %v26
  %v240 = vunpack.c.l.b16 %v27
  %v241 = vunpack.c.l.b16 %v28
  %v242 = vunpack.c.l.b16 %v29
  %v243 = vunpack.c.l.b16 %v30
  %v244 = vunpack.c.l.b16 %v31
  %v245 = vunpack.c.l.b16 %v32
  %v246 = vunpack.c.l.b16 %v33
  %v247 = vunpack.c.l.b16 %v34
  %v248 = vunpack.c.l.b16 %v35
  %v249 = vunpack.c.l.b16 %v36
  %v250 = vunpack.c.l.b16 %v37
  %v251 = vunpack.c.l.b16 %v38
  %v252 = vunpack.c.l.b16 %v39
  %v253 = vunpack.c.l.b16 %v40
  %v254 = vunpack.c.l.b16 %v41
  %v255 = vunpack.c.l.b16 %v42
  %v256 = vunpack.c.l.b16 %v43
  %v257 = vunpack.c.l.b16 %v44
  %v258 = vunpack.c.l.b16 %v45
  %v259 = vunpack.c.l.b16 %v46
  %v260 = vunpack.c.l.b16 %v47
  %v261 = vunpack.c.l.b16 %v48
  %v262 = vunpack.c.l.b16 %v49
  %v263 = vunpack.c.l.b16 %v50
  %v264 = vunpack.c.l.b16 %v51
  %v265 = vunpack.c.l.b16 %v52
  %v266 = vunpack.c.l.b16 %v53
  %v267 = vunpack.c.l.b16 %v54
  %v268 = vunpack.c.l.b16 %v55
  %v269 = vunpack.c.l.b16 %v56
  %v270 = vunpack.c.l.b16 %v57
  %v271 = vunpack.c.l.b16 %v58
  %v272 = vunpack.c.l.b16 %v59
  %v273 = vunpack.c.l.b16 %v60
  %v274 = vunpack.c.l.b16 %v61
  %v275 = vunpack.c.l.b16 %v62
  %v276 = vunpack.c.l.b16 %v63
  %v277 = vunpack.c.l.b16 %v64
  %v278 = vunpack.c.l.b16 %v65
  %v279 = vunpack.c.l.b16 %v66
  %v280 = vunpack.c.l.b16 %v67
  %v281 = vunpack.c.l.b16 %v68
  %v282 = vunpack.c.l.b16 %v69
  %v283 = vunpack.c.l.b16 %v70
  %v284 = vunpack.c.l.b16 %v71
  %v285 = vunpack.c.l.b16 %v72
  %v286 = vunpack.c.l.b16 %v73
  %v287 = vunpack.c.l.b16 %v74
  %v288 = vunpack.c.l.b16 %v75
  %v289 = vunpack.c.l.b16 %v76
  %v290 = vunpack.c.l.b16 %v77
  %v291 = vunpack.c.l.b16 %v78
  %v292 = vunpack.c.l.b16 %v79
  %v293 = vunpack.c.l.b16 %v80
  %v294 = vunpack.c.l.b16 %v81
  %v295 = vunpack.c.l.b16 %v82
  %v296 = vunpack.c.l.b16 %v83
  %v297 = vunpack.c.l.b16 %v84
  %v298 = vunpack.c.l.b16 %v85
  %v299 = vunpack.c.l.b16 %v86
  %v300 = vunpack.c.l.b16 %v87
  %v301 = vunpack.c.l.b16 %v88
  %v302 = vunpack.c.l.b16 %v89
  %v303 = vunpack.c.l.b16 %v90
  %v304 = vunpack.c.l.b16 %v91
  %v305 = vunpack.c.l.b16 %v92
  %v306 = vunpack.c.l.b16 %v93
  %v307 = vunpack.c.l.b16 %v94
  %v308 = vunpack.c.l.b16 %v95
  %v309 = vunpack.c.l.b16 %v96
  %v310 = vunpack.c.l.b16 %v97
  %v311 = vunpack.c.l.b16 %v98
  %v312 = vunpack.c.l.b16 %v99
  %v313 = vunpack.c.l.b16 %v100
  %v314 = vunpack.c.l.b16 %v101
  %v315 = vunpack.c.l.b16 %v102
  %v316 = vunpack.c.l.b16 %v103
  %v317 = vunpack.c.l.b16 %v104
  %v318 = vunpack.c.l.b16 %v105
  %v319 = vunpack.c.l.b16 %v106
  %v320 = vunpack.c.l.b16 %v107
  %v321 = vunpack.c.l.b16 %v108
  %v322 = vunpack.c.l.b16 %v109
  %v323 = vunpack.c.l.b16 %v110
  %v324 = vunpack.c.l.b16 %v111
  %v325 = vunpack.c.l.b16 %v112
  %v326 = vunpack.c.l.b16 %v113
  %v327 = vunpack.c.l.b16 %v114
  %v328 = vunpack.c.l.b16 %v115
  %v329 = vunpack.c.l.b16 %v116
  %v330 = vunpack.c.l.b16 %v117
  %v331 = vunpack.c.l.b16 %v118
  %v332 = vunpack.c.l.b16 %v119
  %v333 = vpack.c.b16 %v238, %v237
  %v334 = vpack.c.b16 %v240, %v239
  %v335 = vpack.c.b16 %v242, %v241
  %v336 = vpack.c.b16 %v244, %v243
  %v337 = vpack.c.b16 %v246, %v245
  %v338 = vpack.c.b16 %v248, %v247
  %v339 = vpack.c.b16 %v250, %v249
  %v340 = vpack.c.b16 %v252, %v251
  %v341 = vpack.c.b16 %v254, %v253
  %v342 = vpack.c.b16 %v256, %v255
  %v343 = vpack.c.b16 %v258, %v257
  %v344 = vpack.c.b16 %v260, %v259
  %v345 = vpack.c.b16 %v262, %v261
  %v346 = vpack.c.b16 %v264, %v263
  %v347 = vpack.c.b16 %v266, %v265
  %v348 = vpack.c.b16 %v268, %v267
  %v349 = vpack.c.b16 %v270, %v269
  %v350 = vpack.c.b16 %v272, %v271
  %v351 = vpack.c.b16 %v274, %v273
  %v352 = vpack.c.b16 %v276, %v275
  %v353 = vpack.c.b16 %v278, %v277
  %v354 = vpack.c.b16 %v280, %v279
  %v355 = vpack.c.b16 %v282, %v281
  %v356 = vpack.c.b16 %v284, %v283
  %v357 = vpack.c.b16 %v286, %v285
  %v358 = vpack.c.b16 %v288, %v287
  %v359 = vpack.c.b16 %v290, %v289
  %v360 = vpack.c.b16 %v292, %v291
  %v361 = vpack.c.b16 %v294, %v293
  %v362 = vpack.c.b16 %v296, %v295
  %v363 = vpack.c.b16 %v298, %v297
  %v364 = vpack.c.b16 %v300, %v299
  %v365 = vpack.c.b16 %v302, %v301
  %v366 = vpack.c.b16 %v304, %v303
  %v367 = vpack.c.b16 %v306, %v305
  %v368 = vpack.c.b16 %v308, %v307
  %v369 = vpack.c.b16 %v310, %v309
  %v370 = vpack.c.b16 %v312, %v311
  %v371 = vpack.c.b16 %v314, %v313
  %v372 = vpack.c.b16 %v316, %v315
  %v373 = vpack.c.b16 %v318, %v317
  %v374 = vpack.c.b16 %v320, %v319
  %v375 = vpack.c.b16 %v322, %v321
  %v376 = vpack.c.b16 %v324, %v323
  %v377 = vpack.c.b16 %v326, %v325
  %v378 = vpack.c.b16 %v328, %v327
  %v379 = vpack.c.b16 %v330, %v329
  %v380 = vpack.c.b16 %v332, %v331
  %429 = vmatpush.bf16.msra.mxu0 %v340
  %430 = vmatpush.bf16.msra.mxu0 %v339
  %431 = vmatpush.bf16.msra.mxu0 %v338
  %432 = vmatpush.bf16.msra.mxu0 %v337
  %433 = vmatpush.bf16.msra.mxu0 %v336
  %434 = vmatpush.bf16.msra.mxu0 %v335
  %435 = vmatpush.bf16.msra.mxu0 %v334
  %436 = vmatpush.bf16.msra.mxu0 %v333
  %437 = vmatmul.bf16.gmra.mxu0 %v129
  %v438 = vpop.f32.mrf.mxu0
  %v439 = vadd.f32 0.0, %v438
  %v440 = vpop.f32.mrf.mxu0
  %441 = vdwg.mxu0
  %442 = vmatpush.bf16.msra.mxu0 %v348
  %443 = vmatpush.bf16.msra.mxu0 %v347
  %444 = vmatpush.bf16.msra.mxu0 %v346
  %445 = vmatpush.bf16.msra.mxu0 %v345
  %446 = vmatpush.bf16.msra.mxu0 %v344
  %447 = vmatpush.bf16.msra.mxu0 %v343
  %448 = vmatpush.bf16.msra.mxu0 %v342
  %449 = vmatpush.bf16.msra.mxu0 %v341
  %450 = vmatmul.bf16.gmra.mxu0 %v130
  %v451 = vpop.f32.mrf.mxu0
  %v452 = vadd.f32 %v439, %v451
  %v453 = vpop.f32.mrf.mxu0
  %454 = vdwg.mxu0
  %455 = vmatpush.bf16.msra.mxu0 %v356
  %456 = vmatpush.bf16.msra.mxu0 %v355
  %457 = vmatpush.bf16.msra.mxu0 %v354
  %458 = vmatpush.bf16.msra.mxu0 %v353
  %459 = vmatpush.bf16.msra.mxu0 %v352
  %460 = vmatpush.bf16.msra.mxu0 %v351
  %461 = vmatpush.bf16.msra.mxu0 %v350
  %462 = vmatpush.bf16.msra.mxu0 %v349
  %463 = vmatmul.bf16.gmra.mxu0 %v131
  %v464 = vpop.f32.mrf.mxu0
  %v465 = vadd.f32 %v452, %v464
  %v466 = vpop.f32.mrf.mxu0
  %467 = vdwg.mxu0
  %468 = vmatpush.bf16.msra.mxu0 %v364
  %469 = vmatpush.bf16.msra.mxu0 %v363
  %470 = vmatpush.bf16.msra.mxu0 %v362
  %471 = vmatpush.bf16.msra.mxu0 %v361
  %472 = vmatpush.bf16.msra.mxu0 %v360
  %473 = vmatpush.bf16.msra.mxu0 %v359
  %474 = vmatpush.bf16.msra.mxu0 %v358
  %475 = vmatpush.bf16.msra.mxu0 %v357
  %476 = vmatmul.bf16.gmra.mxu0 %v132
  %v477 = vpop.f32.mrf.mxu0
  %v478 = vadd.f32 %v465, %v477
  %v479 = vpop.f32.mrf.mxu0
  %480 = vdwg.mxu0
  %481 = vmatpush.bf16.msra.mxu0 %v372
  %482 = vmatpush.bf16.msra.mxu0 %v371
  %483 = vmatpush.bf16.msra.mxu0 %v370
  %484 = vmatpush.bf16.msra.mxu0 %v369
  %485 = vmatpush.bf16.msra.mxu0 %v368
  %486 = vmatpush.bf16.msra.mxu0 %v367
  %487 = vmatpush.bf16.msra.mxu0 %v366
  %488 = vmatpush.bf16.msra.mxu0 %v365
  %489 = vmatmul.bf16.gmra.mxu0 %v133
  %v490 = vpop.f32.mrf.mxu0
  %v491 = vadd.f32 %v478, %v490
  %v492 = vpop.f32.mrf.mxu0
  %493 = vdwg.mxu0
  %494 = vmatpush.bf16.msra.mxu0 %v380
  %495 = vmatpush.bf16.msra.mxu0 %v379
  %496 = vmatpush.bf16.msra.mxu0 %v378
  %497 = vmatpush.bf16.msra.mxu0 %v377
  %498 = vmatpush.bf16.msra.mxu0 %v376
  %499 = vmatpush.bf16.msra.mxu0 %v375
  %500 = vmatpush.bf16.msra.mxu0 %v374
  %501 = vmatpush.bf16.msra.mxu0 %v373
  %502 = vmatmul.bf16.gmra.mxu0 %v134
  %v503 = vpop.f32.mrf.mxu0
  %v504 = vadd.f32 %v491, %v503
  %v505 = vpop.f32.mrf.mxu0
  %506 = vdwg.mxu0
  %v507 = vadd.f32 %v23, %v504
  %vm508 = vcmask 392192
  %509 = vst.msk [vmem:[#allocation2] sm:$0xff] %vm508, %v507
  // Predicated region
  $region18: #{_lambda_.14} parent=0 // pred_check
    %p510 = pneg %p14
  $region19: #{_lambda_.14} parent=0 // pred_check_branch
    %512 = sbr.rel (%p510) target = $region21
  $region20: #{_lambda_.14} parent=0 // pred_region
    %v513 = vld [vmem:[#allocation2] sm:$0xff]
    %v514 = vld [vmem:[%s2] sm:$0x1]
    %v516 = vperm.slane %v514, 0
    %v518 = vadd.f32 %v513, %v516
    %v519 = vpack.c.bf16 %v518, %v518
    %vm520 = vcmask 388096
    %521 = vst.msk [vmem:[%s3] sm:$0xf] %vm520, %v519
  $region21: #{_lambda_.14} parent=0 // pred_fallthru
    _
  // Predicated region
  $region22: #{_lambda_.14} parent=0 // pred_check
    _
  $region23: #{_lambda_.14} parent=0 // pred_check_branch
    %523 = sbr.rel (0) target = $region25
  $region24: #{_lambda_.14} parent=0 // pred_region
    _
  $region25: #{_lambda_.14} parent=0 // pred_fallthru
    _
  // Predicated region
  $region26: #{_lambda_.14} parent=0 // pred_check
    _
  $region27: #{_lambda_.14} parent=0 // pred_check_branch
    %525 = sbr.rel (0) target = $region29
  $region28: #{_lambda_.14} parent=0 // pred_region
    _
  $region29: #{_lambda_.14} parent=0 // pred_fallthru
    _

// kernel: _lambda_.12
$region0: #{_lambda_.12}
  #allocation0 [shape = 'u32[]', space=smem, size = 0x4, offset = 0x4, fixed_abs, tag = 'smem constant byte address 0x4 - core index']
  #allocation1 [shape = 'u32[72,128]{1,0:T(1,128)}', space=vmem, size = 0x9000, scoped, tag = 'internal scratch']
  #allocation2 [shape = 'f32[6,48]{1,0:T(8,128)}', space=vmem, size = 0x1000, scoped, tag = 'scratch operand']
  %s0 = inlined_call_operand.vmem [shape: bf16[6,768], index: 0, kind: input, shape index: {}]
  %s1 = inlined_call_operand.vmem [shape: bf16[768,48], index: 1, kind: input, shape index: {}]
  %s2 = inlined_call_operand.vmem [shape: f32[1,48], index: 2, kind: input, shape index: {}]
  %s3 = inlined_call_operand.vmem [shape: bf16[6,48], index: 3, kind: output, shape index: {}]
  %s4 = sld [smem:[#allocation0]]
  $region30: #{_lambda_.12} parent=0
    _
  %s6 = ssub.s32 1, %s4
  %s7 = scalar_select 0, %s6, %s4
  // Predicated region
  $region2: #{_lambda_.12} parent=0 // pred_check
    _
  $region3: #{_lambda_.12} parent=0 // pred_check_branch
    %9 = sbr.rel (0) target = $region5
  $region4: #{_lambda_.12} parent=0 // pred_region
    _
  $region5: #{_lambda_.12} parent=0 // pred_fallthru
    _
  // Predicated region
  $region6: #{_lambda_.12} parent=0 // pred_check
    _
  $region7: #{_lambda_.12} parent=0 // pred_check_branch
    %11 = sbr.rel (0) target = $region9
  $region8: #{_lambda_.12} parent=0 // pred_region
    _
  $region9: #{_lambda_.12} parent=0 // pred_fallthru
    _
  // Predicated region
  $region10: #{_lambda_.12} parent=0 // pred_check
    _
  $region11: #{_lambda_.12} parent=0 // pred_check_branch
    %13 = sbr.rel (0) target = $region13
  $region12: #{_lambda_.12} parent=0 // pred_region
    _
  $region13: #{_lambda_.12} parent=0 // pred_fallthru
    _
  %p14 = scmp.eq.s32.totalorder 0, 0
  // Predicated region
  $region14: #{_lambda_.12} parent=0 // pred_check
    %p15 = pneg %p14
  $region15: #{_lambda_.12} parent=0 // pred_check_branch
    %17 = sbr.rel (%p15) target = $region17
  $region16: #{_lambda_.12} parent=0 // pred_region
    %vm18 = vcmask 390144
    %19 = vst.msk [vmem:[#allocation2] sm:$0x3f] %vm18, 0.0
  $region17: #{_lambda_.12} parent=0 // pred_fallthru
    _
  %v20 = vld [vmem:[%s0] sm:$0x77]
  %v21 = vld [vmem:[%s0 + $0x8] sm:$0x77]
  %v22 = vld [vmem:[%s0 + $0x10] sm:$0x77]
  %v23 = vld [vmem:[#allocation2] sm:$0x3f]
  %v24 = vld [vmem:[%s1] sm:$0xf]
  %v25 = vld [vmem:[%s1 + $0x4] sm:$0xf]
  %v26 = vld [vmem:[%s1 + $0x8] sm:$0xf]
  %v27 = vld [vmem:[%s1 + $0xc] sm:$0xf]
  %v28 = vld [vmem:[%s1 + $0x10] sm:$0xf]
  %v29 = vld [vmem:[%s1 + $0x14] sm:$0xf]
  %v30 = vld [vmem:[%s1 + $0x18] sm:$0xf]
  %v31 = vld [vmem:[%s1 + $0x1c] sm:$0xf]
  %v32 = vld [vmem:[%s1 + $0x20] sm:$0xf]
  %v33 = vld [vmem:[%s1 + $0x24] sm:$0xf]
  %v34 = vld [vmem:[%s1 + $0x28] sm:$0xf]
  %v35 = vld [vmem:[%s1 + $0x2c] sm:$0xf]
  %v36 = vld [vmem:[%s1 + $0x30] sm:$0xf]
  %v37 = vld [vmem:[%s1 + $0x34] sm:$0xf]
  %v38 = vld [vmem:[%s1 + $0x38] sm:$0xf]
  %v39 = vld [vmem:[%s1 + $0x3c] sm:$0xf]
  %v40 = vld [vmem:[%s1 + $0x40] sm:$0xf]
  %v41 = vld [vmem:[%s1 + $0x44] sm:$0xf]
  %v42 = vld [vmem:[%s1 + $0x48] sm:$0xf]
  %v43 = vld [vmem:[%s1 + $0x4c] sm:$0xf]
  %v44 = vld [vmem:[%s1 + $0x50] sm:$0xf]
  %v45 = vld [vmem:[%s1 + $0x54] sm:$0xf]
  %v46 = vld [vmem:[%s1 + $0x58] sm:$0xf]
  %v47 = vld [vmem:[%s1 + $0x5c] sm:$0xf]
  %v48 = vld [vmem:[%s1 + $0x60] sm:$0xf]
  %v49 = vld [vmem:[%s1 + $0x64] sm:$0xf]
  %v50 = vld [vmem:[%s1 + $0x68] sm:$0xf]
  %v51 = vld [vmem:[%s1 + $0x6c] sm:$0xf]
  %v52 = vld [vmem:[%s1 + $0x70] sm:$0xf]
  %v53 = vld [vmem:[%s1 + $0x74] sm:$0xf]
  %v54 = vld [vmem:[%s1 + $0x78] sm:$0xf]
  %v55 = vld [vmem:[%s1 + $0x7c] sm:$0xf]
  %v56 = vld [vmem:[%s1 + $0x80] sm:$0xf]
  %v57 = vld [vmem:[%s1 + $0x84] sm:$0xf]
  %v58 = vld [vmem:[%s1 + $0x88] sm:$0xf]
  %v59 = vld [vmem:[%s1 + $0x8c] sm:$0xf]
  %v60 = vld [vmem:[%s1 + $0x90] sm:$0xf]
  %v61 = vld [vmem:[%s1 + $0x94] sm:$0xf]
  %v62 = vld [vmem:[%s1 + $0x98] sm:$0xf]
  %v63 = vld [vmem:[%s1 + $0x9c] sm:$0xf]
  %v64 = vld [vmem:[%s1 + $0xa0] sm:$0xf]
  %v65 = vld [vmem:[%s1 + $0xa4] sm:$0xf]
  %v66 = vld [vmem:[%s1 + $0xa8] sm:$0xf]
  %v67 = vld [vmem:[%s1 + $0xac] sm:$0xf]
  %v68 = vld [vmem:[%s1 + $0xb0] sm:$0xf]
  %v69 = vld [vmem:[%s1 + $0xb4] sm:$0xf]
  %v70 = vld [vmem:[%s1 + $0xb8] sm:$0xf]
  %v71 = vld [vmem:[%s1 + $0xbc] sm:$0xf]
  %v72 = vld [vmem:[%s1 + $0xc0] sm:$0xf]
  %v73 = vld [vmem:[%s1 + $0xc4] sm:$0xf]
  %v74 = vld [vmem:[%s1 + $0xc8] sm:$0xf]
  %v75 = vld [vmem:[%s1 + $0xcc] sm:$0xf]
  %v76 = vld [vmem:[%s1 + $0xd0] sm:$0xf]
  %v77 = vld [vmem:[%s1 + $0xd4] sm:$0xf]
  %v78 = vld [vmem:[%s1 + $0xd8] sm:$0xf]
  %v79 = vld [vmem:[%s1 + $0xdc] sm:$0xf]
  %v80 = vld [vmem:[%s1 + $0xe0] sm:$0xf]
  %v81 = vld [vmem:[%s1 + $0xe4] sm:$0xf]
  %v82 = vld [vmem:[%s1 + $0xe8] sm:$0xf]
  %v83 = vld [vmem:[%s1 + $0xec] sm:$0xf]
  %v84 = vld [vmem:[%s1 + $0xf0] sm:$0xf]
  %v85 = vld [vmem:[%s1 + $0xf4] sm:$0xf]
  %v86 = vld [vmem:[%s1 + $0xf8] sm:$0xf]
  %v87 = vld [vmem:[%s1 + $0xfc] sm:$0xf]
  %v88 = vld [vmem:[%s1 + $0x100] sm:$0xf]
  %v89 = vld [vmem:[%s1 + $0x104] sm:$0xf]
  %v90 = vld [vmem:[%s1 + $0x108] sm:$0xf]
  %v91 = vld [vmem:[%s1 + $0x10c] sm:$0xf]
  %v92 = vld [vmem:[%s1 + $0x110] sm:$0xf]
  %v93 = vld [vmem:[%s1 + $0x114] sm:$0xf]
  %v94 = vld [vmem:[%s1 + $0x118] sm:$0xf]
  %v95 = vld [vmem:[%s1 + $0x11c] sm:$0xf]
  %v96 = vld [vmem:[%s1 + $0x120] sm:$0xf]
  %v97 = vld [vmem:[%s1 + $0x124] sm:$0xf]
  %v98 = vld [vmem:[%s1 + $0x128] sm:$0xf]
  %v99 = vld [vmem:[%s1 + $0x12c] sm:$0xf]
  %v100 = vld [vmem:[%s1 + $0x130] sm:$0xf]
  %v101 = vld [vmem:[%s1 + $0x134] sm:$0xf]
  %v102 = vld [vmem:[%s1 + $0x138] sm:$0xf]
  %v103 = vld [vmem:[%s1 + $0x13c] sm:$0xf]
  %v104 = vld [vmem:[%s1 + $0x140] sm:$0xf]
  %v105 = vld [vmem:[%s1 + $0x144] sm:$0xf]
  %v106 = vld [vmem:[%s1 + $0x148] sm:$0xf]
  %v107 = vld [vmem:[%s1 + $0x14c] sm:$0xf]
  %v108 = vld [vmem:[%s1 + $0x150] sm:$0xf]
  %v109 = vld [vmem:[%s1 + $0x154] sm:$0xf]
  %v110 = vld [vmem:[%s1 + $0x158] sm:$0xf]
  %v111 = vld [vmem:[%s1 + $0x15c] sm:$0xf]
  %v112 = vld [vmem:[%s1 + $0x160] sm:$0xf]
  %v113 = vld [vmem:[%s1 + $0x164] sm:$0xf]
  %v114 = vld [vmem:[%s1 + $0x168] sm:$0xf]
  %v115 = vld [vmem:[%s1 + $0x16c] sm:$0xf]
  %v116 = vld [vmem:[%s1 + $0x170] sm:$0xf]
  %v117 = vld [vmem:[%s1 + $0x174] sm:$0xf]
  %v118 = vld [vmem:[%s1 + $0x178] sm:$0xf]
  %v119 = vld [vmem:[%s1 + $0x17c] sm:$0xf]
  %v123 = vunpack.c.l.b16 %v20
  %v124 = vunpack.c.h.b16 %v20
  %v125 = vunpack.c.l.b16 %v21
  %v126 = vunpack.c.h.b16 %v21
  %v127 = vunpack.c.l.b16 %v22
  %v128 = vunpack.c.h.b16 %v22
  %v129 = vpack.c.b16 %v123, %v123
  %v130 = vpack.c.b16 %v124, %v124
  %v131 = vpack.c.b16 %v125, %v125
  %v132 = vpack.c.b16 %v126, %v126
  %v133 = vpack.c.b16 %v127, %v127
  %v134 = vpack.c.b16 %v128, %v128
  %v237 = vunpack.c.l.b16 %v24
  %v238 = vunpack.c.l.b16 %v25
  %v239 = vunpack.c.l.b16 %v26
  %v240 = vunpack.c.l.b16 %v27
  %v241 = vunpack.c.l.b16 %v28
  %v242 = vunpack.c.l.b16 %v29
  %v243 = vunpack.c.l.b16 %v30
  %v244 = vunpack.c.l.b16 %v31
  %v245 = vunpack.c.l.b16 %v32
  %v246 = vunpack.c.l.b16 %v33
  %v247 = vunpack.c.l.b16 %v34
  %v248 = vunpack.c.l.b16 %v35
  %v249 = vunpack.c.l.b16 %v36
  %v250 = vunpack.c.l.b16 %v37
  %v251 = vunpack.c.l.b16 %v38
  %v252 = vunpack.c.l.b16 %v39
  %v253 = vunpack.c.l.b16 %v40
  %v254 = vunpack.c.l.b16 %v41
  %v255 = vunpack.c.l.b16 %v42
  %v256 = vunpack.c.l.b16 %v43
  %v257 = vunpack.c.l.b16 %v44
  %v258 = vunpack.c.l.b16 %v45
  %v259 = vunpack.c.l.b16 %v46
  %v260 = vunpack.c.l.b16 %v47
  %v261 = vunpack.c.l.b16 %v48
  %v262 = vunpack.c.l.b16 %v49
  %v263 = vunpack.c.l.b16 %v50
  %v264 = vunpack.c.l.b16 %v51
  %v265 = vunpack.c.l.b16 %v52
  %v266 = vunpack.c.l.b16 %v53
  %v267 = vunpack.c.l.b16 %v54
  %v268 = vunpack.c.l.b16 %v55
  %v269 = vunpack.c.l.b16 %v56
  %v270 = vunpack.c.l.b16 %v57
  %v271 = vunpack.c.l.b16 %v58
  %v272 = vunpack.c.l.b16 %v59
  %v273 = vunpack.c.l.b16 %v60
  %v274 = vunpack.c.l.b16 %v61
  %v275 = vunpack.c.l.b16 %v62
  %v276 = vunpack.c.l.b16 %v63
  %v277 = vunpack.c.l.b16 %v64
  %v278 = vunpack.c.l.b16 %v65
  %v279 = vunpack.c.l.b16 %v66
  %v280 = vunpack.c.l.b16 %v67
  %v281 = vunpack.c.l.b16 %v68
  %v282 = vunpack.c.l.b16 %v69
  %v283 = vunpack.c.l.b16 %v70
  %v284 = vunpack.c.l.b16 %v71
  %v285 = vunpack.c.l.b16 %v72
  %v286 = vunpack.c.l.b16 %v73
  %v287 = vunpack.c.l.b16 %v74
  %v288 = vunpack.c.l.b16 %v75
  %v289 = vunpack.c.l.b16 %v76
  %v290 = vunpack.c.l.b16 %v77
  %v291 = vunpack.c.l.b16 %v78
  %v292 = vunpack.c.l.b16 %v79
  %v293 = vunpack.c.l.b16 %v80
  %v294 = vunpack.c.l.b16 %v81
  %v295 = vunpack.c.l.b16 %v82
  %v296 = vunpack.c.l.b16 %v83
  %v297 = vunpack.c.l.b16 %v84
  %v298 = vunpack.c.l.b16 %v85
  %v299 = vunpack.c.l.b16 %v86
  %v300 = vunpack.c.l.b16 %v87
  %v301 = vunpack.c.l.b16 %v88
  %v302 = vunpack.c.l.b16 %v89
  %v303 = vunpack.c.l.b16 %v90
  %v304 = vunpack.c.l.b16 %v91
  %v305 = vunpack.c.l.b16 %v92
  %v306 = vunpack.c.l.b16 %v93
  %v307 = vunpack.c.l.b16 %v94
  %v308 = vunpack.c.l.b16 %v95
  %v309 = vunpack.c.l.b16 %v96
  %v310 = vunpack.c.l.b16 %v97
  %v311 = vunpack.c.l.b16 %v98
  %v312 = vunpack.c.l.b16 %v99
  %v313 = vunpack.c.l.b16 %v100
  %v314 = vunpack.c.l.b16 %v101
  %v315 = vunpack.c.l.b16 %v102
  %v316 = vunpack.c.l.b16 %v103
  %v317 = vunpack.c.l.b16 %v104
  %v318 = vunpack.c.l.b16 %v105
  %v319 = vunpack.c.l.b16 %v106
  %v320 = vunpack.c.l.b16 %v107
  %v321 = vunpack.c.l.b16 %v108
  %v322 = vunpack.c.l.b16 %v109
  %v323 = vunpack.c.l.b16 %v110
  %v324 = vunpack.c.l.b16 %v111
  %v325 = vunpack.c.l.b16 %v112
  %v326 = vunpack.c.l.b16 %v113
  %v327 = vunpack.c.l.b16 %v114
  %v328 = vunpack.c.l.b16 %v115
  %v329 = vunpack.c.l.b16 %v116
  %v330 = vunpack.c.l.b16 %v117
  %v331 = vunpack.c.l.b16 %v118
  %v332 = vunpack.c.l.b16 %v119
  %v333 = vpack.c.b16 %v238, %v237
  %v334 = vpack.c.b16 %v240, %v239
  %v335 = vpack.c.b16 %v242, %v241
  %v336 = vpack.c.b16 %v244, %v243
  %v337 = vpack.c.b16 %v246, %v245
  %v338 = vpack.c.b16 %v248, %v247
  %v339 = vpack.c.b16 %v250, %v249
  %v340 = vpack.c.b16 %v252, %v251
  %v341 = vpack.c.b16 %v254, %v253
  %v342 = vpack.c.b16 %v256, %v255
  %v343 = vpack.c.b16 %v258, %v257
  %v344 = vpack.c.b16 %v260, %v259
  %v345 = vpack.c.b16 %v262, %v261
  %v346 = vpack.c.b16 %v264, %v263
  %v347 = vpack.c.b16 %v266, %v265
  %v348 = vpack.c.b16 %v268, %v267
  %v349 = vpack.c.b16 %v270, %v269
  %v350 = vpack.c.b16 %v272, %v271
  %v351 = vpack.c.b16 %v274, %v273
  %v352 = vpack.c.b16 %v276, %v275
  %v353 = vpack.c.b16 %v278, %v277
  %v354 = vpack.c.b16 %v280, %v279
  %v355 = vpack.c.b16 %v282, %v281
  %v356 = vpack.c.b16 %v284, %v283
  %v357 = vpack.c.b16 %v286, %v285
  %v358 = vpack.c.b16 %v288, %v287
  %v359 = vpack.c.b16 %v290, %v289
  %v360 = vpack.c.b16 %v292, %v291
  %v361 = vpack.c.b16 %v294, %v293
  %v362 = vpack.c.b16 %v296, %v295
  %v363 = vpack.c.b16 %v298, %v297
  %v364 = vpack.c.b16 %v300, %v299
  %v365 = vpack.c.b16 %v302, %v301
  %v366 = vpack.c.b16 %v304, %v303
  %v367 = vpack.c.b16 %v306, %v305
  %v368 = vpack.c.b16 %v308, %v307
  %v369 = vpack.c.b16 %v310, %v309
  %v370 = vpack.c.b16 %v312, %v311
  %v371 = vpack.c.b16 %v314, %v313
  %v372 = vpack.c.b16 %v316, %v315
  %v373 = vpack.c.b16 %v318, %v317
  %v374 = vpack.c.b16 %v320, %v319
  %v375 = vpack.c.b16 %v322, %v321
  %v376 = vpack.c.b16 %v324, %v323
  %v377 = vpack.c.b16 %v326, %v325
  %v378 = vpack.c.b16 %v328, %v327
  %v379 = vpack.c.b16 %v330, %v329
  %v380 = vpack.c.b16 %v332, %v331
  %429 = vmatpush.bf16.msra.mxu0 %v340
  %430 = vmatpush.bf16.msra.mxu0 %v339
  %431 = vmatpush.bf16.msra.mxu0 %v338
  %432 = vmatpush.bf16.msra.mxu0 %v337
  %433 = vmatpush.bf16.msra.mxu0 %v336
  %434 = vmatpush.bf16.msra.mxu0 %v335
  %435 = vmatpush.bf16.msra.mxu0 %v334
  %436 = vmatpush.bf16.msra.mxu0 %v333
  %437 = vmatmul.bf16.gmra.mxu0 %v129
  %v438 = vpop.f32.mrf.mxu0
  %v439 = vadd.f32 0.0, %v438
  %v440 = vpop.f32.mrf.mxu0
  %441 = vdwg.mxu0
  %442 = vmatpush.bf16.msra.mxu0 %v348
  %443 = vmatpush.bf16.msra.mxu0 %v347
  %444 = vmatpush.bf16.msra.mxu0 %v346
  %445 = vmatpush.bf16.msra.mxu0 %v345
  %446 = vmatpush.bf16.msra.mxu0 %v344
  %447 = vmatpush.bf16.msra.mxu0 %v343
  %448 = vmatpush.bf16.msra.mxu0 %v342
  %449 = vmatpush.bf16.msra.mxu0 %v341
  %450 = vmatmul.bf16.gmra.mxu0 %v130
  %v451 = vpop.f32.mrf.mxu0
  %v452 = vadd.f32 %v439, %v451
  %v453 = vpop.f32.mrf.mxu0
  %454 = vdwg.mxu0
  %455 = vmatpush.bf16.msra.mxu0 %v356
  %456 = vmatpush.bf16.msra.mxu0 %v355
  %457 = vmatpush.bf16.msra.mxu0 %v354
  %458 = vmatpush.bf16.msra.mxu0 %v353
  %459 = vmatpush.bf16.msra.mxu0 %v352
  %460 = vmatpush.bf16.msra.mxu0 %v351
  %461 = vmatpush.bf16.msra.mxu0 %v350
  %462 = vmatpush.bf16.msra.mxu0 %v349
  %463 = vmatmul.bf16.gmra.mxu0 %v131
  %v464 = vpop.f32.mrf.mxu0
  %v465 = vadd.f32 %v452, %v464
  %v466 = vpop.f32.mrf.mxu0
  %467 = vdwg.mxu0
  %468 = vmatpush.bf16.msra.mxu0 %v364
  %469 = vmatpush.bf16.msra.mxu0 %v363
  %470 = vmatpush.bf16.msra.mxu0 %v362
  %471 = vmatpush.bf16.msra.mxu0 %v361
  %472 = vmatpush.bf16.msra.mxu0 %v360
  %473 = vmatpush.bf16.msra.mxu0 %v359
  %474 = vmatpush.bf16.msra.mxu0 %v358
  %475 = vmatpush.bf16.msra.mxu0 %v357
  %476 = vmatmul.bf16.gmra.mxu0 %v132
  %v477 = vpop.f32.mrf.mxu0
  %v478 = vadd.f32 %v465, %v477
  %v479 = vpop.f32.mrf.mxu0
  %480 = vdwg.mxu0
  %481 = vmatpush.bf16.msra.mxu0 %v372
  %482 = vmatpush.bf16.msra.mxu0 %v371
  %483 = vmatpush.bf16.msra.mxu0 %v370
  %484 = vmatpush.bf16.msra.mxu0 %v369
  %485 = vmatpush.bf16.msra.mxu0 %v368
  %486 = vmatpush.bf16.msra.mxu0 %v367
  %487 = vmatpush.bf16.msra.mxu0 %v366
  %488 = vmatpush.bf16.msra.mxu0 %v365
  %489 = vmatmul.bf16.gmra.mxu0 %v133
  %v490 = vpop.f32.mrf.mxu0
  %v491 = vadd.f32 %v478, %v490
  %v492 = vpop.f32.mrf.mxu0
  %493 = vdwg.mxu0
  %494 = vmatpush.bf16.msra.mxu0 %v380
  %495 = vmatpush.bf16.msra.mxu0 %v379
  %496 = vmatpush.bf16.msra.mxu0 %v378
  %497 = vmatpush.bf16.msra.mxu0 %v377
  %498 = vmatpush.bf16.msra.mxu0 %v376
  %499 = vmatpush.bf16.msra.mxu0 %v375
  %500 = vmatpush.bf16.msra.mxu0 %v374
  %501 = vmatpush.bf16.msra.mxu0 %v373
  %502 = vmatmul.bf16.gmra.mxu0 %v134
  %v503 = vpop.f32.mrf.mxu0
  %v504 = vadd.f32 %v491, %v503
  %v505 = vpop.f32.mrf.mxu0
  %506 = vdwg.mxu0
  %v507 = vadd.f32 %v23, %v504
  %vm508 = vcmask 390144
  %509 = vst.msk [vmem:[#allocation2] sm:$0x3f] %vm508, %v507
  // Predicated region
  $region18: #{_lambda_.12} parent=0 // pred_check
    %p510 = pneg %p14
  $region19: #{_lambda_.12} parent=0 // pred_check_branch
    %512 = sbr.rel (%p510) target = $region21
  $region20: #{_lambda_.12} parent=0 // pred_region
    %v513 = vld [vmem:[#allocation2] sm:$0x3f]
    %v514 = vld [vmem:[%s2] sm:$0x1]
    %v516 = vperm.slane %v514, 0
    %v518 = vadd.f32 %v513, %v516
    %v519 = vpack.c.bf16 %v518, %v518
    %vm520 = vcmask 387072
    %521 = vst.msk [vmem:[%s3] sm:$0x7] %vm520, %v519
  $region21: #{_lambda_.12} parent=0 // pred_fallthru
    _
  // Predicated region
  $region22: #{_lambda_.12} parent=0 // pred_check
    _
  $region23: #{_lambda_.12} parent=0 // pred_check_branch
    %523 = sbr.rel (0) target = $region25
  $region24: #{_lambda_.12} parent=0 // pred_region
    _
  $region25: #{_lambda_.12} parent=0 // pred_fallthru
    _
  // Predicated region
  $region26: #{_lambda_.12} parent=0 // pred_check
    _
  $region27: #{_lambda_.12} parent=0 // pred_check_branch
    %525 = sbr.rel (0) target = $region29
  $region28: #{_lambda_.12} parent=0 // pred_region
    _
  $region29: #{_lambda_.12} parent=0 // pred_fallthru
    _

// kernel: _lambda_.13
$region0: #{_lambda_.13}
  #allocation0 [shape = 'u32[]', space=smem, size = 0x4, offset = 0x4, fixed_abs, tag = 'smem constant byte address 0x4 - core index']
  #allocation1 [shape = 'u32[72,128]{1,0:T(1,128)}', space=vmem, size = 0x9000, scoped, tag = 'internal scratch']
  #allocation2 [shape = 'f32[4,48]{1,0:T(4,128)}', space=vmem, size = 0x800, scoped, tag = 'scratch operand']
  %s0 = inlined_call_operand.vmem [shape: bf16[4,1728], index: 0, kind: input, shape index: {}]
  %s1 = inlined_call_operand.vmem [shape: bf16[1728,48], index: 1, kind: input, shape index: {}]
  %s2 = inlined_call_operand.vmem [shape: f32[1,48], index: 2, kind: input, shape index: {}]
  %s3 = inlined_call_operand.vmem [shape: bf16[4,48], index: 3, kind: output, shape index: {}]
  %s4 = sld [smem:[#allocation0]]
  $region30: #{_lambda_.13} parent=0
    _
  %s6 = ssub.s32 1, %s4
  %s7 = scalar_select 0, %s6, %s4
  // Predicated region
  $region2: #{_lambda_.13} parent=0 // pred_check
    _
  $region3: #{_lambda_.13} parent=0 // pred_check_branch
    %9 = sbr.rel (0) target = $region5
  $region4: #{_lambda_.13} parent=0 // pred_region
    _
  $region5: #{_lambda_.13} parent=0 // pred_fallthru
    _
  // Predicated region
  $region6: #{_lambda_.13} parent=0 // pred_check
    _
  $region7: #{_lambda_.13} parent=0 // pred_check_branch
    %11 = sbr.rel (0) target = $region9
  $region8: #{_lambda_.13} parent=0 // pred_region
    _
  $region9: #{_lambda_.13} parent=0 // pred_fallthru
    _
  // Predicated region
  $region10: #{_lambda_.13} parent=0 // pred_check
    _
  $region11: #{_lambda_.13} parent=0 // pred_check_branch
    %13 = sbr.rel (0) target = $region13
  $region12: #{_lambda_.13} parent=0 // pred_region
    _
  $region13: #{_lambda_.13} parent=0 // pred_fallthru
    _
  %p15 = scmp.eq.s32.totalorder 0, 0
  // Predicated region
  $region14: #{_lambda_.13} parent=0 // pred_check
    %p16 = pneg %p15
  $region15: #{_lambda_.13} parent=0 // pred_check_branch
    %18 = sbr.rel (%p16) target = $region17
  $region16: #{_lambda_.13} parent=0 // pred_region
    %vm19 = vcmask 388096
    %20 = vst.msk [vmem:[#allocation2] sm:$0xf] %vm19, 0.0
  $region17: #{_lambda_.13} parent=0 // pred_fallthru
    _
  %v21 = vld [vmem:[%s0] sm:$0xff]
  %v22 = vld [vmem:[%s0 + $0x8] sm:$0xff]
  %v23 = vld [vmem:[%s0 + $0x10] sm:$0xff]
  %v24 = vld [vmem:[%s0 + $0x18] sm:$0xf]
  %v25 = vld [vmem:[#allocation2] sm:$0xf]
  %v26 = vld [vmem:[%s1] sm:$0xf]
  %v27 = vld [vmem:[%s1 + $0x4] sm:$0xf]
  %v28 = vld [vmem:[%s1 + $0x8] sm:$0xf]
  %v29 = vld [vmem:[%s1 + $0xc] sm:$0xf]
  %v30 = vld [vmem:[%s1 + $0x10] sm:$0xf]
  %v31 = vld [vmem:[%s1 + $0x14] sm:$0xf]
  %v32 = vld [vmem:[%s1 + $0x18] sm:$0xf]
  %v33 = vld [vmem:[%s1 + $0x1c] sm:$0xf]
  %v34 = vld [vmem:[%s1 + $0x20] sm:$0xf]
  %v35 = vld [vmem:[%s1 + $0x24] sm:$0xf]
  %v36 = vld [vmem:[%s1 + $0x28] sm:$0xf]
  %v37 = vld [vmem:[%s1 + $0x2c] sm:$0xf]
  %v38 = vld [vmem:[%s1 + $0x30] sm:$0xf]
  %v39 = vld [vmem:[%s1 + $0x34] sm:$0xf]
  %v40 = vld [vmem:[%s1 + $0x38] sm:$0xf]
  %v41 = vld [vmem:[%s1 + $0x3c] sm:$0xf]
  %v42 = vld [vmem:[%s1 + $0x40] sm:$0xf]
  %v43 = vld [vmem:[%s1 + $0x44] sm:$0xf]
  %v44 = vld [vmem:[%s1 + $0x48] sm:$0xf]
  %v45 = vld [vmem:[%s1 + $0x4c] sm:$0xf]
  %v46 = vld [vmem:[%s1 + $0x50] sm:$0xf]
  %v47 = vld [vmem:[%s1 + $0x54] sm:$0xf]
  %v48 = vld [vmem:[%s1 + $0x58] sm:$0xf]
  %v49 = vld [vmem:[%s1 + $0x5c] sm:$0xf]
  %v50 = vld [vmem:[%s1 + $0x60] sm:$0xf]
  %v51 = vld [vmem:[%s1 + $0x64] sm:$0xf]
  %v52 = vld [vmem:[%s1 + $0x68] sm:$0xf]
  %v53 = vld [vmem:[%s1 + $0x6c] sm:$0xf]
  %v54 = vld [vmem:[%s1 + $0x70] sm:$0xf]
  %v55 = vld [vmem:[%s1 + $0x74] sm:$0xf]
  %v56 = vld [vmem:[%s1 + $0x78] sm:$0xf]
  %v57 = vld [vmem:[%s1 + $0x7c] sm:$0xf]
  %v58 = vld [vmem:[%s1 + $0x80] sm:$0xf]
  %v59 = vld [vmem:[%s1 + $0x84] sm:$0xf]
  %v60 = vld [vmem:[%s1 + $0x88] sm:$0xf]
  %v61 = vld [vmem:[%s1 + $0x8c] sm:$0xf]
  %v62 = vld [vmem:[%s1 + $0x90] sm:$0xf]
  %v63 = vld [vmem:[%s1 + $0x94] sm:$0xf]
  %v64 = vld [vmem:[%s1 + $0x98] sm:$0xf]
  %v65 = vld [vmem:[%s1 + $0x9c] sm:$0xf]
  %v66 = vld [vmem:[%s1 + $0xa0] sm:$0xf]
  %v67 = vld [vmem:[%s1 + $0xa4] sm:$0xf]
  %v68 = vld [vmem:[%s1 + $0xa8] sm:$0xf]
  %v69 = vld [vmem:[%s1 + $0xac] sm:$0xf]
  %v70 = vld [vmem:[%s1 + $0xb0] sm:$0xf]
  %v71 = vld [vmem:[%s1 + $0xb4] sm:$0xf]
  %v72 = vld [vmem:[%s1 + $0xb8] sm:$0xf]
  %v73 = vld [vmem:[%s1 + $0xbc] sm:$0xf]
  %v74 = vld [vmem:[%s1 + $0xc0] sm:$0xf]
  %v75 = vld [vmem:[%s1 + $0xc4] sm:$0xf]
  %v76 = vld [vmem:[%s1 + $0xc8] sm:$0xf]
  %v77 = vld [vmem:[%s1 + $0xcc] sm:$0xf]
  %v78 = vld [vmem:[%s1 + $0xd0] sm:$0xf]
  %v79 = vld [vmem:[%s1 + $0xd4] sm:$0xf]
  %v80 = vld [vmem:[%s1 + $0xd8] sm:$0xf]
  %v81 = vld [vmem:[%s1 + $0xdc] sm:$0xf]
  %v82 = vld [vmem:[%s1 + $0xe0] sm:$0xf]
  %v83 = vld [vmem:[%s1 + $0xe4] sm:$0xf]
  %v84 = vld [vmem:[%s1 + $0xe8] sm:$0xf]
  %v85 = vld [vmem:[%s1 + $0xec] sm:$0xf]
  %v86 = vld [vmem:[%s1 + $0xf0] sm:$0xf]
  %v87 = vld [vmem:[%s1 + $0xf4] sm:$0xf]
  %v88 = vld [vmem:[%s1 + $0xf8] sm:$0xf]
  %v89 = vld [vmem:[%s1 + $0xfc] sm:$0xf]
  %v90 = vld [vmem:[%s1 + $0x100] sm:$0xf]
  %v91 = vld [vmem:[%s1 + $0x104] sm:$0xf]
  %v92 = vld [vmem:[%s1 + $0x108] sm:$0xf]
  %v93 = vld [vmem:[%s1 + $0x10c] sm:$0xf]
  %v94 = vld [vmem:[%s1 + $0x110] sm:$0xf]
  %v95 = vld [vmem:[%s1 + $0x114] sm:$0xf]
  %v96 = vld [vmem:[%s1 + $0x118] sm:$0xf]
  %v97 = vld [vmem:[%s1 + $0x11c] sm:$0xf]
  %v98 = vld [vmem:[%s1 + $0x120] sm:$0xf]
  %v99 = vld [vmem:[%s1 + $0x124] sm:$0xf]
  %v100 = vld [vmem:[%s1 + $0x128] sm:$0xf]
  %v101 = vld [vmem:[%s1 + $0x12c] sm:$0xf]
  %v102 = vld [vmem:[%s1 + $0x130] sm:$0xf]
  %v103 = vld [vmem:[%s1 + $0x134] sm:$0xf]
  %v104 = vld [vmem:[%s1 + $0x138] sm:$0xf]
  %v105 = vld [vmem:[%s1 + $0x13c] sm:$0xf]
  %v106 = vld [vmem:[%s1 + $0x140] sm:$0xf]
  %v107 = vld [vmem:[%s1 + $0x144] sm:$0xf]
  %v108 = vld [vmem:[%s1 + $0x148] sm:$0xf]
  %v109 = vld [vmem:[%s1 + $0x14c] sm:$0xf]
  %v110 = vld [vmem:[%s1 + $0x150] sm:$0xf]
  %v111 = vld [vmem:[%s1 + $0x154] sm:$0xf]
  %v112 = vld [vmem:[%s1 + $0x158] sm:$0xf]
  %v113 = vld [vmem:[%s1 + $0x15c] sm:$0xf]
  %v114 = vld [vmem:[%s1 + $0x160] sm:$0xf]
  %v115 = vld [vmem:[%s1 + $0x164] sm:$0xf]
  %v116 = vld [vmem:[%s1 + $0x168] sm:$0xf]
  %v117 = vld [vmem:[%s1 + $0x16c] sm:$0xf]
  %v118 = vld [vmem:[%s1 + $0x170] sm:$0xf]
  %v119 = vld [vmem:[%s1 + $0x174] sm:$0xf]
  %v120 = vld [vmem:[%s1 + $0x178] sm:$0xf]
  %v121 = vld [vmem:[%s1 + $0x17c] sm:$0xf]
  %v122 = vld [vmem:[%s1 + $0x180] sm:$0xf]
  %v123 = vld [vmem:[%s1 + $0x184] sm:$0xf]
  %v124 = vld [vmem:[%s1 + $0x188] sm:$0xf]
  %v125 = vld [vmem:[%s1 + $0x18c] sm:$0xf]
  %v126 = vld [vmem:[%s1 + $0x190] sm:$0xf]
  %v127 = vld [vmem:[%s1 + $0x194] sm:$0xf]
  %v128 = vld [vmem:[%s1 + $0x198] sm:$0xf]
  %v129 = vld [vmem:[%s1 + $0x19c] sm:$0xf]
  %v130 = vld [vmem:[%s1 + $0x1a0] sm:$0xf]
  %v131 = vld [vmem:[%s1 + $0x1a4] sm:$0xf]
  %v132 = vld [vmem:[%s1 + $0x1a8] sm:$0xf]
  %v133 = vld [vmem:[%s1 + $0x1ac] sm:$0xf]
  %v134 = vld [vmem:[%s1 + $0x1b0] sm:$0xf]
  %v135 = vld [vmem:[%s1 + $0x1b4] sm:$0xf]
  %v136 = vld [vmem:[%s1 + $0x1b8] sm:$0xf]
  %v137 = vld [vmem:[%s1 + $0x1bc] sm:$0xf]
  %v138 = vld [vmem:[%s1 + $0x1c0] sm:$0xf]
  %v139 = vld [vmem:[%s1 + $0x1c4] sm:$0xf]
  %v140 = vld [vmem:[%s1 + $0x1c8] sm:$0xf]
  %v141 = vld [vmem:[%s1 + $0x1cc] sm:$0xf]
  %v142 = vld [vmem:[%s1 + $0x1d0] sm:$0xf]
  %v143 = vld [vmem:[%s1 + $0x1d4] sm:$0xf]
  %v144 = vld [vmem:[%s1 + $0x1d8] sm:$0xf]
  %v145 = vld [vmem:[%s1 + $0x1dc] sm:$0xf]
  %v146 = vld [vmem:[%s1 + $0x1e0] sm:$0xf]
  %v147 = vld [vmem:[%s1 + $0x1e4] sm:$0xf]
  %v148 = vld [vmem:[%s1 + $0x1e8] sm:$0xf]
  %v149 = vld [vmem:[%s1 + $0x1ec] sm:$0xf]
  %v150 = vld [vmem:[%s1 + $0x1f0] sm:$0xf]
  %v151 = vld [vmem:[%s1 + $0x1f4] sm:$0xf]
  %v152 = vld [vmem:[%s1 + $0x1f8] sm:$0xf]
  %v153 = vld [vmem:[%s1 + $0x1fc] sm:$0xf]
  %v154 = vld [vmem:[%s1 + $0x200] sm:$0xf]
  %v155 = vld [vmem:[%s1 + $0x204] sm:$0xf]
  %v156 = vld [vmem:[%s1 + $0x208] sm:$0xf]
  %v157 = vld [vmem:[%s1 + $0x20c] sm:$0xf]
  %v158 = vld [vmem:[%s1 + $0x210] sm:$0xf]
  %v159 = vld [vmem:[%s1 + $0x214] sm:$0xf]
  %v160 = vld [vmem:[%s1 + $0x218] sm:$0xf]
  %v161 = vld [vmem:[%s1 + $0x21c] sm:$0xf]
  %v162 = vld [vmem:[%s1 + $0x220] sm:$0xf]
  %v163 = vld [vmem:[%s1 + $0x224] sm:$0xf]
  %v164 = vld [vmem:[%s1 + $0x228] sm:$0xf]
  %v165 = vld [vmem:[%s1 + $0x22c] sm:$0xf]
  %v166 = vld [vmem:[%s1 + $0x230] sm:$0xf]
  %v167 = vld [vmem:[%s1 + $0x234] sm:$0xf]
  %v168 = vld [vmem:[%s1 + $0x238] sm:$0xf]
  %v169 = vld [vmem:[%s1 + $0x23c] sm:$0xf]
  %v170 = vld [vmem:[%s1 + $0x240] sm:$0xf]
  %v171 = vld [vmem:[%s1 + $0x244] sm:$0xf]
  %v172 = vld [vmem:[%s1 + $0x248] sm:$0xf]
  %v173 = vld [vmem:[%s1 + $0x24c] sm:$0xf]
  %v174 = vld [vmem:[%s1 + $0x250] sm:$0xf]
  %v175 = vld [vmem:[%s1 + $0x254] sm:$0xf]
  %v176 = vld [vmem:[%s1 + $0x258] sm:$0xf]
  %v177 = vld [vmem:[%s1 + $0x25c] sm:$0xf]
  %v178 = vld [vmem:[%s1 + $0x260] sm:$0xf]
  %v179 = vld [vmem:[%s1 + $0x264] sm:$0xf]
  %v180 = vld [vmem:[%s1 + $0x268] sm:$0xf]
  %v181 = vld [vmem:[%s1 + $0x26c] sm:$0xf]
  %v182 = vld [vmem:[%s1 + $0x270] sm:$0xf]
  %v183 = vld [vmem:[%s1 + $0x274] sm:$0xf]
  %v184 = vld [vmem:[%s1 + $0x278] sm:$0xf]
  %v185 = vld [vmem:[%s1 + $0x27c] sm:$0xf]
  %v186 = vld [vmem:[%s1 + $0x280] sm:$0xf]
  %v187 = vld [vmem:[%s1 + $0x284] sm:$0xf]
  %v188 = vld [vmem:[%s1 + $0x288] sm:$0xf]
  %v189 = vld [vmem:[%s1 + $0x28c] sm:$0xf]
  %v190 = vld [vmem:[%s1 + $0x290] sm:$0xf]
  %v191 = vld [vmem:[%s1 + $0x294] sm:$0xf]
  %v192 = vld [vmem:[%s1 + $0x298] sm:$0xf]
  %v193 = vld [vmem:[%s1 + $0x29c] sm:$0xf]
  %v194 = vld [vmem:[%s1 + $0x2a0] sm:$0xf]
  %v195 = vld [vmem:[%s1 + $0x2a4] sm:$0xf]
  %v196 = vld [vmem:[%s1 + $0x2a8] sm:$0xf]
  %v197 = vld [vmem:[%s1 + $0x2ac] sm:$0xf]
  %v198 = vld [vmem:[%s1 + $0x2b0] sm:$0xf]
  %v199 = vld [vmem:[%s1 + $0x2b4] sm:$0xf]
  %v200 = vld [vmem:[%s1 + $0x2b8] sm:$0xf]
  %v201 = vld [vmem:[%s1 + $0x2bc] sm:$0xf]
  %v202 = vld [vmem:[%s1 + $0x2c0] sm:$0xf]
  %v203 = vld [vmem:[%s1 + $0x2c4] sm:$0xf]
  %v204 = vld [vmem:[%s1 + $0x2c8] sm:$0xf]
  %v205 = vld [vmem:[%s1 + $0x2cc] sm:$0xf]
  %v206 = vld [vmem:[%s1 + $0x2d0] sm:$0xf]
  %v207 = vld [vmem:[%s1 + $0x2d4] sm:$0xf]
  %v208 = vld [vmem:[%s1 + $0x2d8] sm:$0xf]
  %v209 = vld [vmem:[%s1 + $0x2dc] sm:$0xf]
  %v210 = vld [vmem:[%s1 + $0x2e0] sm:$0xf]
  %v211 = vld [vmem:[%s1 + $0x2e4] sm:$0xf]
  %v212 = vld [vmem:[%s1 + $0x2e8] sm:$0xf]
  %v213 = vld [vmem:[%s1 + $0x2ec] sm:$0xf]
  %v214 = vld [vmem:[%s1 + $0x2f0] sm:$0xf]
  %v215 = vld [vmem:[%s1 + $0x2f4] sm:$0xf]
  %v216 = vld [vmem:[%s1 + $0x2f8] sm:$0xf]
  %v217 = vld [vmem:[%s1 + $0x2fc] sm:$0xf]
  %v218 = vld [vmem:[%s1 + $0x300] sm:$0xf]
  %v219 = vld [vmem:[%s1 + $0x304] sm:$0xf]
  %v220 = vld [vmem:[%s1 + $0x308] sm:$0xf]
  %v221 = vld [vmem:[%s1 + $0x30c] sm:$0xf]
  %v222 = vld [vmem:[%s1 + $0x310] sm:$0xf]
  %v223 = vld [vmem:[%s1 + $0x314] sm:$0xf]
  %v224 = vld [vmem:[%s1 + $0x318] sm:$0xf]
  %v225 = vld [vmem:[%s1 + $0x31c] sm:$0xf]
  %v226 = vld [vmem:[%s1 + $0x320] sm:$0xf]
  %v227 = vld [vmem:[%s1 + $0x324] sm:$0xf]
  %v228 = vld [vmem:[%s1 + $0x328] sm:$0xf]
  %v229 = vld [vmem:[%s1 + $0x32c] sm:$0xf]
  %v230 = vld [vmem:[%s1 + $0x330] sm:$0xf]
  %v231 = vld [vmem:[%s1 + $0x334] sm:$0xf]
  %v232 = vld [vmem:[%s1 + $0x338] sm:$0xf]
  %v233 = vld [vmem:[%s1 + $0x33c] sm:$0xf]
  %v234 = vld [vmem:[%s1 + $0x340] sm:$0xf]
  %v235 = vld [vmem:[%s1 + $0x344] sm:$0xf]
  %v236 = vld [vmem:[%s1 + $0x348] sm:$0xf]
  %v237 = vld [vmem:[%s1 + $0x34c] sm:$0xf]
  %v238 = vld [vmem:[%s1 + $0x350] sm:$0xf]
  %v239 = vld [vmem:[%s1 + $0x354] sm:$0xf]
  %v240 = vld [vmem:[%s1 + $0x358] sm:$0xf]
  %v241 = vld [vmem:[%s1 + $0x35c] sm:$0xf]
  %243 = vst [vmem:[#allocation1] ss:$4 sm:$0xff] %v21
  %s245 = scalar_lea.vmem [#allocation1], 32
  %246 = vst [vmem:[%s245] ss:$4 sm:$0xff] %v22
  %v247 = vld.sshfl [vmem:[#allocation1] sm:$0xff pattern:$0x73625140]
  %v248 = vld.sshfl [vmem:[#allocation1 + $0x8] sm:$0xff pattern:$0x73625140]
  %v249 = vld.sshfl [vmem:[#allocation1 + $0x10] sm:$0xff pattern:$0x73625140]
  %v250 = vld.sshfl [vmem:[#allocation1 + $0x18] sm:$0xff pattern:$0x73625140]
  %v251 = vld.sshfl [vmem:[#allocation1 + $0x20] sm:$0xff pattern:$0x73625140]
  %v252 = vld.sshfl [vmem:[#allocation1 + $0x28] sm:$0xff pattern:$0x73625140]
  %v253 = vld.sshfl [vmem:[#allocation1 + $0x30] sm:$0xff pattern:$0x73625140]
  %v254 = vld.sshfl [vmem:[#allocation1 + $0x38] sm:$0xff pattern:$0x73625140]
  %256 = vst [vmem:[#allocation1] ss:$4 sm:$0xff] %v23
  %258 = vst [vmem:[%s245] ss:$4 sm:$0xff] %v24
  %v259 = vld.sshfl [vmem:[#allocation1] sm:$0xff pattern:$0x73625140]
  %v260 = vld.sshfl [vmem:[#allocation1 + $0x8] sm:$0xff pattern:$0x73625140]
  %v261 = vld.sshfl [vmem:[#allocation1 + $0x10] sm:$0xff pattern:$0x73625140]
  %v262 = vld.sshfl [vmem:[#allocation1 + $0x18] sm:$0xff pattern:$0x73625140]
  %v263 = vld.sshfl [vmem:[#allocation1 + $0x20] sm:$0xff pattern:$0x73625140]
  %v264 = vld.sshfl [vmem:[#allocation1 + $0x28] sm:$0xff pattern:$0x73625140]
  %v494 = vunpack.c.l.b16 %v26
  %v495 = vunpack.c.l.b16 %v27
  %v496 = vunpack.c.l.b16 %v28
  %v497 = vunpack.c.l.b16 %v29
  %v498 = vunpack.c.l.b16 %v30
  %v499 = vunpack.c.l.b16 %v31
  %v500 = vunpack.c.l.b16 %v32
  %v501 = vunpack.c.l.b16 %v33
  %v502 = vunpack.c.l.b16 %v34
  %v503 = vunpack.c.l.b16 %v35
  %v504 = vunpack.c.l.b16 %v36
  %v505 = vunpack.c.l.b16 %v37
  %v506 = vunpack.c.l.b16 %v38
  %v507 = vunpack.c.l.b16 %v39
  %v508 = vunpack.c.l.b16 %v40
  %v509 = vunpack.c.l.b16 %v41
  %v510 = vunpack.c.l.b16 %v42
  %v511 = vunpack.c.l.b16 %v43
  %v512 = vunpack.c.l.b16 %v44
  %v513 = vunpack.c.l.b16 %v45
  %v514 = vunpack.c.l.b16 %v46
  %v515 = vunpack.c.l.b16 %v47
  %v516 = vunpack.c.l.b16 %v48
  %v517 = vunpack.c.l.b16 %v49
  %v518 = vunpack.c.l.b16 %v50
  %v519 = vunpack.c.l.b16 %v51
  %v520 = vunpack.c.l.b16 %v52
  %v521 = vunpack.c.l.b16 %v53
  %v522 = vunpack.c.l.b16 %v54
  %v523 = vunpack.c.l.b16 %v55
  %v524 = vunpack.c.l.b16 %v56
  %v525 = vunpack.c.l.b16 %v57
  %v526 = vunpack.c.l.b16 %v58
  %v527 = vunpack.c.l.b16 %v59
  %v528 = vunpack.c.l.b16 %v60
  %v529 = vunpack.c.l.b16 %v61
  %v530 = vunpack.c.l.b16 %v62
  %v531 = vunpack.c.l.b16 %v63
  %v532 = vunpack.c.l.b16 %v64
  %v533 = vunpack.c.l.b16 %v65
  %v534 = vunpack.c.l.b16 %v66
  %v535 = vunpack.c.l.b16 %v67
  %v536 = vunpack.c.l.b16 %v68
  %v537 = vunpack.c.l.b16 %v69
  %v538 = vunpack.c.l.b16 %v70
  %v539 = vunpack.c.l.b16 %v71
  %v540 = vunpack.c.l.b16 %v72
  %v541 = vunpack.c.l.b16 %v73
  %v542 = vunpack.c.l.b16 %v74
  %v543 = vunpack.c.l.b16 %v75
  %v544 = vunpack.c.l.b16 %v76
  %v545 = vunpack.c.l.b16 %v77
  %v546 = vunpack.c.l.b16 %v78
  %v547 = vunpack.c.l.b16 %v79
  %v548 = vunpack.c.l.b16 %v80
  %v549 = vunpack.c.l.b16 %v81
  %v550 = vunpack.c.l.b16 %v82
  %v551 = vunpack.c.l.b16 %v83
  %v552 = vunpack.c.l.b16 %v84
  %v553 = vunpack.c.l.b16 %v85
  %v554 = vunpack.c.l.b16 %v86
  %v555 = vunpack.c.l.b16 %v87
  %v556 = vunpack.c.l.b16 %v88
  %v557 = vunpack.c.l.b16 %v89
  %v558 = vunpack.c.l.b16 %v90
  %v559 = vunpack.c.l.b16 %v91
  %v560 = vunpack.c.l.b16 %v92
  %v561 = vunpack.c.l.b16 %v93
  %v562 = vunpack.c.l.b16 %v94
  %v563 = vunpack.c.l.b16 %v95
  %v564 = vunpack.c.l.b16 %v96
  %v565 = vunpack.c.l.b16 %v97
  %v566 = vunpack.c.l.b16 %v98
  %v567 = vunpack.c.l.b16 %v99
  %v568 = vunpack.c.l.b16 %v100
  %v569 = vunpack.c.l.b16 %v101
  %v570 = vunpack.c.l.b16 %v102
  %v571 = vunpack.c.l.b16 %v103
  %v572 = vunpack.c.l.b16 %v104
  %v573 = vunpack.c.l.b16 %v105
  %v574 = vunpack.c.l.b16 %v106
  %v575 = vunpack.c.l.b16 %v107
  %v576 = vunpack.c.l.b16 %v108
  %v577 = vunpack.c.l.b16 %v109
  %v578 = vunpack.c.l.b16 %v110
  %v579 = vunpack.c.l.b16 %v111
  %v580 = vunpack.c.l.b16 %v112
  %v581 = vunpack.c.l.b16 %v113
  %v582 = vunpack.c.l.b16 %v114
  %v583 = vunpack.c.l.b16 %v115
  %v584 = vunpack.c.l.b16 %v116
  %v585 = vunpack.c.l.b16 %v117
  %v586 = vunpack.c.l.b16 %v118
  %v587 = vunpack.c.l.b16 %v119
  %v588 = vunpack.c.l.b16 %v120
  %v589 = vunpack.c.l.b16 %v121
  %v590 = vunpack.c.l.b16 %v122
  %v591 = vunpack.c.l.b16 %v123
  %v592 = vunpack.c.l.b16 %v124
  %v593 = vunpack.c.l.b16 %v125
  %v594 = vunpack.c.l.b16 %v126
  %v595 = vunpack.c.l.b16 %v127
  %v596 = vunpack.c.l.b16 %v128
  %v597 = vunpack.c.l.b16 %v129
  %v598 = vunpack.c.l.b16 %v130
  %v599 = vunpack.c.l.b16 %v131
  %v600 = vunpack.c.l.b16 %v132
  %v601 = vunpack.c.l.b16 %v133
  %v602 = vunpack.c.l.b16 %v134
  %v603 = vunpack.c.l.b16 %v135
  %v604 = vunpack.c.l.b16 %v136
  %v605 = vunpack.c.l.b16 %v137
  %v606 = vunpack.c.l.b16 %v138
  %v607 = vunpack.c.l.b16 %v139
  %v608 = vunpack.c.l.b16 %v140
  %v609 = vunpack.c.l.b16 %v141
  %v610 = vunpack.c.l.b16 %v142
  %v611 = vunpack.c.l.b16 %v143
  %v612 = vunpack.c.l.b16 %v144
  %v613 = vunpack.c.l.b16 %v145
  %v614 = vunpack.c.l.b16 %v146
  %v615 = vunpack.c.l.b16 %v147
  %v616 = vunpack.c.l.b16 %v148
  %v617 = vunpack.c.l.b16 %v149
  %v618 = vunpack.c.l.b16 %v150
  %v619 = vunpack.c.l.b16 %v151
  %v620 = vunpack.c.l.b16 %v152
  %v621 = vunpack.c.l.b16 %v153
  %v622 = vunpack.c.l.b16 %v154
  %v623 = vunpack.c.l.b16 %v155
  %v624 = vunpack.c.l.b16 %v156
  %v625 = vunpack.c.l.b16 %v157
  %v626 = vunpack.c.l.b16 %v158
  %v627 = vunpack.c.l.b16 %v159
  %v628 = vunpack.c.l.b16 %v160
  %v629 = vunpack.c.l.b16 %v161
  %v630 = vunpack.c.l.b16 %v162
  %v631 = vunpack.c.l.b16 %v163
  %v632 = vunpack.c.l.b16 %v164
  %v633 = vunpack.c.l.b16 %v165
  %v634 = vunpack.c.l.b16 %v166
  %v635 = vunpack.c.l.b16 %v167
  %v636 = vunpack.c.l.b16 %v168
  %v637 = vunpack.c.l.b16 %v169
  %v638 = vunpack.c.l.b16 %v170
  %v639 = vunpack.c.l.b16 %v171
  %v640 = vunpack.c.l.b16 %v172
  %v641 = vunpack.c.l.b16 %v173
  %v642 = vunpack.c.l.b16 %v174
  %v643 = vunpack.c.l.b16 %v175
  %v644 = vunpack.c.l.b16 %v176
  %v645 = vunpack.c.l.b16 %v177
  %v646 = vunpack.c.l.b16 %v178
  %v647 = vunpack.c.l.b16 %v179
  %v648 = vunpack.c.l.b16 %v180
  %v649 = vunpack.c.l.b16 %v181
  %v650 = vunpack.c.l.b16 %v182
  %v651 = vunpack.c.l.b16 %v183
  %v652 = vunpack.c.l.b16 %v184
  %v653 = vunpack.c.l.b16 %v185
  %v654 = vunpack.c.l.b16 %v186
  %v655 = vunpack.c.l.b16 %v187
  %v656 = vunpack.c.l.b16 %v188
  %v657 = vunpack.c.l.b16 %v189
  %v658 = vunpack.c.l.b16 %v190
  %v659 = vunpack.c.l.b16 %v191
  %v660 = vunpack.c.l.b16 %v192
  %v661 = vunpack.c.l.b16 %v193
  %v662 = vunpack.c.l.b16 %v194
  %v663 = vunpack.c.l.b16 %v195
  %v664 = vunpack.c.l.b16 %v196
  %v665 = vunpack.c.l.b16 %v197
  %v666 = vunpack.c.l.b16 %v198
  %v667 = vunpack.c.l.b16 %v199
  %v668 = vunpack.c.l.b16 %v200
  %v669 = vunpack.c.l.b16 %v201
  %v670 = vunpack.c.l.b16 %v202
  %v671 = vunpack.c.l.b16 %v203
  %v672 = vunpack.c.l.b16 %v204
  %v673 = vunpack.c.l.b16 %v205
  %v674 = vunpack.c.l.b16 %v206
  %v675 = vunpack.c.l.b16 %v207
  %v676 = vunpack.c.l.b16 %v208
  %v677 = vunpack.c.l.b16 %v209
  %v678 = vunpack.c.l.b16 %v210
  %v679 = vunpack.c.l.b16 %v211
  %v680 = vunpack.c.l.b16 %v212
  %v681 = vunpack.c.l.b16 %v213
  %v682 = vunpack.c.l.b16 %v214
  %v683 = vunpack.c.l.b16 %v215
  %v684 = vunpack.c.l.b16 %v216
  %v685 = vunpack.c.l.b16 %v217
  %v686 = vunpack.c.l.b16 %v218
  %v687 = vunpack.c.l.b16 %v219
  %v688 = vunpack.c.l.b16 %v220
  %v689 = vunpack.c.l.b16 %v221
  %v690 = vunpack.c.l.b16 %v222
  %v691 = vunpack.c.l.b16 %v223
  %v692 = vunpack.c.l.b16 %v224
  %v693 = vunpack.c.l.b16 %v225
  %v694 = vunpack.c.l.b16 %v226
  %v695 = vunpack.c.l.b16 %v227
  %v696 = vunpack.c.l.b16 %v228
  %v697 = vunpack.c.l.b16 %v229
  %v698 = vunpack.c.l.b16 %v230
  %v699 = vunpack.c.l.b16 %v231
  %v700 = vunpack.c.l.b16 %v232
  %v701 = vunpack.c.l.b16 %v233
  %v702 = vunpack.c.l.b16 %v234
  %v703 = vunpack.c.l.b16 %v235
  %v704 = vunpack.c.l.b16 %v236
  %v705 = vunpack.c.l.b16 %v237
  %v706 = vunpack.c.l.b16 %v238
  %v707 = vunpack.c.l.b16 %v239
  %v708 = vunpack.c.l.b16 %v240
  %v709 = vunpack.c.l.b16 %v241
  %v710 = vpack.c.b16 %v495, %v494
  %v711 = vpack.c.b16 %v497, %v496
  %v712 = vpack.c.b16 %v499, %v498
  %v713 = vpack.c.b16 %v501, %v500
  %v714 = vpack.c.b16 %v503, %v502
  %v715 = vpack.c.b16 %v505, %v504
  %v716 = vpack.c.b16 %v507, %v506
  %v717 = vpack.c.b16 %v509, %v508
  %v718 = vpack.c.b16 %v511, %v510
  %v719 = vpack.c.b16 %v513, %v512
  %v720 = vpack.c.b16 %v515, %v514
  %v721 = vpack.c.b16 %v517, %v516
  %v722 = vpack.c.b16 %v519, %v518
  %v723 = vpack.c.b16 %v521, %v520
  %v724 = vpack.c.b16 %v523, %v522
  %v725 = vpack.c.b16 %v525, %v524
  %v726 = vpack.c.b16 %v527, %v526
  %v727 = vpack.c.b16 %v529, %v528
  %v728 = vpack.c.b16 %v531, %v530
  %v729 = vpack.c.b16 %v533, %v532
  %v730 = vpack.c.b16 %v535, %v534
  %v731 = vpack.c.b16 %v537, %v536
  %v732 = vpack.c.b16 %v539, %v538
  %v733 = vpack.c.b16 %v541, %v540
  %v734 = vpack.c.b16 %v543, %v542
  %v735 = vpack.c.b16 %v545, %v544
  %v736 = vpack.c.b16 %v547, %v546
  %v737 = vpack.c.b16 %v549, %v548
  %v738 = vpack.c.b16 %v551, %v550
  %v739 = vpack.c.b16 %v553, %v552
  %v740 = vpack.c.b16 %v555, %v554
  %v741 = vpack.c.b16 %v557, %v556
  %v742 = vpack.c.b16 %v559, %v558
  %v743 = vpack.c.b16 %v561, %v560
  %v744 = vpack.c.b16 %v563, %v562
  %v745 = vpack.c.b16 %v565, %v564
  %v746 = vpack.c.b16 %v567, %v566
  %v747 = vpack.c.b16 %v569, %v568
  %v748 = vpack.c.b16 %v571, %v570
  %v749 = vpack.c.b16 %v573, %v572
  %v750 = vpack.c.b16 %v575, %v574
  %v751 = vpack.c.b16 %v577, %v576
  %v752 = vpack.c.b16 %v579, %v578
  %v753 = vpack.c.b16 %v581, %v580
  %v754 = vpack.c.b16 %v583, %v582
  %v755 = vpack.c.b16 %v585, %v584
  %v756 = vpack.c.b16 %v587, %v586
  %v757 = vpack.c.b16 %v589, %v588
  %v758 = vpack.c.b16 %v591, %v590
  %v759 = vpack.c.b16 %v593, %v592
  %v760 = vpack.c.b16 %v595, %v594
  %v761 = vpack.c.b16 %v597, %v596
  %v762 = vpack.c.b16 %v599, %v598
  %v763 = vpack.c.b16 %v601, %v600
  %v764 = vpack.c.b16 %v603, %v602
  %v765 = vpack.c.b16 %v605, %v604
  %v766 = vpack.c.b16 %v607, %v606
  %v767 = vpack.c.b16 %v609, %v608
  %v768 = vpack.c.b16 %v611, %v610
  %v769 = vpack.c.b16 %v613, %v612
  %v770 = vpack.c.b16 %v615, %v614
  %v771 = vpack.c.b16 %v617, %v616
  %v772 = vpack.c.b16 %v619, %v618
  %v773 = vpack.c.b16 %v621, %v620
  %v774 = vpack.c.b16 %v623, %v622
  %v775 = vpack.c.b16 %v625, %v624
  %v776 = vpack.c.b16 %v627, %v626
  %v777 = vpack.c.b16 %v629, %v628
  %v778 = vpack.c.b16 %v631, %v630
  %v779 = vpack.c.b16 %v633, %v632
  %v780 = vpack.c.b16 %v635, %v634
  %v781 = vpack.c.b16 %v637, %v636
  %v782 = vpack.c.b16 %v639, %v638
  %v783 = vpack.c.b16 %v641, %v640
  %v784 = vpack.c.b16 %v643, %v642
  %v785 = vpack.c.b16 %v645, %v644
  %v786 = vpack.c.b16 %v647, %v646
  %v787 = vpack.c.b16 %v649, %v648
  %v788 = vpack.c.b16 %v651, %v650
  %v789 = vpack.c.b16 %v653, %v652
  %v790 = vpack.c.b16 %v655, %v654
  %v791 = vpack.c.b16 %v657, %v656
  %v792 = vpack.c.b16 %v659, %v658
  %v793 = vpack.c.b16 %v661, %v660
  %v794 = vpack.c.b16 %v663, %v662
  %v795 = vpack.c.b16 %v665, %v664
  %v796 = vpack.c.b16 %v667, %v666
  %v797 = vpack.c.b16 %v669, %v668
  %v798 = vpack.c.b16 %v671, %v670
  %v799 = vpack.c.b16 %v673, %v672
  %v800 = vpack.c.b16 %v675, %v674
  %v801 = vpack.c.b16 %v677, %v676
  %v802 = vpack.c.b16 %v679, %v678
  %v803 = vpack.c.b16 %v681, %v680
  %v804 = vpack.c.b16 %v683, %v682
  %v805 = vpack.c.b16 %v685, %v684
  %v806 = vpack.c.b16 %v687, %v686
  %v807 = vpack.c.b16 %v689, %v688
  %v808 = vpack.c.b16 %v691, %v690
  %v809 = vpack.c.b16 %v693, %v692
  %v810 = vpack.c.b16 %v695, %v694
  %v811 = vpack.c.b16 %v697, %v696
  %v812 = vpack.c.b16 %v699, %v698
  %v813 = vpack.c.b16 %v701, %v700
  %v814 = vpack.c.b16 %v703, %v702
  %v815 = vpack.c.b16 %v705, %v704
  %v816 = vpack.c.b16 %v707, %v706
  %v817 = vpack.c.b16 %v709, %v708
  %vm926 = vcmask 523264
  %v927 = vsel %vm926, %v264, 0
  %929 = vmatpush.bf16.msra.mxu0 %v717
  %930 = vmatpush.bf16.msra.mxu0 %v716
  %931 = vmatpush.bf16.msra.mxu0 %v715
  %932 = vmatpush.bf16.msra.mxu0 %v714
  %933 = vmatpush.bf16.msra.mxu0 %v713
  %934 = vmatpush.bf16.msra.mxu0 %v712
  %935 = vmatpush.bf16.msra.mxu0 %v711
  %936 = vmatpush.bf16.msra.mxu0 %v710
  %937 = vmatmul.bf16.gmra.mxu0 %v247
  %v938 = vpop.f32.mrf.mxu0
  %v939 = vadd.f32 0.0, %v938
  %v940 = vpop.f32.mrf.mxu0
  %941 = vdwg.mxu0
  %942 = vmatpush.bf16.msra.mxu0 %v725
  %943 = vmatpush.bf16.msra.mxu0 %v724
  %944 = vmatpush.bf16.msra.mxu0 %v723
  %945 = vmatpush.bf16.msra.mxu0 %v722
  %946 = vmatpush.bf16.msra.mxu0 %v721
  %947 = vmatpush.bf16.msra.mxu0 %v720
  %948 = vmatpush.bf16.msra.mxu0 %v719
  %949 = vmatpush.bf16.msra.mxu0 %v718
  %950 = vmatmul.bf16.gmra.mxu0 %v248
  %v951 = vpop.f32.mrf.mxu0
  %v952 = vadd.f32 %v939, %v951
  %v953 = vpop.f32.mrf.mxu0
  %954 = vdwg.mxu0
  %955 = vmatpush.bf16.msra.mxu0 %v733
  %956 = vmatpush.bf16.msra.mxu0 %v732
  %957 = vmatpush.bf16.msra.mxu0 %v731
  %958 = vmatpush.bf16.msra.mxu0 %v730
  %959 = vmatpush.bf16.msra.mxu0 %v729
  %960 = vmatpush.bf16.msra.mxu0 %v728
  %961 = vmatpush.bf16.msra.mxu0 %v727
  %962 = vmatpush.bf16.msra.mxu0 %v726
  %963 = vmatmul.bf16.gmra.mxu0 %v249
  %v964 = vpop.f32.mrf.mxu0
  %v965 = vadd.f32 %v952, %v964
  %v966 = vpop.f32.mrf.mxu0
  %967 = vdwg.mxu0
  %968 = vmatpush.bf16.msra.mxu0 %v741
  %969 = vmatpush.bf16.msra.mxu0 %v740
  %970 = vmatpush.bf16.msra.mxu0 %v739
  %971 = vmatpush.bf16.msra.mxu0 %v738
  %972 = vmatpush.bf16.msra.mxu0 %v737
  %973 = vmatpush.bf16.msra.mxu0 %v736
  %974 = vmatpush.bf16.msra.mxu0 %v735
  %975 = vmatpush.bf16.msra.mxu0 %v734
  %976 = vmatmul.bf16.gmra.mxu0 %v250
  %v977 = vpop.f32.mrf.mxu0
  %v978 = vadd.f32 %v965, %v977
  %v979 = vpop.f32.mrf.mxu0
  %980 = vdwg.mxu0
  %981 = vmatpush.bf16.msra.mxu0 %v749
  %982 = vmatpush.bf16.msra.mxu0 %v748
  %983 = vmatpush.bf16.msra.mxu0 %v747
  %984 = vmatpush.bf16.msra.mxu0 %v746
  %985 = vmatpush.bf16.msra.mxu0 %v745
  %986 = vmatpush.bf16.msra.mxu0 %v744
  %987 = vmatpush.bf16.msra.mxu0 %v743
  %988 = vmatpush.bf16.msra.mxu0 %v742
  %989 = vmatmul.bf16.gmra.mxu0 %v251
  %v990 = vpop.f32.mrf.mxu0
  %v991 = vadd.f32 %v978, %v990
  %v992 = vpop.f32.mrf.mxu0
  %993 = vdwg.mxu0
  %994 = vmatpush.bf16.msra.mxu0 %v757
  %995 = vmatpush.bf16.msra.mxu0 %v756
  %996 = vmatpush.bf16.msra.mxu0 %v755
  %997 = vmatpush.bf16.msra.mxu0 %v754
  %998 = vmatpush.bf16.msra.mxu0 %v753
  %999 = vmatpush.bf16.msra.mxu0 %v752
  %1000 = vmatpush.bf16.msra.mxu0 %v751
  %1001 = vmatpush.bf16.msra.mxu0 %v750
  %1002 = vmatmul.bf16.gmra.mxu0 %v252
  %v1003 = vpop.f32.mrf.mxu0
  %v1004 = vadd.f32 %v991, %v1003
  %v1005 = vpop.f32.mrf.mxu0
  %1006 = vdwg.mxu0
  %1007 = vmatpush.bf16.msra.mxu0 %v765
  %1008 = vmatpush.bf16.msra.mxu0 %v764
  %1009 = vmatpush.bf16.msra.mxu0 %v763
  %1010 = vmatpush.bf16.msra.mxu0 %v762
  %1011 = vmatpush.bf16.msra.mxu0 %v761
  %1012 = vmatpush.bf16.msra.mxu0 %v760
  %1013 = vmatpush.bf16.msra.mxu0 %v759
  %1014 = vmatpush.bf16.msra.mxu0 %v758
  %1015 = vmatmul.bf16.gmra.mxu0 %v253
  %v1016 = vpop.f32.mrf.mxu0
  %v1017 = vadd.f32 %v1004, %v1016
  %v1018 = vpop.f32.mrf.mxu0
  %1019 = vdwg.mxu0
  %1020 = vmatpush.bf16.msra.mxu0 %v773
  %1021 = vmatpush.bf16.msra.mxu0 %v772
  %1022 = vmatpush.bf16.msra.mxu0 %v771
  %1023 = vmatpush.bf16.msra.mxu0 %v770
  %1024 = vmatpush.bf16.msra.mxu0 %v769
  %1025 = vmatpush.bf16.msra.mxu0 %v768
  %1026 = vmatpush.bf16.msra.mxu0 %v767
  %1027 = vmatpush.bf16.msra.mxu0 %v766
  %1028 = vmatmul.bf16.gmra.mxu0 %v254
  %v1029 = vpop.f32.mrf.mxu0
  %v1030 = vadd.f32 %v1017, %v1029
  %v1031 = vpop.f32.mrf.mxu0
  %1032 = vdwg.mxu0
  %1033 = vmatpush.bf16.msra.mxu0 %v781
  %1034 = vmatpush.bf16.msra.mxu0 %v780
  %1035 = vmatpush.bf16.msra.mxu0 %v779
  %1036 = vmatpush.bf16.msra.mxu0 %v778
  %1037 = vmatpush.bf16.msra.mxu0 %v777
  %1038 = vmatpush.bf16.msra.mxu0 %v776
  %1039 = vmatpush.bf16.msra.mxu0 %v775
  %1040 = vmatpush.bf16.msra.mxu0 %v774
  %1041 = vmatmul.bf16.gmra.mxu0 %v259
  %v1042 = vpop.f32.mrf.mxu0
  %v1043 = vadd.f32 %v1030, %v1042
  %v1044 = vpop.f32.mrf.mxu0
  %1045 = vdwg.mxu0
  %1046 = vmatpush.bf16.msra.mxu0 %v789
  %1047 = vmatpush.bf16.msra.mxu0 %v788
  %1048 = vmatpush.bf16.msra.mxu0 %v787
  %1049 = vmatpush.bf16.msra.mxu0 %v786
  %1050 = vmatpush.bf16.msra.mxu0 %v785
  %1051 = vmatpush.bf16.msra.mxu0 %v784
  %1052 = vmatpush.bf16.msra.mxu0 %v783
  %1053 = vmatpush.bf16.msra.mxu0 %v782
  %1054 = vmatmul.bf16.gmra.mxu0 %v260
  %v1055 = vpop.f32.mrf.mxu0
  %v1056 = vadd.f32 %v1043, %v1055
  %v1057 = vpop.f32.mrf.mxu0
  %1058 = vdwg.mxu0
  %1059 = vmatpush.bf16.msra.mxu0 %v797
  %1060 = vmatpush.bf16.msra.mxu0 %v796
  %1061 = vmatpush.bf16.msra.mxu0 %v795
  %1062 = vmatpush.bf16.msra.mxu0 %v794
  %1063 = vmatpush.bf16.msra.mxu0 %v793
  %1064 = vmatpush.bf16.msra.mxu0 %v792
  %1065 = vmatpush.bf16.msra.mxu0 %v791
  %1066 = vmatpush.bf16.msra.mxu0 %v790
  %1067 = vmatmul.bf16.gmra.mxu0 %v261
  %v1068 = vpop.f32.mrf.mxu0
  %v1069 = vadd.f32 %v1056, %v1068
  %v1070 = vpop.f32.mrf.mxu0
  %1071 = vdwg.mxu0
  %1072 = vmatpush.bf16.msra.mxu0 %v805
  %1073 = vmatpush.bf16.msra.mxu0 %v804
  %1074 = vmatpush.bf16.msra.mxu0 %v803
  %1075 = vmatpush.bf16.msra.mxu0 %v802
  %1076 = vmatpush.bf16.msra.mxu0 %v801
  %1077 = vmatpush.bf16.msra.mxu0 %v800
  %1078 = vmatpush.bf16.msra.mxu0 %v799
  %1079 = vmatpush.bf16.msra.mxu0 %v798
  %1080 = vmatmul.bf16.gmra.mxu0 %v262
  %v1081 = vpop.f32.mrf.mxu0
  %v1082 = vadd.f32 %v1069, %v1081
  %v1083 = vpop.f32.mrf.mxu0
  %1084 = vdwg.mxu0
  %1085 = vmatpush.bf16.msra.mxu0 %v813
  %1086 = vmatpush.bf16.msra.mxu0 %v812
  %1087 = vmatpush.bf16.msra.mxu0 %v811
  %1088 = vmatpush.bf16.msra.mxu0 %v810
  %1089 = vmatpush.bf16.msra.mxu0 %v809
  %1090 = vmatpush.bf16.msra.mxu0 %v808
  %1091 = vmatpush.bf16.msra.mxu0 %v807
  %1092 = vmatpush.bf16.msra.mxu0 %v806
  %1093 = vmatmul.bf16.gmra.mxu0 %v263
  %v1094 = vpop.f32.mrf.mxu0
  %v1095 = vadd.f32 %v1082, %v1094
  %v1096 = vpop.f32.mrf.mxu0
  %1097 = vdwg.mxu0
  %1098 = vmatpush.bf16.msra.mxu0 0
  %1099 = vmatpush.bf16.msra.mxu0 0
  %1100 = vmatpush.bf16.msra.mxu0 0
  %1101 = vmatpush.bf16.msra.mxu0 0
  %1102 = vmatpush.bf16.msra.mxu0 %v817
  %1103 = vmatpush.bf16.msra.mxu0 %v816
  %1104 = vmatpush.bf16.msra.mxu0 %v815
  %1105 = vmatpush.bf16.msra.mxu0 %v814
  %1106 = vmatmul.bf16.gmra.mxu0 %v927
  %v1107 = vpop.f32.mrf.mxu0
  %v1108 = vadd.f32 %v1095, %v1107
  %v1109 = vpop.f32.mrf.mxu0
  %1110 = vdwg.mxu0
  %v1111 = vadd.f32 %v25, %v1108
  %vm1112 = vcmask 388096
  %1113 = vst.msk [vmem:[#allocation2] sm:$0xf] %vm1112, %v1111
  // Predicated region
  $region18: #{_lambda_.13} parent=0 // pred_check
    %p1114 = pneg %p15
  $region19: #{_lambda_.13} parent=0 // pred_check_branch
    %1116 = sbr.rel (%p1114) target = $region21
  $region20: #{_lambda_.13} parent=0 // pred_region
    %v1117 = vld [vmem:[#allocation2] sm:$0xf]
    %v1118 = vld [vmem:[%s2] sm:$0x1]
    %v1120 = vperm.slane %v1118, 0
    %v1122 = vadd.f32 %v1117, %v1120
    %v1123 = vpack.c.bf16 %v1122, %v1122
    %vm1124 = vcmask 386048
    %1125 = vst.msk [vmem:[%s3] sm:$0x3] %vm1124, %v1123
  $region21: #{_lambda_.13} parent=0 // pred_fallthru
    _
  // Predicated region
  $region22: #{_lambda_.13} parent=0 // pred_check
    _
  $region23: #{_lambda_.13} parent=0 // pred_check_branch
    %1127 = sbr.rel (0) target = $region25
  $region24: #{_lambda_.13} parent=0 // pred_region
    _
  $region25: #{_lambda_.13} parent=0 // pred_fallthru
    _
  // Predicated region
  $region26: #{_lambda_.13} parent=0 // pred_check
    _
  $region27: #{_lambda_.13} parent=0 // pred_check_branch
    %1129 = sbr.rel (0) target = $region29
  $region28: #{_lambda_.13} parent=0 // pred_region
    _
  $region29: #{_lambda_.13} parent=0 // pred_fallthru
    _

// kernel: _lambda_.11
$region0: #{_lambda_.11}
  #allocation0 [shape = 'u32[]', space=smem, size = 0x4, offset = 0x4, fixed_abs, tag = 'smem constant byte address 0x4 - core index']
  #allocation1 [shape = 'u32[72,128]{1,0:T(1,128)}', space=vmem, size = 0x9000, scoped, tag = 'internal scratch']
  #allocation2 [shape = 'f32[4,48]{1,0:T(4,128)}', space=vmem, size = 0x800, scoped, tag = 'scratch operand']
  %s0 = inlined_call_operand.vmem [shape: bf16[4,1536], index: 0, kind: input, shape index: {}]
  %s1 = inlined_call_operand.vmem [shape: bf16[1536,48], index: 1, kind: input, shape index: {}]
  %s2 = inlined_call_operand.vmem [shape: f32[1,48], index: 2, kind: input, shape index: {}]
  %s3 = inlined_call_operand.vmem [shape: bf16[4,48], index: 3, kind: output, shape index: {}]
  %s4 = sld [smem:[#allocation0]]
  $region53: #{_lambda_.11} parent=0
    _
  %s6 = ssub.s32 1, %s4
  %s7 = scalar_select 0, %s6, %s4
  loop: start=0, step=1, limit=4
  $region2: #{_lambda_.11} parent=0 // loop_pre_header
    _
  $region3: #{_lambda_.11} parent=0 // loop_header
    %s9 = sphi 0, %s13
    %p10 = scmp.ge.s32.totalorder %s9, 4
    %s16 = sphi 0, %s35
    %s17 = sphi 0, %s31
    %s18 = sphi 0, %s27
    %s19 = sphi 0, %s16
    %s20 = sphi 0, %s17
    %s21 = sphi 0, %s18
    %s22 = sphi 0, %s19
    %s23 = sphi 0, %s20
    %s24 = sphi 0, %s21
    %s40 = sphi 0, %s42
    %s43 = sphi 0, %s40
    %s44 = sphi 0, %s43
    %s60 = sphi 0, %s44
    %s68 = sphi 0, %s70
    %s71 = sphi 0, %s68
    %s72 = sphi 0, %s71
    %s88 = sphi 0, %s72
    %s94 = sphi 0, %s96
    %s97 = sphi 0, %s94
    %s98 = sphi 0, %s97
    %s114 = sphi 0, %s98
    %s122 = sphi 0, %s124
    %s125 = sphi 0, %s122
    %s126 = sphi 0, %s125
    %s142 = sphi 0, %s126
  $region4: #{_lambda_.11} parent=0 // loop_header_branch
    %12 = sbr.rel (%p10) target = $region8
  $region5: #{_lambda_.11} parent=0 // loop_body
    %s14 = ssub.s32 %s9, 1
    %s15 = ssub.s32 %s9, 2
    %s25 = sadd.s32 1, %s18
    %p26 = scmp.ge.s32.totalorder %s25, 2
    %s27 = scalar_select %p26, 0, %s25
    %s28 = sadd.s32 1, %s17
    %s29 = scalar_select %p26, %s28, %s17
    %p30 = scmp.ge.s32.totalorder %s29, 1
    %s31 = scalar_select %p30, 0, %s29
    %s32 = sadd.s32 1, %s16
    %s33 = scalar_select %p30, %s32, %s16
    %p34 = scmp.ge.s32.totalorder %s33, 1
    %s35 = scalar_select %p34, 0, %s33
    %s36 = ssub.s32 %s16, %s35
    %s37 = ssub.s32 %s18, %s27
    %s38 = sor.u32 %s36, %s37
    %p39 = scmp.eq.s32.totalorder %s38, 0
    %s41 = sadd.s32 %s40, 1
    %s42 = scalar_select %p39, %s40, %s41
    %p45 = pneg %p39
    %p46 = scmp.eq.s32.totalorder %s9, 1
    %p47 = por %p45, %p46
    %p48 = scmp.ne.s32.totalorder %s40, %s43
    %p49 = scmp.eq.s32.totalorder %s9, 0
    %p50 = por %p48, %p49
    %p51 = scmp.ne.s32.totalorder %s40, %s43
    %p52 = scmp.eq.s32.totalorder %s14, 1
    %p53 = por %p51, %p52
    %p54 = scmp.ne.s32.totalorder %s43, %s44
    %p55 = scmp.eq.s32.totalorder %s14, 0
    %p56 = por %p54, %p55
    %p57 = scmp.ne.s32.totalorder %s43, %s44
    %p58 = scmp.eq.s32.totalorder %s15, 1
    %p59 = por %p57, %p58
    %p61 = scmp.ne.s32.totalorder %s44, %s60
    %p62 = scmp.eq.s32.totalorder %s15, 0
    %p63 = por %p61, %p62
    %s64 = ssub.s32 %s18, %s27
    %s65 = ssub.s32 %s17, %s31
    %s66 = sor.u32 %s64, %s65
    %p67 = scmp.eq.s32.totalorder %s66, 0
    %s69 = sadd.s32 %s68, 1
    %s70 = scalar_select %p67, %s68, %s69
    %p73 = pneg %p67
    %p74 = scmp.eq.s32.totalorder %s9, 1
    %p75 = por %p73, %p74
    %p76 = scmp.ne.s32.totalorder %s68, %s71
    %p77 = scmp.eq.s32.totalorder %s9, 0
    %p78 = por %p76, %p77
    %p79 = scmp.ne.s32.totalorder %s68, %s71
    %p80 = scmp.eq.s32.totalorder %s14, 1
    %p81 = por %p79, %p80
    %p82 = scmp.ne.s32.totalorder %s71, %s72
    %p83 = scmp.eq.s32.totalorder %s14, 0
    %p84 = por %p82, %p83
    %p85 = scmp.ne.s32.totalorder %s71, %s72
    %p86 = scmp.eq.s32.totalorder %s15, 1
    %p87 = por %p85, %p86
    %p89 = scmp.ne.s32.totalorder %s72, %s88
    %p90 = scmp.eq.s32.totalorder %s15, 0
    %p91 = por %p89, %p90
    %s92 = ssub.s32 %s17, %s31
    %p93 = scmp.eq.s32.totalorder %s92, 0
    %s95 = sadd.s32 %s94, 1
    %s96 = scalar_select %p93, %s94, %s95
    %p99 = pneg %p93
    %p100 = scmp.eq.s32.totalorder %s9, 1
    %p101 = por %p99, %p100
    %p102 = scmp.ne.s32.totalorder %s94, %s97
    %p103 = scmp.eq.s32.totalorder %s9, 0
    %p104 = por %p102, %p103
    %p105 = scmp.ne.s32.totalorder %s94, %s97
    %p106 = scmp.eq.s32.totalorder %s14, 1
    %p107 = por %p105, %p106
    %p108 = scmp.ne.s32.totalorder %s97, %s98
    %p109 = scmp.eq.s32.totalorder %s14, 0
    %p110 = por %p108, %p109
    %p111 = scmp.ne.s32.totalorder %s97, %s98
    %p112 = scmp.eq.s32.totalorder %s15, 1
    %p113 = por %p111, %p112
    %p115 = scmp.ne.s32.totalorder %s98, %s114
    %p116 = scmp.eq.s32.totalorder %s15, 0
    %p117 = por %p115, %p116
    %s118 = ssub.s32 %s16, %s35
    %s119 = ssub.s32 %s17, %s31
    %s120 = sor.u32 %s118, %s119
    %p121 = scmp.eq.s32.totalorder %s120, 0
    %s123 = sadd.s32 %s122, 1
    %s124 = scalar_select %p121, %s122, %s123
    %p127 = pneg %p121
    %p128 = scmp.eq.s32.totalorder %s9, 1
    %p129 = por %p127, %p128
    %p130 = scmp.ne.s32.totalorder %s122, %s125
    %p131 = scmp.eq.s32.totalorder %s9, 0
    %p132 = por %p130, %p131
    %p133 = scmp.ne.s32.totalorder %s122, %s125
    %p134 = scmp.eq.s32.totalorder %s14, 1
    %p135 = por %p133, %p134
    %p136 = scmp.ne.s32.totalorder %s125, %s126
    %p137 = scmp.eq.s32.totalorder %s14, 0
    %p138 = por %p136, %p137
    %p139 = scmp.ne.s32.totalorder %s125, %s126
    %p140 = scmp.eq.s32.totalorder %s15, 1
    %p141 = por %p139, %p140
    %p143 = scmp.ne.s32.totalorder %s126, %s142
    %p144 = scmp.eq.s32.totalorder %s15, 0
    %p145 = por %p143, %p144
    %p146 = scmp.le.s32.totalorder 1, %s9
    %p147 = scmp.lt.s32.totalorder %s9, 3
    %p148 = pnand %p146, %p147
    %p149 = pneg %p148
    // Predicated region
    $region9: #{_lambda_.11} parent=5 // pred_check
      _
    $region10: #{_lambda_.11} parent=5 // pred_check_branch
      %151 = sbr.rel (%p148) target = $region12
    $region11: #{_lambda_.11} parent=5 // pred_region
      %s152 = ssub.s32 %s9, 1
      // Predicated region
      $region13: #{_lambda_.11} parent=11 // pred_check
        %p153 = pneg %p110
      $region14: #{_lambda_.11} parent=11 // pred_check_branch
        %155 = sbr.rel (%p153) target = $region16
      $region15: #{_lambda_.11} parent=11 // pred_region
        %p156 = scmp.lt.s32.totalorder %s20, 0
        %s157 = scalar_select %p156, %s20, 0
        %s158 = scalar_lea.vmem %s2, %s157
      $region16: #{_lambda_.11} parent=11 // pred_fallthru
        _
    $region12: #{_lambda_.11} parent=5 // pred_fallthru
      _
    %p159 = scmp.lt.s32.totalorder %s9, 2
    // Predicated region
    $region17: #{_lambda_.11} parent=5 // pred_check
      %p160 = pneg %p159
    $region18: #{_lambda_.11} parent=5 // pred_check_branch
      %162 = sbr.rel (%p160) target = $region20
    $region19: #{_lambda_.11} parent=5 // pred_region
      // Predicated region
      $region21: #{_lambda_.11} parent=19 // pred_check
        %p163 = pneg %p50
      $region22: #{_lambda_.11} parent=19 // pred_check_branch
        %165 = sbr.rel (%p163) target = $region24
      $region23: #{_lambda_.11} parent=19 // pred_region
        %s166 = smul.u32 6, %s18
        %p167 = scmp.lt.s32.totalorder %s16, 0
        %s168 = scalar_select %p167, %s16, 0
        %p169 = scmp.lt.s32.totalorder %s166, 11
        %s170 = scalar_select %p169, %s166, 11
        %s171 = smul.addr %s168, 12
        %s172 = sadd.s32 %s170, %s171
        %s173 = smul.addr %s172, 2
        %s174 = scalar_lea.vmem %s0, %s173
        %s175 = smul.u32 6, %s18
      $region24: #{_lambda_.11} parent=19 // pred_fallthru
        _
      // Predicated region
      $region25: #{_lambda_.11} parent=19 // pred_check
        %p176 = pneg %p78
      $region26: #{_lambda_.11} parent=19 // pred_check_branch
        %178 = sbr.rel (%p176) target = $region28
      $region27: #{_lambda_.11} parent=19 // pred_region
        %s179 = smul.u32 96, %s18
        %p180 = scmp.lt.s32.totalorder %s179, 191
        %s181 = scalar_select %p180, %s179, 191
        %p182 = scmp.lt.s32.totalorder %s17, 0
        %s183 = scalar_select %p182, %s17, 0
        %s184 = sadd.s32 %s183, %s181
        %s185 = smul.addr %s184, 4
        %s186 = scalar_lea.vmem %s1, %s185
        %s187 = smul.u32 96, %s18
      $region28: #{_lambda_.11} parent=19 // pred_fallthru
        _
    $region20: #{_lambda_.11} parent=5 // pred_fallthru
      _
    %p188 = scmp.le.s32.totalorder 1, %s9
    %p189 = scmp.lt.s32.totalorder %s9, 3
    %p190 = pnand %p188, %p189
    %p191 = pneg %p190
    // Predicated region
    $region29: #{_lambda_.11} parent=5 // pred_check
      _
    $region30: #{_lambda_.11} parent=5 // pred_check_branch
      %193 = sbr.rel (%p190) target = $region32
    $region31: #{_lambda_.11} parent=5 // pred_region
      %s194 = ssub.s32 %s9, 1
      %s195 = smul.u32 6, %s21
      %p196 = scmp.lt.s32.totalorder %s19, 0
      %s197 = scalar_select %p196, %s19, 0
      %p198 = scmp.lt.s32.totalorder %s195, 11
      %s199 = scalar_select %p198, %s195, 11
      %s200 = smul.addr %s197, 12
      %s201 = sadd.s32 %s199, %s200
      %s202 = smul.addr %s201, 2
      %s203 = scalar_lea.vmem %s0, %s202
      %p204 = pneg %p56
      %p205 = pneg %p53
      %s206 = smul.u32 96, %s21
      %p207 = scmp.lt.s32.totalorder %s206, 191
      %s208 = scalar_select %p207, %s206, 191
      %p209 = scmp.lt.s32.totalorder %s20, 0
      %s210 = scalar_select %p209, %s20, 0
      %s211 = sadd.s32 %s210, %s208
      %s212 = smul.addr %s211, 4
      %s213 = scalar_lea.vmem %s1, %s212
      %p214 = pneg %p84
      %p215 = pneg %p81
      %p216 = scmp.lt.s32.totalorder %s20, 0
      %s217 = scalar_select %p216, %s20, 0
      %s218 = scalar_lea.vmem %s2, %s217
      %p219 = pneg %p110
      %p220 = pneg %p107
      %p221 = pneg %p138
      %p222 = pneg %p135
      %p223 = scmp.lt.s32.totalorder %s19, 0
      %s224 = scalar_select %p223, %s19, 0
      %p225 = scmp.lt.s32.totalorder %s20, 0
      %s226 = scalar_select %p225, %s20, 0
      %s227 = sadd.s32 %s226, %s224
      %s228 = smul.addr %s227, 2
      %s229 = scalar_lea.vmem %s3, %s228
      %s230 = smul.u32 6, %s21
      %p231 = scmp.lt.s32.totalorder %s19, 0
      %s232 = scalar_select %p231, %s19, 0
      %p233 = scmp.lt.s32.totalorder %s230, 11
      %s234 = scalar_select %p233, %s230, 11
      %s235 = smul.addr %s232, 12
      %s236 = sadd.s32 %s234, %s235
      %s237 = smul.addr %s236, 2
      %s238 = scalar_lea.vmem %s0, %s237
      %s239 = smul.u32 6, %s21
      %s240 = smul.u32 96, %s21
      %p241 = scmp.lt.s32.totalorder %s240, 191
      %s242 = scalar_select %p241, %s240, 191
      %p243 = scmp.lt.s32.totalorder %s20, 0
      %s244 = scalar_select %p243, %s20, 0
      %s245 = sadd.s32 %s244, %s242
      %s246 = smul.addr %s245, 4
      %s247 = scalar_lea.vmem %s1, %s246
      %s248 = smul.u32 96, %s21
      %p249 = scmp.lt.s32.totalorder %s20, 0
      %s250 = scalar_select %p249, %s20, 0
      %s251 = scalar_lea.vmem %s2, %s250
      %p252 = scmp.lt.s32.totalorder %s19, 0
      %s253 = scalar_select %p252, %s19, 0
      %p254 = scmp.lt.s32.totalorder %s20, 0
      %s255 = scalar_select %p254, %s20, 0
      %s256 = sadd.s32 %s255, %s253
      %s257 = smul.addr %s256, 2
      %s258 = scalar_lea.vmem %s3, %s257
      %p259 = scmp.eq.s32.totalorder %s21, 0
      // Predicated region
      $region33: #{_lambda_.11} parent=31 // pred_check
        %p260 = pneg %p259
      $region34: #{_lambda_.11} parent=31 // pred_check_branch
        %262 = sbr.rel (%p260) target = $region36
      $region35: #{_lambda_.11} parent=31 // pred_region
        %vm263 = vcmask 388096
        %264 = vst.msk [vmem:[#allocation2] sm:$0xf] %vm263, 0.0
      $region36: #{_lambda_.11} parent=31 // pred_fallthru
        _
      %v265 = vld [vmem:[%s238] sm:$0xff]
      %v266 = vld [vmem:[%s238 + $0x8] sm:$0xf]
      %v267 = vld [vmem:[#allocation2] sm:$0xf]
      %v268 = vld [vmem:[%s247] sm:$0xf]
      %v269 = vld [vmem:[%s247 + $0x4] sm:$0xf]
      %v270 = vld [vmem:[%s247 + $0x8] sm:$0xf]
      %v271 = vld [vmem:[%s247 + $0xc] sm:$0xf]
      %v272 = vld [vmem:[%s247 + $0x10] sm:$0xf]
      %v273 = vld [vmem:[%s247 + $0x14] sm:$0xf]
      %v274 = vld [vmem:[%s247 + $0x18] sm:$0xf]
      %v275 = vld [vmem:[%s247 + $0x1c] sm:$0xf]
      %v276 = vld [vmem:[%s247 + $0x20] sm:$0xf]
      %v277 = vld [vmem:[%s247 + $0x24] sm:$0xf]
      %v278 = vld [vmem:[%s247 + $0x28] sm:$0xf]
      %v279 = vld [vmem:[%s247 + $0x2c] sm:$0xf]
      %v280 = vld [vmem:[%s247 + $0x30] sm:$0xf]
      %v281 = vld [vmem:[%s247 + $0x34] sm:$0xf]
      %v282 = vld [vmem:[%s247 + $0x38] sm:$0xf]
      %v283 = vld [vmem:[%s247 + $0x3c] sm:$0xf]
      %v284 = vld [vmem:[%s247 + $0x40] sm:$0xf]
      %v285 = vld [vmem:[%s247 + $0x44] sm:$0xf]
      %v286 = vld [vmem:[%s247 + $0x48] sm:$0xf]
      %v287 = vld [vmem:[%s247 + $0x4c] sm:$0xf]
      %v288 = vld [vmem:[%s247 + $0x50] sm:$0xf]
      %v289 = vld [vmem:[%s247 + $0x54] sm:$0xf]
      %v290 = vld [vmem:[%s247 + $0x58] sm:$0xf]
      %v291 = vld [vmem:[%s247 + $0x5c] sm:$0xf]
      %v292 = vld [vmem:[%s247 + $0x60] sm:$0xf]
      %v293 = vld [vmem:[%s247 + $0x64] sm:$0xf]
      %v294 = vld [vmem:[%s247 + $0x68] sm:$0xf]
      %v295 = vld [vmem:[%s247 + $0x6c] sm:$0xf]
      %v296 = vld [vmem:[%s247 + $0x70] sm:$0xf]
      %v297 = vld [vmem:[%s247 + $0x74] sm:$0xf]
      %v298 = vld [vmem:[%s247 + $0x78] sm:$0xf]
      %v299 = vld [vmem:[%s247 + $0x7c] sm:$0xf]
      %v300 = vld [vmem:[%s247 + $0x80] sm:$0xf]
      %v301 = vld [vmem:[%s247 + $0x84] sm:$0xf]
      %v302 = vld [vmem:[%s247 + $0x88] sm:$0xf]
      %v303 = vld [vmem:[%s247 + $0x8c] sm:$0xf]
      %v304 = vld [vmem:[%s247 + $0x90] sm:$0xf]
      %v305 = vld [vmem:[%s247 + $0x94] sm:$0xf]
      %v306 = vld [vmem:[%s247 + $0x98] sm:$0xf]
      %v307 = vld [vmem:[%s247 + $0x9c] sm:$0xf]
      %v308 = vld [vmem:[%s247 + $0xa0] sm:$0xf]
      %v309 = vld [vmem:[%s247 + $0xa4] sm:$0xf]
      %v310 = vld [vmem:[%s247 + $0xa8] sm:$0xf]
      %v311 = vld [vmem:[%s247 + $0xac] sm:$0xf]
      %v312 = vld [vmem:[%s247 + $0xb0] sm:$0xf]
      %v313 = vld [vmem:[%s247 + $0xb4] sm:$0xf]
      %v314 = vld [vmem:[%s247 + $0xb8] sm:$0xf]
      %v315 = vld [vmem:[%s247 + $0xbc] sm:$0xf]
      %v316 = vld [vmem:[%s247 + $0xc0] sm:$0xf]
      %v317 = vld [vmem:[%s247 + $0xc4] sm:$0xf]
      %v318 = vld [vmem:[%s247 + $0xc8] sm:$0xf]
      %v319 = vld [vmem:[%s247 + $0xcc] sm:$0xf]
      %v320 = vld [vmem:[%s247 + $0xd0] sm:$0xf]
      %v321 = vld [vmem:[%s247 + $0xd4] sm:$0xf]
      %v322 = vld [vmem:[%s247 + $0xd8] sm:$0xf]
      %v323 = vld [vmem:[%s247 + $0xdc] sm:$0xf]
      %v324 = vld [vmem:[%s247 + $0xe0] sm:$0xf]
      %v325 = vld [vmem:[%s247 + $0xe4] sm:$0xf]
      %v326 = vld [vmem:[%s247 + $0xe8] sm:$0xf]
      %v327 = vld [vmem:[%s247 + $0xec] sm:$0xf]
      %v328 = vld [vmem:[%s247 + $0xf0] sm:$0xf]
      %v329 = vld [vmem:[%s247 + $0xf4] sm:$0xf]
      %v330 = vld [vmem:[%s247 + $0xf8] sm:$0xf]
      %v331 = vld [vmem:[%s247 + $0xfc] sm:$0xf]
      %v332 = vld [vmem:[%s247 + $0x100] sm:$0xf]
      %v333 = vld [vmem:[%s247 + $0x104] sm:$0xf]
      %v334 = vld [vmem:[%s247 + $0x108] sm:$0xf]
      %v335 = vld [vmem:[%s247 + $0x10c] sm:$0xf]
      %v336 = vld [vmem:[%s247 + $0x110] sm:$0xf]
      %v337 = vld [vmem:[%s247 + $0x114] sm:$0xf]
      %v338 = vld [vmem:[%s247 + $0x118] sm:$0xf]
      %v339 = vld [vmem:[%s247 + $0x11c] sm:$0xf]
      %v340 = vld [vmem:[%s247 + $0x120] sm:$0xf]
      %v341 = vld [vmem:[%s247 + $0x124] sm:$0xf]
      %v342 = vld [vmem:[%s247 + $0x128] sm:$0xf]
      %v343 = vld [vmem:[%s247 + $0x12c] sm:$0xf]
      %v344 = vld [vmem:[%s247 + $0x130] sm:$0xf]
      %v345 = vld [vmem:[%s247 + $0x134] sm:$0xf]
      %v346 = vld [vmem:[%s247 + $0x138] sm:$0xf]
      %v347 = vld [vmem:[%s247 + $0x13c] sm:$0xf]
      %v348 = vld [vmem:[%s247 + $0x140] sm:$0xf]
      %v349 = vld [vmem:[%s247 + $0x144] sm:$0xf]
      %v350 = vld [vmem:[%s247 + $0x148] sm:$0xf]
      %v351 = vld [vmem:[%s247 + $0x14c] sm:$0xf]
      %v352 = vld [vmem:[%s247 + $0x150] sm:$0xf]
      %v353 = vld [vmem:[%s247 + $0x154] sm:$0xf]
      %v354 = vld [vmem:[%s247 + $0x158] sm:$0xf]
      %v355 = vld [vmem:[%s247 + $0x15c] sm:$0xf]
      %v356 = vld [vmem:[%s247 + $0x160] sm:$0xf]
      %v357 = vld [vmem:[%s247 + $0x164] sm:$0xf]
      %v358 = vld [vmem:[%s247 + $0x168] sm:$0xf]
      %v359 = vld [vmem:[%s247 + $0x16c] sm:$0xf]
      %v360 = vld [vmem:[%s247 + $0x170] sm:$0xf]
      %v361 = vld [vmem:[%s247 + $0x174] sm:$0xf]
      %v362 = vld [vmem:[%s247 + $0x178] sm:$0xf]
      %v363 = vld [vmem:[%s247 + $0x17c] sm:$0xf]
      %365 = vst [vmem:[#allocation1] ss:$4 sm:$0xff] %v265
      %s367 = scalar_lea.vmem [#allocation1], 32
      %368 = vst [vmem:[%s367] ss:$4 sm:$0xff] %v266
      %v369 = vld.sshfl [vmem:[#allocation1] sm:$0xff pattern:$0x73625140]
      %v370 = vld.sshfl [vmem:[#allocation1 + $0x8] sm:$0xff pattern:$0x73625140]
      %v371 = vld.sshfl [vmem:[#allocation1 + $0x10] sm:$0xff pattern:$0x73625140]
      %v372 = vld.sshfl [vmem:[#allocation1 + $0x18] sm:$0xff pattern:$0x73625140]
      %v373 = vld.sshfl [vmem:[#allocation1 + $0x20] sm:$0xff pattern:$0x73625140]
      %v374 = vld.sshfl [vmem:[#allocation1 + $0x28] sm:$0xff pattern:$0x73625140]
      %v477 = vunpack.c.l.b16 %v268
      %v478 = vunpack.c.l.b16 %v269
      %v479 = vunpack.c.l.b16 %v270
      %v480 = vunpack.c.l.b16 %v271
      %v481 = vunpack.c.l.b16 %v272
      %v482 = vunpack.c.l.b16 %v273
      %v483 = vunpack.c.l.b16 %v274
      %v484 = vunpack.c.l.b16 %v275
      %v485 = vunpack.c.l.b16 %v276
      %v486 = vunpack.c.l.b16 %v277
      %v487 = vunpack.c.l.b16 %v278
      %v488 = vunpack.c.l.b16 %v279
      %v489 = vunpack.c.l.b16 %v280
      %v490 = vunpack.c.l.b16 %v281
      %v491 = vunpack.c.l.b16 %v282
      %v492 = vunpack.c.l.b16 %v283
      %v493 = vunpack.c.l.b16 %v284
      %v494 = vunpack.c.l.b16 %v285
      %v495 = vunpack.c.l.b16 %v286
      %v496 = vunpack.c.l.b16 %v287
      %v497 = vunpack.c.l.b16 %v288
      %v498 = vunpack.c.l.b16 %v289
      %v499 = vunpack.c.l.b16 %v290
      %v500 = vunpack.c.l.b16 %v291
      %v501 = vunpack.c.l.b16 %v292
      %v502 = vunpack.c.l.b16 %v293
      %v503 = vunpack.c.l.b16 %v294
      %v504 = vunpack.c.l.b16 %v295
      %v505 = vunpack.c.l.b16 %v296
      %v506 = vunpack.c.l.b16 %v297
      %v507 = vunpack.c.l.b16 %v298
      %v508 = vunpack.c.l.b16 %v299
      %v509 = vunpack.c.l.b16 %v300
      %v510 = vunpack.c.l.b16 %v301
      %v511 = vunpack.c.l.b16 %v302
      %v512 = vunpack.c.l.b16 %v303
      %v513 = vunpack.c.l.b16 %v304
      %v514 = vunpack.c.l.b16 %v305
      %v515 = vunpack.c.l.b16 %v306
      %v516 = vunpack.c.l.b16 %v307
      %v517 = vunpack.c.l.b16 %v308
      %v518 = vunpack.c.l.b16 %v309
      %v519 = vunpack.c.l.b16 %v310
      %v520 = vunpack.c.l.b16 %v311
      %v521 = vunpack.c.l.b16 %v312
      %v522 = vunpack.c.l.b16 %v313
      %v523 = vunpack.c.l.b16 %v314
      %v524 = vunpack.c.l.b16 %v315
      %v525 = vunpack.c.l.b16 %v316
      %v526 = vunpack.c.l.b16 %v317
      %v527 = vunpack.c.l.b16 %v318
      %v528 = vunpack.c.l.b16 %v319
      %v529 = vunpack.c.l.b16 %v320
      %v530 = vunpack.c.l.b16 %v321
      %v531 = vunpack.c.l.b16 %v322
      %v532 = vunpack.c.l.b16 %v323
      %v533 = vunpack.c.l.b16 %v324
      %v534 = vunpack.c.l.b16 %v325
      %v535 = vunpack.c.l.b16 %v326
      %v536 = vunpack.c.l.b16 %v327
      %v537 = vunpack.c.l.b16 %v328
      %v538 = vunpack.c.l.b16 %v329
      %v539 = vunpack.c.l.b16 %v330
      %v540 = vunpack.c.l.b16 %v331
      %v541 = vunpack.c.l.b16 %v332
      %v542 = vunpack.c.l.b16 %v333
      %v543 = vunpack.c.l.b16 %v334
      %v544 = vunpack.c.l.b16 %v335
      %v545 = vunpack.c.l.b16 %v336
      %v546 = vunpack.c.l.b16 %v337
      %v547 = vunpack.c.l.b16 %v338
      %v548 = vunpack.c.l.b16 %v339
      %v549 = vunpack.c.l.b16 %v340
      %v550 = vunpack.c.l.b16 %v341
      %v551 = vunpack.c.l.b16 %v342
      %v552 = vunpack.c.l.b16 %v343
      %v553 = vunpack.c.l.b16 %v344
      %v554 = vunpack.c.l.b16 %v345
      %v555 = vunpack.c.l.b16 %v346
      %v556 = vunpack.c.l.b16 %v347
      %v557 = vunpack.c.l.b16 %v348
      %v558 = vunpack.c.l.b16 %v349
      %v559 = vunpack.c.l.b16 %v350
      %v560 = vunpack.c.l.b16 %v351
      %v561 = vunpack.c.l.b16 %v352
      %v562 = vunpack.c.l.b16 %v353
      %v563 = vunpack.c.l.b16 %v354
      %v564 = vunpack.c.l.b16 %v355
      %v565 = vunpack.c.l.b16 %v356
      %v566 = vunpack.c.l.b16 %v357
      %v567 = vunpack.c.l.b16 %v358
      %v568 = vunpack.c.l.b16 %v359
      %v569 = vunpack.c.l.b16 %v360
      %v570 = vunpack.c.l.b16 %v361
      %v571 = vunpack.c.l.b16 %v362
      %v572 = vunpack.c.l.b16 %v363
      %v573 = vpack.c.b16 %v478, %v477
      %v574 = vpack.c.b16 %v480, %v479
      %v575 = vpack.c.b16 %v482, %v481
      %v576 = vpack.c.b16 %v484, %v483
      %v577 = vpack.c.b16 %v486, %v485
      %v578 = vpack.c.b16 %v488, %v487
      %v579 = vpack.c.b16 %v490, %v489
      %v580 = vpack.c.b16 %v492, %v491
      %v581 = vpack.c.b16 %v494, %v493
      %v582 = vpack.c.b16 %v496, %v495
      %v583 = vpack.c.b16 %v498, %v497
      %v584 = vpack.c.b16 %v500, %v499
      %v585 = vpack.c.b16 %v502, %v501
      %v586 = vpack.c.b16 %v504, %v503
      %v587 = vpack.c.b16 %v506, %v505
      %v588 = vpack.c.b16 %v508, %v507
      %v589 = vpack.c.b16 %v510, %v509
      %v590 = vpack.c.b16 %v512, %v511
      %v591 = vpack.c.b16 %v514, %v513
      %v592 = vpack.c.b16 %v516, %v515
      %v593 = vpack.c.b16 %v518, %v517
      %v594 = vpack.c.b16 %v520, %v519
      %v595 = vpack.c.b16 %v522, %v521
      %v596 = vpack.c.b16 %v524, %v523
      %v597 = vpack.c.b16 %v526, %v525
      %v598 = vpack.c.b16 %v528, %v527
      %v599 = vpack.c.b16 %v530, %v529
      %v600 = vpack.c.b16 %v532, %v531
      %v601 = vpack.c.b16 %v534, %v533
      %v602 = vpack.c.b16 %v536, %v535
      %v603 = vpack.c.b16 %v538, %v537
      %v604 = vpack.c.b16 %v540, %v539
      %v605 = vpack.c.b16 %v542, %v541
      %v606 = vpack.c.b16 %v544, %v543
      %v607 = vpack.c.b16 %v546, %v545
      %v608 = vpack.c.b16 %v548, %v547
      %v609 = vpack.c.b16 %v550, %v549
      %v610 = vpack.c.b16 %v552, %v551
      %v611 = vpack.c.b16 %v554, %v553
      %v612 = vpack.c.b16 %v556, %v555
      %v613 = vpack.c.b16 %v558, %v557
      %v614 = vpack.c.b16 %v560, %v559
      %v615 = vpack.c.b16 %v562, %v561
      %v616 = vpack.c.b16 %v564, %v563
      %v617 = vpack.c.b16 %v566, %v565
      %v618 = vpack.c.b16 %v568, %v567
      %v619 = vpack.c.b16 %v570, %v569
      %v620 = vpack.c.b16 %v572, %v571
      %669 = vmatpush.bf16.msra.mxu0 %v580
      %670 = vmatpush.bf16.msra.mxu0 %v579
      %671 = vmatpush.bf16.msra.mxu0 %v578
      %672 = vmatpush.bf16.msra.mxu0 %v577
      %673 = vmatpush.bf16.msra.mxu0 %v576
      %674 = vmatpush.bf16.msra.mxu0 %v575
      %675 = vmatpush.bf16.msra.mxu0 %v574
      %676 = vmatpush.bf16.msra.mxu0 %v573
      %677 = vmatmul.bf16.gmra.mxu0 %v369
      %v678 = vpop.f32.mrf.mxu0
      %v679 = vadd.f32 0.0, %v678
      %v680 = vpop.f32.mrf.mxu0
      %681 = vdwg.mxu0
      %682 = vmatpush.bf16.msra.mxu0 %v588
      %683 = vmatpush.bf16.msra.mxu0 %v587
      %684 = vmatpush.bf16.msra.mxu0 %v586
      %685 = vmatpush.bf16.msra.mxu0 %v585
      %686 = vmatpush.bf16.msra.mxu0 %v584
      %687 = vmatpush.bf16.msra.mxu0 %v583
      %688 = vmatpush.bf16.msra.mxu0 %v582
      %689 = vmatpush.bf16.msra.mxu0 %v581
      %690 = vmatmul.bf16.gmra.mxu0 %v370
      %v691 = vpop.f32.mrf.mxu0
      %v692 = vadd.f32 %v679, %v691
      %v693 = vpop.f32.mrf.mxu0
      %694 = vdwg.mxu0
      %695 = vmatpush.bf16.msra.mxu0 %v596
      %696 = vmatpush.bf16.msra.mxu0 %v595
      %697 = vmatpush.bf16.msra.mxu0 %v594
      %698 = vmatpush.bf16.msra.mxu0 %v593
      %699 = vmatpush.bf16.msra.mxu0 %v592
      %700 = vmatpush.bf16.msra.mxu0 %v591
      %701 = vmatpush.bf16.msra.mxu0 %v590
      %702 = vmatpush.bf16.msra.mxu0 %v589
      %703 = vmatmul.bf16.gmra.mxu0 %v371
      %v704 = vpop.f32.mrf.mxu0
      %v705 = vadd.f32 %v692, %v704
      %v706 = vpop.f32.mrf.mxu0
      %707 = vdwg.mxu0
      %708 = vmatpush.bf16.msra.mxu0 %v604
      %709 = vmatpush.bf16.msra.mxu0 %v603
      %710 = vmatpush.bf16.msra.mxu0 %v602
      %711 = vmatpush.bf16.msra.mxu0 %v601
      %712 = vmatpush.bf16.msra.mxu0 %v600
      %713 = vmatpush.bf16.msra.mxu0 %v599
      %714 = vmatpush.bf16.msra.mxu0 %v598
      %715 = vmatpush.bf16.msra.mxu0 %v597
      %716 = vmatmul.bf16.gmra.mxu0 %v372
      %v717 = vpop.f32.mrf.mxu0
      %v718 = vadd.f32 %v705, %v717
      %v719 = vpop.f32.mrf.mxu0
      %720 = vdwg.mxu0
      %721 = vmatpush.bf16.msra.mxu0 %v612
      %722 = vmatpush.bf16.msra.mxu0 %v611
      %723 = vmatpush.bf16.msra.mxu0 %v610
      %724 = vmatpush.bf16.msra.mxu0 %v609
      %725 = vmatpush.bf16.msra.mxu0 %v608
      %726 = vmatpush.bf16.msra.mxu0 %v607
      %727 = vmatpush.bf16.msra.mxu0 %v606
      %728 = vmatpush.bf16.msra.mxu0 %v605
      %729 = vmatmul.bf16.gmra.mxu0 %v373
      %v730 = vpop.f32.mrf.mxu0
      %v731 = vadd.f32 %v718, %v730
      %v732 = vpop.f32.mrf.mxu0
      %733 = vdwg.mxu0
      %734 = vmatpush.bf16.msra.mxu0 %v620
      %735 = vmatpush.bf16.msra.mxu0 %v619
      %736 = vmatpush.bf16.msra.mxu0 %v618
      %737 = vmatpush.bf16.msra.mxu0 %v617
      %738 = vmatpush.bf16.msra.mxu0 %v616
      %739 = vmatpush.bf16.msra.mxu0 %v615
      %740 = vmatpush.bf16.msra.mxu0 %v614
      %741 = vmatpush.bf16.msra.mxu0 %v613
      %742 = vmatmul.bf16.gmra.mxu0 %v374
      %v743 = vpop.f32.mrf.mxu0
      %v744 = vadd.f32 %v731, %v743
      %v745 = vpop.f32.mrf.mxu0
      %746 = vdwg.mxu0
      %v747 = vadd.f32 %v267, %v744
      %vm748 = vcmask 388096
      %749 = vst.msk [vmem:[#allocation2] sm:$0xf] %vm748, %v747
      %p750 = scmp.eq.s32.totalorder %s21, 1
      // Predicated region
      $region37: #{_lambda_.11} parent=31 // pred_check
        %p751 = pneg %p750
      $region38: #{_lambda_.11} parent=31 // pred_check_branch
        %753 = sbr.rel (%p751) target = $region40
      $region39: #{_lambda_.11} parent=31 // pred_region
        %v754 = vld [vmem:[#allocation2] sm:$0xf]
        %v755 = vld [vmem:[%s251] sm:$0x1]
        %v757 = vperm.slane %v755, 0
        %v759 = vadd.f32 %v754, %v757
        %v760 = vpack.c.bf16 %v759, %v759
        %vm761 = vcmask 386048
        %762 = vst.msk [vmem:[%s258] sm:$0x3] %vm761, %v760
      $region40: #{_lambda_.11} parent=31 // pred_fallthru
        _
      %p763 = scmp.lt.s32.totalorder %s19, 0
      %s764 = scalar_select %p763, %s19, 0
      %p765 = scmp.lt.s32.totalorder %s20, 0
      %s766 = scalar_select %p765, %s20, 0
      %s767 = sadd.s32 %s766, %s764
      %s768 = smul.addr %s767, 2
      %s769 = scalar_lea.vmem %s3, %s768
      // Predicated region
      $region41: #{_lambda_.11} parent=31 // pred_check
        %p770 = pneg %p135
      $region42: #{_lambda_.11} parent=31 // pred_check_branch
        %772 = sbr.rel (%p770) target = $region44
      $region43: #{_lambda_.11} parent=31 // pred_region
        _
      $region44: #{_lambda_.11} parent=31 // pred_fallthru
        _
      // Predicated region
      $region45: #{_lambda_.11} parent=31 // pred_check
        %p773 = pneg %p135
      $region46: #{_lambda_.11} parent=31 // pred_check_branch
        %775 = sbr.rel (%p773) target = $region48
      $region47: #{_lambda_.11} parent=31 // pred_region
        %p776 = scmp.lt.s32.totalorder %s19, 0
        %s777 = scalar_select %p776, %s19, 0
        %p778 = scmp.lt.s32.totalorder %s20, 0
        %s779 = scalar_select %p778, %s20, 0
        %s780 = sadd.s32 %s779, %s777
        %s781 = smul.addr %s780, 2
        %s782 = scalar_lea.vmem %s3, %s781
      $region48: #{_lambda_.11} parent=31 // pred_fallthru
        _
    $region32: #{_lambda_.11} parent=5 // pred_fallthru
      _
    %p783 = scmp.le.s32.totalorder 2, %s9
    // Predicated region
    $region49: #{_lambda_.11} parent=5 // pred_check
      %p784 = pneg %p783
    $region50: #{_lambda_.11} parent=5 // pred_check_branch
      %786 = sbr.rel (%p784) target = $region52
    $region51: #{_lambda_.11} parent=5 // pred_region
      %s787 = ssub.s32 %s9, 2
    $region52: #{_lambda_.11} parent=5 // pred_fallthru
      _
  $region6: #{_lambda_.11} parent=0 // loop_footer
    %s13 = sadd.s32 1, %s9
  $region7: #{_lambda_.11} parent=0 // loop_footer_branch
    %8 = sbr.rel target = $region3
  $region8: #{_lambda_.11} parent=0 // loop_exit
    _

// kernel: _lambda_.15
$region0: #{_lambda_.15}
  #allocation0 [shape = 'u32[]', space=smem, size = 0x4, offset = 0x4, fixed_abs, tag = 'smem constant byte address 0x4 - core index']
  #allocation1 [shape = 'u32[72,128]{1,0:T(1,128)}', space=vmem, size = 0x9000, scoped, tag = 'internal scratch']
  #allocation2 [shape = 'f32[12,48]{1,0:T(8,128)}', space=vmem, size = 0x2000, scoped, tag = 'scratch operand']
  %s0 = inlined_call_operand.vmem [shape: bf16[2,12,48], index: 0, kind: input, shape index: {}]
  %s1 = inlined_call_operand.vmem [shape: bf16[48,144], index: 1, kind: input, shape index: {}]
  %s2 = inlined_call_operand.vmem [shape: f32[1,144], index: 2, kind: input, shape index: {}]
  %s3 = inlined_call_operand.vmem [shape: bf16[4,12,48], index: 3, kind: input, shape index: {}]
  %s4 = inlined_call_operand.vmem [shape: f32[1,48], index: 4, kind: input, shape index: {}]
  %s5 = inlined_call_operand.vmem [shape: f32[1,48], index: 5, kind: input, shape index: {}]
  %s6 = inlined_call_operand.vmem [shape: f32[1,48], index: 6, kind: input, shape index: {}]
  %s7 = inlined_call_operand.vmem [shape: bf16[2,12,48], index: 7, kind: output, shape index: {}]
  %s8 = sld [smem:[#allocation0]]
  $region61: #{_lambda_.15} parent=0
    _
  %s10 = ssub.s32 1, %s8
  %s11 = scalar_select 0, %s10, %s8
  loop: start=0, step=1, limit=4
  $region2: #{_lambda_.15} parent=0 // loop_pre_header
    _
  $region3: #{_lambda_.15} parent=0 // loop_header
    %s13 = sphi 0, %s17
    %p14 = scmp.ge.s32.totalorder %s13, 4
    %s23 = sphi 0, %s25
    %s26 = sphi 0, %s23
    %s27 = sphi 0, %s26
    %s43 = sphi 0, %s27
    %s47 = sphi 0, %s47
    %s49 = sphi 0, %s47
    %s50 = sphi 0, %s49
    %s64 = sphi 0, %s50
    %s68 = sphi 0, %s68
    %s70 = sphi 0, %s68
    %s71 = sphi 0, %s70
    %s85 = sphi 0, %s71
    %s89 = sphi 0, %s89
    %s91 = sphi 0, %s89
    %s92 = sphi 0, %s91
    %s106 = sphi 0, %s92
    %s110 = sphi 0, %s110
    %s112 = sphi 0, %s110
    %s113 = sphi 0, %s112
    %s127 = sphi 0, %s113
    %s131 = sphi 0, %s131
    %s133 = sphi 0, %s131
    %s134 = sphi 0, %s133
    %s148 = sphi 0, %s134
    %s152 = sphi 0, %s152
    %s154 = sphi 0, %s152
    %s155 = sphi 0, %s154
    %s169 = sphi 0, %s155
    %s175 = sphi 0, %s177
    %s178 = sphi 0, %s175
    %s179 = sphi 0, %s178
    %s195 = sphi 0, %s179
  $region4: #{_lambda_.15} parent=0 // loop_header_branch
    %16 = sbr.rel (%p14) target = $region8
  $region5: #{_lambda_.15} parent=0 // loop_body
    %s18 = ssub.s32 %s13, 1
    %s19 = ssub.s32 %s13, 2
    %s20 = sadd.s32 %s13, 1
    %s21 = ssub.s32 %s13, %s20
    %p22 = scmp.eq.s32.totalorder %s21, 0
    %s24 = sadd.s32 %s23, 1
    %s25 = scalar_select %p22, %s23, %s24
    %p28 = pneg %p22
    %p29 = scmp.eq.s32.totalorder %s13, 1
    %p30 = por %p28, %p29
    %p31 = scmp.ne.s32.totalorder %s23, %s26
    %p32 = scmp.eq.s32.totalorder %s13, 0
    %p33 = por %p31, %p32
    %p34 = scmp.ne.s32.totalorder %s23, %s26
    %p35 = scmp.eq.s32.totalorder %s18, 1
    %p36 = por %p34, %p35
    %p37 = scmp.ne.s32.totalorder %s26, %s27
    %p38 = scmp.eq.s32.totalorder %s18, 0
    %p39 = por %p37, %p38
    %p40 = scmp.ne.s32.totalorder %s26, %s27
    %p41 = scmp.eq.s32.totalorder %s19, 1
    %p42 = por %p40, %p41
    %p44 = scmp.ne.s32.totalorder %s27, %s43
    %p45 = scmp.eq.s32.totalorder %s19, 0
    %p46 = por %p44, %p45
    %s48 = sadd.s32 %s47, 1
    %p51 = scmp.eq.s32.totalorder %s13, 1
    %p52 = scmp.ne.s32.totalorder %s47, %s49
    %p53 = scmp.eq.s32.totalorder %s13, 0
    %p54 = por %p52, %p53
    %p55 = scmp.ne.s32.totalorder %s47, %s49
    %p56 = scmp.eq.s32.totalorder %s18, 1
    %p57 = por %p55, %p56
    %p58 = scmp.ne.s32.totalorder %s49, %s50
    %p59 = scmp.eq.s32.totalorder %s18, 0
    %p60 = por %p58, %p59
    %p61 = scmp.ne.s32.totalorder %s49, %s50
    %p62 = scmp.eq.s32.totalorder %s19, 1
    %p63 = por %p61, %p62
    %p65 = scmp.ne.s32.totalorder %s50, %s64
    %p66 = scmp.eq.s32.totalorder %s19, 0
    %p67 = por %p65, %p66
    %s69 = sadd.s32 %s68, 1
    %p72 = scmp.eq.s32.totalorder %s13, 1
    %p73 = scmp.ne.s32.totalorder %s68, %s70
    %p74 = scmp.eq.s32.totalorder %s13, 0
    %p75 = por %p73, %p74
    %p76 = scmp.ne.s32.totalorder %s68, %s70
    %p77 = scmp.eq.s32.totalorder %s18, 1
    %p78 = por %p76, %p77
    %p79 = scmp.ne.s32.totalorder %s70, %s71
    %p80 = scmp.eq.s32.totalorder %s18, 0
    %p81 = por %p79, %p80
    %p82 = scmp.ne.s32.totalorder %s70, %s71
    %p83 = scmp.eq.s32.totalorder %s19, 1
    %p84 = por %p82, %p83
    %p86 = scmp.ne.s32.totalorder %s71, %s85
    %p87 = scmp.eq.s32.totalorder %s19, 0
    %p88 = por %p86, %p87
    %s90 = sadd.s32 %s89, 1
    %p93 = scmp.eq.s32.totalorder %s13, 1
    %p94 = scmp.ne.s32.totalorder %s89, %s91
    %p95 = scmp.eq.s32.totalorder %s13, 0
    %p96 = por %p94, %p95
    %p97 = scmp.ne.s32.totalorder %s89, %s91
    %p98 = scmp.eq.s32.totalorder %s18, 1
    %p99 = por %p97, %p98
    %p100 = scmp.ne.s32.totalorder %s91, %s92
    %p101 = scmp.eq.s32.totalorder %s18, 0
    %p102 = por %p100, %p101
    %p103 = scmp.ne.s32.totalorder %s91, %s92
    %p104 = scmp.eq.s32.totalorder %s19, 1
    %p105 = por %p103, %p104
    %p107 = scmp.ne.s32.totalorder %s92, %s106
    %p108 = scmp.eq.s32.totalorder %s19, 0
    %p109 = por %p107, %p108
    %s111 = sadd.s32 %s110, 1
    %p114 = scmp.eq.s32.totalorder %s13, 1
    %p115 = scmp.ne.s32.totalorder %s110, %s112
    %p116 = scmp.eq.s32.totalorder %s13, 0
    %p117 = por %p115, %p116
    %p118 = scmp.ne.s32.totalorder %s110, %s112
    %p119 = scmp.eq.s32.totalorder %s18, 1
    %p120 = por %p118, %p119
    %p121 = scmp.ne.s32.totalorder %s112, %s113
    %p122 = scmp.eq.s32.totalorder %s18, 0
    %p123 = por %p121, %p122
    %p124 = scmp.ne.s32.totalorder %s112, %s113
    %p125 = scmp.eq.s32.totalorder %s19, 1
    %p126 = por %p124, %p125
    %p128 = scmp.ne.s32.totalorder %s113, %s127
    %p129 = scmp.eq.s32.totalorder %s19, 0
    %p130 = por %p128, %p129
    %s132 = sadd.s32 %s131, 1
    %p135 = scmp.eq.s32.totalorder %s13, 1
    %p136 = scmp.ne.s32.totalorder %s131, %s133
    %p137 = scmp.eq.s32.totalorder %s13, 0
    %p138 = por %p136, %p137
    %p139 = scmp.ne.s32.totalorder %s131, %s133
    %p140 = scmp.eq.s32.totalorder %s18, 1
    %p141 = por %p139, %p140
    %p142 = scmp.ne.s32.totalorder %s133, %s134
    %p143 = scmp.eq.s32.totalorder %s18, 0
    %p144 = por %p142, %p143
    %p145 = scmp.ne.s32.totalorder %s133, %s134
    %p146 = scmp.eq.s32.totalorder %s19, 1
    %p147 = por %p145, %p146
    %p149 = scmp.ne.s32.totalorder %s134, %s148
    %p150 = scmp.eq.s32.totalorder %s19, 0
    %p151 = por %p149, %p150
    %s153 = sadd.s32 %s152, 1
    %p156 = scmp.eq.s32.totalorder %s13, 1
    %p157 = scmp.ne.s32.totalorder %s152, %s154
    %p158 = scmp.eq.s32.totalorder %s13, 0
    %p159 = por %p157, %p158
    %p160 = scmp.ne.s32.totalorder %s152, %s154
    %p161 = scmp.eq.s32.totalorder %s18, 1
    %p162 = por %p160, %p161
    %p163 = scmp.ne.s32.totalorder %s154, %s155
    %p164 = scmp.eq.s32.totalorder %s18, 0
    %p165 = por %p163, %p164
    %p166 = scmp.ne.s32.totalorder %s154, %s155
    %p167 = scmp.eq.s32.totalorder %s19, 1
    %p168 = por %p166, %p167
    %p170 = scmp.ne.s32.totalorder %s155, %s169
    %p171 = scmp.eq.s32.totalorder %s19, 0
    %p172 = por %p170, %p171
    %s173 = ssub.s32 %s13, %s20
    %p174 = scmp.eq.s32.totalorder %s173, 0
    %s176 = sadd.s32 %s175, 1
    %s177 = scalar_select %p174, %s175, %s176
    %p180 = pneg %p174
    %p181 = scmp.eq.s32.totalorder %s13, 1
    %p182 = por %p180, %p181
    %p183 = scmp.ne.s32.totalorder %s175, %s178
    %p184 = scmp.eq.s32.totalorder %s13, 0
    %p185 = por %p183, %p184
    %p186 = scmp.ne.s32.totalorder %s175, %s178
    %p187 = scmp.eq.s32.totalorder %s18, 1
    %p188 = por %p186, %p187
    %p189 = scmp.ne.s32.totalorder %s178, %s179
    %p190 = scmp.eq.s32.totalorder %s18, 0
    %p191 = por %p189, %p190
    %p192 = scmp.ne.s32.totalorder %s178, %s179
    %p193 = scmp.eq.s32.totalorder %s19, 1
    %p194 = por %p192, %p193
    %p196 = scmp.ne.s32.totalorder %s179, %s195
    %p197 = scmp.eq.s32.totalorder %s19, 0
    %p198 = por %p196, %p197
    %p199 = scmp.le.s32.totalorder 1, %s13
    %p200 = scmp.lt.s32.totalorder %s13, 3
    %p201 = pnand %p199, %p200
    %p202 = pneg %p201
    // Predicated region
    $region9: #{_lambda_.15} parent=5 // pred_check
      _
    $region10: #{_lambda_.15} parent=5 // pred_check_branch
      %204 = sbr.rel (%p201) target = $region12
    $region11: #{_lambda_.15} parent=5 // pred_region
      %s205 = ssub.s32 %s13, 1
      // Predicated region
      $region13: #{_lambda_.15} parent=11 // pred_check
        %p206 = pneg %p60
      $region14: #{_lambda_.15} parent=11 // pred_check_branch
        %208 = sbr.rel (%p206) target = $region16
      $region15: #{_lambda_.15} parent=11 // pred_region
        _
      $region16: #{_lambda_.15} parent=11 // pred_fallthru
        _
      // Predicated region
      $region17: #{_lambda_.15} parent=11 // pred_check
        %p209 = pneg %p81
      $region18: #{_lambda_.15} parent=11 // pred_check_branch
        %211 = sbr.rel (%p209) target = $region20
      $region19: #{_lambda_.15} parent=11 // pred_region
        _
      $region20: #{_lambda_.15} parent=11 // pred_fallthru
        _
      // Predicated region
      $region21: #{_lambda_.15} parent=11 // pred_check
        %p212 = pneg %p102
      $region22: #{_lambda_.15} parent=11 // pred_check_branch
        %214 = sbr.rel (%p212) target = $region24
      $region23: #{_lambda_.15} parent=11 // pred_region
        _
      $region24: #{_lambda_.15} parent=11 // pred_fallthru
        _
      // Predicated region
      $region25: #{_lambda_.15} parent=11 // pred_check
        %p215 = pneg %p123
      $region26: #{_lambda_.15} parent=11 // pred_check_branch
        %217 = sbr.rel (%p215) target = $region28
      $region27: #{_lambda_.15} parent=11 // pred_region
        _
      $region28: #{_lambda_.15} parent=11 // pred_fallthru
        _
      // Predicated region
      $region29: #{_lambda_.15} parent=11 // pred_check
        %p218 = pneg %p144
      $region30: #{_lambda_.15} parent=11 // pred_check_branch
        %220 = sbr.rel (%p218) target = $region32
      $region31: #{_lambda_.15} parent=11 // pred_region
        _
      $region32: #{_lambda_.15} parent=11 // pred_fallthru
        _
      // Predicated region
      $region33: #{_lambda_.15} parent=11 // pred_check
        %p221 = pneg %p165
      $region34: #{_lambda_.15} parent=11 // pred_check_branch
        %223 = sbr.rel (%p221) target = $region36
      $region35: #{_lambda_.15} parent=11 // pred_region
        _
      $region36: #{_lambda_.15} parent=11 // pred_fallthru
        _
    $region12: #{_lambda_.15} parent=5 // pred_fallthru
      _
    %p224 = scmp.lt.s32.totalorder %s13, 2
    // Predicated region
    $region37: #{_lambda_.15} parent=5 // pred_check
      %p225 = pneg %p224
    $region38: #{_lambda_.15} parent=5 // pred_check_branch
      %227 = sbr.rel (%p225) target = $region40
    $region39: #{_lambda_.15} parent=5 // pred_region
      // Predicated region
      $region41: #{_lambda_.15} parent=39 // pred_check
        %p228 = pneg %p33
      $region42: #{_lambda_.15} parent=39 // pred_check_branch
        %230 = sbr.rel (%p228) target = $region44
      $region43: #{_lambda_.15} parent=39 // pred_region
        %p231 = scmp.lt.s32.totalorder %s13, 1
        %s232 = scalar_select %p231, %s13, 1
        %s233 = smul.addr %s232, 2
        %s234 = smul.addr %s233, 4
        %s235 = scalar_lea.vmem %s0, %s234
      $region44: #{_lambda_.15} parent=39 // pred_fallthru
        _
    $region40: #{_lambda_.15} parent=5 // pred_fallthru
      _
    %p236 = scmp.le.s32.totalorder 1, %s13
    %p237 = scmp.lt.s32.totalorder %s13, 3
    %p238 = pnand %p236, %p237
    %p239 = pneg %p238
    // Predicated region
    $region45: #{_lambda_.15} parent=5 // pred_check
      _
    $region46: #{_lambda_.15} parent=5 // pred_check_branch
      %241 = sbr.rel (%p238) target = $region48
    $region47: #{_lambda_.15} parent=5 // pred_region
      %s242 = ssub.s32 %s13, 1
      %p243 = scmp.lt.s32.totalorder %s18, 1
      %s244 = scalar_select %p243, %s18, 1
      %s245 = smul.addr %s244, 2
      %s246 = smul.addr %s245, 4
      %s247 = scalar_lea.vmem %s0, %s246
      %p248 = pneg %p39
      %p249 = pneg %p36
      %p250 = pneg %p60
      %p251 = pneg %p57
      %p252 = pneg %p81
      %p253 = pneg %p78
      %p254 = pneg %p102
      %p255 = pneg %p99
      %p256 = pneg %p123
      %p257 = pneg %p120
      %p258 = pneg %p144
      %p259 = pneg %p141
      %p260 = pneg %p165
      %p261 = pneg %p162
      %p262 = pneg %p191
      %p263 = pneg %p188
      %p264 = scmp.lt.s32.totalorder %s18, 1
      %s265 = scalar_select %p264, %s18, 1
      %s266 = smul.addr %s265, 2
      %s267 = smul.addr %s266, 4
      %s268 = scalar_lea.vmem %s7, %s267
      %p269 = scmp.lt.s32.totalorder %s18, 1
      %s270 = scalar_select %p269, %s18, 1
      %s271 = smul.addr %s270, 2
      %s272 = smul.addr %s271, 4
      %s273 = scalar_lea.vmem %s0, %s272
      %p274 = scmp.lt.s32.totalorder %s18, 1
      %s275 = scalar_select %p274, %s18, 1
      %s276 = smul.addr %s275, 2
      %s277 = smul.addr %s276, 4
      %s278 = scalar_lea.vmem %s7, %s277
      %v280 = vld [vmem:[%s273] sm:$0xf]
      %v281 = vld [vmem:[%s273 + $0x4] sm:$0x3]
      %v282 = vunpack.c.l.bf16 %v280
      %v283 = vunpack.c.l.bf16 %v281
      %vm284 = vcmask 392192
      %v285 = vsel %vm284, %v282, 0.0
      %286 = vadd.xlane.f32.xlu0 %v285
      %v287 = vpop.xlane.xlu0 %286
      %vm288 = vcmask 388096
      %v289 = vsel %vm288, %v283, 0.0
      %290 = vadd.xlane.f32.xlu0 %v289
      %v291 = vpop.xlane.xlu0 %290
      %v292 = vrcp.pop 48.0
      %v293 = vmul.f32 48.0, %v292
      %v294 = vsub.f32 1.0, %v293
      %v295 = vmul.f32 %v292, %v294
      %v296 = vadd.f32 %v292, %v295
      %vm297 = vweird.f32 %v292
      %v298 = vsel %vm297, %v292, %v296
      %v299 = vmul.f32 %v287, %v298
      %v300 = vmul.f32 %v291, %v298
      %v301 = vsub.f32 %v282, %v299
      %v302 = vsub.f32 %v283, %v300
      %v303 = vmul.f32 %v301, %v301
      %v304 = vmul.f32 %v302, %v302
      %v305 = vsel %vm284, %v303, 0.0
      %306 = vadd.xlane.f32.xlu0 %v305
      %v307 = vpop.xlane.xlu0 %306
      %v308 = vsel %vm288, %v304, 0.0
      %309 = vadd.xlane.f32.xlu0 %v308
      %v310 = vpop.xlane.xlu0 %309
      %v311 = vmul.f32 %v307, %v298
      %v312 = vmul.f32 %v310, %v298
      %v313 = vadd.f32 %v311, 1e-06
      %v314 = vadd.f32 %v312, 1e-06
      %v315 = vrsqrt.pop %v313
      %v316 = vmul.f32 %v315, %v313
      %v317 = vmul.f32 %v316, %v315
      %v318 = vmul.f32 0.5, %v317
      %v319 = vsub.f32 1.5, %v318
      %v320 = vmul.f32 %v315, %v319
      %vm321 = vweird.f32 %v313
      %vm322 = vweird.f32 %v315
      %vm323 = vmor %vm321, %vm322
      %v324 = vsel %vm323, %v315, %v320
      %v325 = vrsqrt.pop %v314
      %v326 = vmul.f32 %v325, %v314
      %v327 = vmul.f32 %v326, %v325
      %v328 = vmul.f32 0.5, %v327
      %v329 = vsub.f32 1.5, %v328
      %v330 = vmul.f32 %v325, %v329
      %vm331 = vweird.f32 %v314
      %vm332 = vweird.f32 %v325
      %vm333 = vmor %vm331, %vm332
      %v334 = vsel %vm333, %v325, %v330
      %v335 = vmul.f32 %v301, %v324
      %v336 = vmul.f32 %v302, %v334
      %v337 = vld [vmem:[%s5] sm:$0x1]
      %v339 = vperm.slane %v337, 0
      %v341 = vmul.f32 %v335, %v339
      %v342 = vmul.f32 %v336, %v339
      %v343 = vld [vmem:[%s6] sm:$0x1]
      %v345 = vperm.slane %v343, 0
      %v347 = vadd.f32 %v341, %v345
      %v348 = vadd.f32 %v342, %v345
      %v349 = vpack.c.bf16 %v348, %v347
      %v350 = vld [vmem:[%s1] sm:$0xff]
      %v351 = vld [vmem:[%s1 + $0x8] sm:$0xff]
      %v352 = vld [vmem:[%s1 + $0x10] sm:$0xff]
      %v353 = vld [vmem:[%s1 + $0x18] sm:$0xff]
      %v354 = vld [vmem:[%s1 + $0x20] sm:$0xff]
      %v355 = vld [vmem:[%s1 + $0x28] sm:$0xff]
      %v356 = vld [vmem:[%s2] sm:$0x3]
      %v358 = vperm.slane %v356, 0
      %v359 = vperm.slane %v356, 1
      %v368 = vunpack.c.l.b16 %v350
      %v369 = vunpack.c.h.b16 %v350
      %v370 = vunpack.c.l.b16 %v351
      %v371 = vunpack.c.h.b16 %v351
      %v372 = vunpack.c.l.b16 %v352
      %v373 = vunpack.c.h.b16 %v352
      %v374 = vunpack.c.l.b16 %v353
      %v375 = vunpack.c.h.b16 %v353
      %v376 = vunpack.c.l.b16 %v354
      %v377 = vunpack.c.h.b16 %v354
      %v378 = vunpack.c.l.b16 %v355
      %v379 = vunpack.c.h.b16 %v355
      %v380 = vpack.c.b16 %v370, %v368
      %v381 = vpack.c.b16 %v371, %v369
      %v382 = vpack.c.b16 %v374, %v372
      %v383 = vpack.c.b16 %v375, %v373
      %v384 = vpack.c.b16 %v378, %v376
      %v385 = vpack.c.b16 %v379, %v377
      %v393 = vsel %vm284, %v349, 0
      %395 = vmatpush.bf16.msra.mxu0 0
      %396 = vmatpush.bf16.msra.mxu0 0
      %397 = vmatpush.bf16.msra.mxu0 0
      %398 = vmatpush.bf16.msra.mxu0 0
      %399 = vmatpush.bf16.msra.mxu0 0
      %400 = vmatpush.bf16.msra.mxu0 %v384
      %401 = vmatpush.bf16.msra.mxu0 %v382
      %402 = vmatpush.bf16.msra.mxu0 %v380
      %403 = vmatmul.bf16.gmra.mxu0 %v393
      %v404 = vpop.f32.mrf.mxu0
      %v405 = vadd.f32 %v358, %v404
      %v406 = vpop.f32.mrf.mxu0
      %v407 = vadd.f32 %v358, %v406
      %408 = vdwg.mxu0
      %409 = vmatpush.bf16.msra.mxu0 0
      %410 = vmatpush.bf16.msra.mxu0 0
      %411 = vmatpush.bf16.msra.mxu0 0
      %412 = vmatpush.bf16.msra.mxu0 0
      %413 = vmatpush.bf16.msra.mxu0 0
      %414 = vmatpush.bf16.msra.mxu0 %v385
      %415 = vmatpush.bf16.msra.mxu0 %v383
      %416 = vmatpush.bf16.msra.mxu0 %v381
      %417 = vmatmul.bf16.gmra.mxu0 %v393
      %v418 = vpop.f32.mrf.mxu0
      %v419 = vadd.f32 %v359, %v418
      %v420 = vpop.f32.mrf.mxu0
      %v421 = vadd.f32 %v359, %v420
      %422 = vdwg.mxu0
      %v423 = vmul.f32 %v405, 0.28867513
      %v424 = vmul.f32 %v407, 0.28867513
      %v425 = vpack.c.bf16 %v424, %v423
      %v426 = vpack.c.bf16 %v407, %v405
      %428 = vrot.lane.b32.xlu0 %v426, 80
      %v429 = vpop.permute.xlu0 %428
      %vm430 = vcmask 97280
      %v432 = vsel %vm430, %v425, 0
      %v435 = vsel %vm430, %v429, 0
      %437 = vmatpush.bf16.xpose.msra.mxu0 0
      %438 = vmatpush.bf16.xpose.msra.mxu0 0
      %439 = vmatpush.bf16.xpose.msra.mxu0 0
      %440 = vmatpush.bf16.xpose.msra.mxu0 0
      %441 = vmatpush.bf16.xpose.msra.mxu0 0
      %442 = vmatpush.bf16.xpose.msra.mxu0 0
      %443 = vmatpush.bf16.xpose.msra.mxu0 0
      %444 = vmatpush.bf16.xpose.msra.mxu0 %v435
      %445 = vmatmul.bf16.gmra.mxu0 %v432
      %v446 = vpop.f32.mrf.mxu0
      %v447 = vadd.f32 0.0, %v446
      %v448 = vpop.f32.mrf.mxu0
      %v449 = vadd.f32 0.0, %v448
      %450 = vdwg.mxu0
      %v451 = vsel %vm430, %v447, -inf
      %452 = vmax.xlane.f32.xlu0 %v451
      %v453 = vpop.xlane.xlu0 %452
      %vm454 = vcmask 93184
      %v455 = vsel %vm454, %v449, -inf
      %456 = vmax.xlane.f32.xlu0 %v455
      %v457 = vpop.xlane.xlu0 %456
      %v458 = vsub.f32 %v447, %v453
      %v459 = vsub.f32 %v449, %v457
      %v460 = vmul.f32 %v458, 1.442695
      %v461 = vpow.pop %v460
      %v462 = vmul.f32 %v459, 1.442695
      %v463 = vpow.pop %v462
      %v464 = vsel %vm430, %v461, 0.0
      %465 = vadd.xlane.f32.xlu0 %v464
      %v466 = vpop.xlane.xlu0 %465
      %v467 = vsel %vm454, %v463, 0.0
      %468 = vadd.xlane.f32.xlu0 %v467
      %v469 = vpop.xlane.xlu0 %468
      %v470 = vrcp.pop %v466
      %v471 = vmul.f32 %v466, %v470
      %v472 = vsub.f32 1.0, %v471
      %v473 = vmul.f32 %v470, %v472
      %v474 = vadd.f32 %v470, %v473
      %vm475 = vweird.f32 %v466
      %vm476 = vweird.f32 %v470
      %vm477 = vmor %vm475, %vm476
      %v478 = vsel %vm477, %v470, %v474
      %v479 = vand.u32 2147483647, %v466
      %vm480 = vcmp.eq.f32.partialorder %v479, 8.507059e+37
      %v481 = vand.u32 %v466, 2147483648
      %v482 = vor.u32 1.1754944e-38, %v481
      %v483 = vsel %vm480, %v482, %v478
      %v484 = vmul.f32 %v461, %v483
      %v485 = vrcp.pop %v469
      %v486 = vmul.f32 %v469, %v485
      %v487 = vsub.f32 1.0, %v486
      %v488 = vmul.f32 %v485, %v487
      %v489 = vadd.f32 %v485, %v488
      %vm490 = vweird.f32 %v469
      %vm491 = vweird.f32 %v485
      %vm492 = vmor %vm490, %vm491
      %v493 = vsel %vm492, %v485, %v489
      %v494 = vand.u32 2147483647, %v469
      %vm495 = vcmp.eq.f32.partialorder %v494, 8.507059e+37
      %v496 = vand.u32 %v469, 2147483648
      %v497 = vor.u32 1.1754944e-38, %v496
      %v498 = vsel %vm495, %v497, %v493
      %v499 = vmul.f32 %v463, %v498
      %v500 = vpack.c.bf16 %v499, %v484
      %501 = vrot.lane.b32.xlu0 %v426, 32
      %v502 = vpop.permute.xlu0 %501
      %v504 = vsel %vm430, %v500, 0
      %vm506 = vcmask 1045504
      %v508 = vsel %vm506, %v502, 0
      %510 = vmatpush.bf16.msra.mxu0 0
      %511 = vmatpush.bf16.msra.mxu0 0
      %512 = vmatpush.bf16.msra.mxu0 0
      %513 = vmatpush.bf16.msra.mxu0 0
      %514 = vmatpush.bf16.msra.mxu0 0
      %515 = vmatpush.bf16.msra.mxu0 0
      %516 = vmatpush.bf16.msra.mxu0 0
      %517 = vmatpush.bf16.msra.mxu0 %v508
      %518 = vmatmul.bf16.gmra.mxu0 %v504
      %v519 = vpop.f32.mrf.mxu0
      %v520 = vadd.f32 0.0, %v519
      %v521 = vpop.f32.mrf.mxu0
      %v522 = vadd.f32 0.0, %v521
      %523 = vdwg.mxu0
      %v524 = vpack.c.bf16 %v522, %v520
      %v525 = vld [vmem:[%s3] sm:$0xf]
      %v526 = vld [vmem:[%s3 + $0x4] sm:$0x3]
      %v529 = vunpack.c.l.b16 %v525
      %v530 = vunpack.c.l.b16 %v526
      %v531 = vpack.c.b16 %v530, %v529
      %v533 = vsel %vm430, %v524, 0
      %v536 = vsel %vm506, %v531, 0
      %538 = vmatpush.bf16.msra.mxu0 0
      %539 = vmatpush.bf16.msra.mxu0 0
      %540 = vmatpush.bf16.msra.mxu0 0
      %541 = vmatpush.bf16.msra.mxu0 0
      %542 = vmatpush.bf16.msra.mxu0 0
      %543 = vmatpush.bf16.msra.mxu0 0
      %544 = vmatpush.bf16.msra.mxu0 0
      %545 = vmatpush.bf16.msra.mxu0 %v536
      %546 = vmatmul.bf16.gmra.mxu0 %v533
      %v547 = vpop.f32.mrf.mxu0
      %v548 = vadd.f32 0.0, %v547
      %v549 = vpop.f32.mrf.mxu0
      %v550 = vadd.f32 0.0, %v549
      %551 = vdwg.mxu0
      %552 = vst.msk [vmem:[#allocation2] sm:$0xff] %vm284, %v548
      %553 = vst.msk [vmem:[#allocation2 + $0x8] sm:$0xf] %vm288, %v550
      %555 = vrot.lane.b32.xlu0 %v425, 116
      %v556 = vpop.permute.xlu0 %555
      %557 = vrot.lane.b32.xlu0 %v426, 68
      %v558 = vpop.permute.xlu0 %557
      %v560 = vsel %vm430, %v556, 0
      %v563 = vsel %vm430, %v558, 0
      %565 = vmatpush.bf16.xpose.msra.mxu0 0
      %566 = vmatpush.bf16.xpose.msra.mxu0 0
      %567 = vmatpush.bf16.xpose.msra.mxu0 0
      %568 = vmatpush.bf16.xpose.msra.mxu0 0
      %569 = vmatpush.bf16.xpose.msra.mxu0 0
      %570 = vmatpush.bf16.xpose.msra.mxu0 0
      %571 = vmatpush.bf16.xpose.msra.mxu0 0
      %572 = vmatpush.bf16.xpose.msra.mxu0 %v563
      %573 = vmatmul.bf16.gmra.mxu0 %v560
      %v574 = vpop.f32.mrf.mxu0
      %v575 = vadd.f32 0.0, %v574
      %v576 = vpop.f32.mrf.mxu0
      %v577 = vadd.f32 0.0, %v576
      %578 = vdwg.mxu0
      %v579 = vsel %vm430, %v575, -inf
      %580 = vmax.xlane.f32.xlu0 %v579
      %v581 = vpop.xlane.xlu0 %580
      %v582 = vsel %vm454, %v577, -inf
      %583 = vmax.xlane.f32.xlu0 %v582
      %v584 = vpop.xlane.xlu0 %583
      %v585 = vsub.f32 %v575, %v581
      %v586 = vsub.f32 %v577, %v584
      %v587 = vmul.f32 %v585, 1.442695
      %v588 = vpow.pop %v587
      %v589 = vmul.f32 %v586, 1.442695
      %v590 = vpow.pop %v589
      %v591 = vsel %vm430, %v588, 0.0
      %592 = vadd.xlane.f32.xlu0 %v591
      %v593 = vpop.xlane.xlu0 %592
      %v594 = vsel %vm454, %v590, 0.0
      %595 = vadd.xlane.f32.xlu0 %v594
      %v596 = vpop.xlane.xlu0 %595
      %v597 = vrcp.pop %v593
      %v598 = vmul.f32 %v593, %v597
      %v599 = vsub.f32 1.0, %v598
      %v600 = vmul.f32 %v597, %v599
      %v601 = vadd.f32 %v597, %v600
      %vm602 = vweird.f32 %v593
      %vm603 = vweird.f32 %v597
      %vm604 = vmor %vm602, %vm603
      %v605 = vsel %vm604, %v597, %v601
      %v606 = vand.u32 2147483647, %v593
      %vm607 = vcmp.eq.f32.partialorder %v606, 8.507059e+37
      %v608 = vand.u32 %v593, 2147483648
      %v609 = vor.u32 1.1754944e-38, %v608
      %v610 = vsel %vm607, %v609, %v605
      %v611 = vmul.f32 %v588, %v610
      %v612 = vrcp.pop %v596
      %v613 = vmul.f32 %v596, %v612
      %v614 = vsub.f32 1.0, %v613
      %v615 = vmul.f32 %v612, %v614
      %v616 = vadd.f32 %v612, %v615
      %vm617 = vweird.f32 %v596
      %vm618 = vweird.f32 %v612
      %vm619 = vmor %vm617, %vm618
      %v620 = vsel %vm619, %v612, %v616
      %v621 = vand.u32 2147483647, %v596
      %vm622 = vcmp.eq.f32.partialorder %v621, 8.507059e+37
      %v623 = vand.u32 %v596, 2147483648
      %v624 = vor.u32 1.1754944e-38, %v623
      %v625 = vsel %vm622, %v624, %v620
      %v626 = vmul.f32 %v590, %v625
      %v627 = vpack.c.bf16 %v626, %v611
      %628 = vrot.lane.b32.xlu0 %v426, 20
      %v629 = vpop.permute.xlu0 %628
      %v631 = vsel %vm430, %v627, 0
      %v634 = vsel %vm506, %v629, 0
      %636 = vmatpush.bf16.msra.mxu0 0
      %637 = vmatpush.bf16.msra.mxu0 0
      %638 = vmatpush.bf16.msra.mxu0 0
      %639 = vmatpush.bf16.msra.mxu0 0
      %640 = vmatpush.bf16.msra.mxu0 0
      %641 = vmatpush.bf16.msra.mxu0 0
      %642 = vmatpush.bf16.msra.mxu0 0
      %643 = vmatpush.bf16.msra.mxu0 %v634
      %644 = vmatmul.bf16.gmra.mxu0 %v631
      %v645 = vpop.f32.mrf.mxu0
      %v646 = vadd.f32 0.0, %v645
      %v647 = vpop.f32.mrf.mxu0
      %v648 = vadd.f32 0.0, %v647
      %649 = vdwg.mxu0
      %v650 = vpack.c.bf16 %v648, %v646
      %s651 = scalar_lea.vmem %s3, 8
      %v652 = vld [vmem:[%s651] sm:$0xf]
      %v653 = vld [vmem:[%s651 + $0x4] sm:$0x3]
      %v656 = vunpack.c.l.b16 %v652
      %v657 = vunpack.c.l.b16 %v653
      %v658 = vpack.c.b16 %v657, %v656
      %v660 = vsel %vm430, %v650, 0
      %v663 = vsel %vm506, %v658, 0
      %665 = vmatpush.bf16.msra.mxu0 0
      %666 = vmatpush.bf16.msra.mxu0 0
      %667 = vmatpush.bf16.msra.mxu0 0
      %668 = vmatpush.bf16.msra.mxu0 0
      %669 = vmatpush.bf16.msra.mxu0 0
      %670 = vmatpush.bf16.msra.mxu0 0
      %671 = vmatpush.bf16.msra.mxu0 0
      %672 = vmatpush.bf16.msra.mxu0 %v663
      %673 = vmatmul.bf16.gmra.mxu0 %v660
      %v674 = vpop.f32.mrf.mxu0
      %v675 = vadd.f32 0.0, %v674
      %v676 = vpop.f32.mrf.mxu0
      %v677 = vadd.f32 0.0, %v676
      %678 = vdwg.mxu0
      %v679 = vld [vmem:[#allocation2] sm:$0xff]
      %v680 = vld [vmem:[#allocation2 + $0x8] sm:$0xf]
      %v681 = vadd.f32 %v679, %v675
      %v682 = vadd.f32 %v680, %v677
      %683 = vst.msk [vmem:[#allocation2] sm:$0xff] %vm284, %v681
      %684 = vst.msk [vmem:[#allocation2 + $0x8] sm:$0xf] %vm288, %v682
      %v685 = vpack.c.bf16 %v421, %v419
      %686 = vrot.lane.b32.xlu0 %v425, 104
      %v687 = vpop.permute.xlu0 %686
      %688 = vrot.lane.b32.xlu0 %v426, 56
      %v689 = vpop.permute.xlu0 %688
      %v691 = vsel %vm430, %v687, 0
      %v694 = vsel %vm430, %v689, 0
      %696 = vmatpush.bf16.xpose.msra.mxu0 0
      %697 = vmatpush.bf16.xpose.msra.mxu0 0
      %698 = vmatpush.bf16.xpose.msra.mxu0 0
      %699 = vmatpush.bf16.xpose.msra.mxu0 0
      %700 = vmatpush.bf16.xpose.msra.mxu0 0
      %701 = vmatpush.bf16.xpose.msra.mxu0 0
      %702 = vmatpush.bf16.xpose.msra.mxu0 0
      %703 = vmatpush.bf16.xpose.msra.mxu0 %v694
      %704 = vmatmul.bf16.gmra.mxu0 %v691
      %v705 = vpop.f32.mrf.mxu0
      %v706 = vadd.f32 0.0, %v705
      %v707 = vpop.f32.mrf.mxu0
      %v708 = vadd.f32 0.0, %v707
      %709 = vdwg.mxu0
      %v710 = vsel %vm430, %v706, -inf
      %711 = vmax.xlane.f32.xlu0 %v710
      %v712 = vpop.xlane.xlu0 %711
      %v713 = vsel %vm454, %v708, -inf
      %714 = vmax.xlane.f32.xlu0 %v713
      %v715 = vpop.xlane.xlu0 %714
      %v716 = vsub.f32 %v706, %v712
      %v717 = vsub.f32 %v708, %v715
      %v718 = vmul.f32 %v716, 1.442695
      %v719 = vpow.pop %v718
      %v720 = vmul.f32 %v717, 1.442695
      %v721 = vpow.pop %v720
      %v722 = vsel %vm430, %v719, 0.0
      %723 = vadd.xlane.f32.xlu0 %v722
      %v724 = vpop.xlane.xlu0 %723
      %v725 = vsel %vm454, %v721, 0.0
      %726 = vadd.xlane.f32.xlu0 %v725
      %v727 = vpop.xlane.xlu0 %726
      %v728 = vrcp.pop %v724
      %v729 = vmul.f32 %v724, %v728
      %v730 = vsub.f32 1.0, %v729
      %v731 = vmul.f32 %v728, %v730
      %v732 = vadd.f32 %v728, %v731
      %vm733 = vweird.f32 %v724
      %vm734 = vweird.f32 %v728
      %vm735 = vmor %vm733, %vm734
      %v736 = vsel %vm735, %v728, %v732
      %v737 = vand.u32 2147483647, %v724
      %vm738 = vcmp.eq.f32.partialorder %v737, 8.507059e+37
      %v739 = vand.u32 %v724, 2147483648
      %v740 = vor.u32 1.1754944e-38, %v739
      %v741 = vsel %vm738, %v740, %v736
      %v742 = vmul.f32 %v719, %v741
      %v743 = vrcp.pop %v727
      %v744 = vmul.f32 %v727, %v743
      %v745 = vsub.f32 1.0, %v744
      %v746 = vmul.f32 %v743, %v745
      %v747 = vadd.f32 %v743, %v746
      %vm748 = vweird.f32 %v727
      %vm749 = vweird.f32 %v743
      %vm750 = vmor %vm748, %vm749
      %v751 = vsel %vm750, %v743, %v747
      %v752 = vand.u32 2147483647, %v727
      %vm753 = vcmp.eq.f32.partialorder %v752, 8.507059e+37
      %v754 = vand.u32 %v727, 2147483648
      %v755 = vor.u32 1.1754944e-38, %v754
      %v756 = vsel %vm753, %v755, %v751
      %v757 = vmul.f32 %v721, %v756
      %v758 = vpack.c.bf16 %v757, %v742
      %760 = vrot.lane.b32.xlu0 %v426, 8
      %v761 = vpop.permute.xlu0 %760
      %762 = vrot.lane.b32.xlu0 %v685, 8
      %v763 = vpop.permute.xlu0 %762
      %vm764 = vcmask 64512
      %v765 = vsel %vm764, %v761, %v763
      %v767 = vsel %vm430, %v758, 0
      %v770 = vsel %vm506, %v765, 0
      %772 = vmatpush.bf16.msra.mxu0 0
      %773 = vmatpush.bf16.msra.mxu0 0
      %774 = vmatpush.bf16.msra.mxu0 0
      %775 = vmatpush.bf16.msra.mxu0 0
      %776 = vmatpush.bf16.msra.mxu0 0
      %777 = vmatpush.bf16.msra.mxu0 0
      %778 = vmatpush.bf16.msra.mxu0 0
      %779 = vmatpush.bf16.msra.mxu0 %v770
      %780 = vmatmul.bf16.gmra.mxu0 %v767
      %v781 = vpop.f32.mrf.mxu0
      %v782 = vadd.f32 0.0, %v781
      %v783 = vpop.f32.mrf.mxu0
      %v784 = vadd.f32 0.0, %v783
      %785 = vdwg.mxu0
      %v786 = vpack.c.bf16 %v784, %v782
      %s787 = scalar_lea.vmem %s3, 16
      %v788 = vld [vmem:[%s787] sm:$0xf]
      %v789 = vld [vmem:[%s787 + $0x4] sm:$0x3]
      %v792 = vunpack.c.l.b16 %v788
      %v793 = vunpack.c.l.b16 %v789
      %v794 = vpack.c.b16 %v793, %v792
      %v796 = vsel %vm430, %v786, 0
      %v799 = vsel %vm506, %v794, 0
      %801 = vmatpush.bf16.msra.mxu0 0
      %802 = vmatpush.bf16.msra.mxu0 0
      %803 = vmatpush.bf16.msra.mxu0 0
      %804 = vmatpush.bf16.msra.mxu0 0
      %805 = vmatpush.bf16.msra.mxu0 0
      %806 = vmatpush.bf16.msra.mxu0 0
      %807 = vmatpush.bf16.msra.mxu0 0
      %808 = vmatpush.bf16.msra.mxu0 %v799
      %809 = vmatmul.bf16.gmra.mxu0 %v796
      %v810 = vpop.f32.mrf.mxu0
      %v811 = vadd.f32 0.0, %v810
      %v812 = vpop.f32.mrf.mxu0
      %v813 = vadd.f32 0.0, %v812
      %814 = vdwg.mxu0
      %v815 = vld [vmem:[#allocation2] sm:$0xff]
      %v816 = vld [vmem:[#allocation2 + $0x8] sm:$0xf]
      %v817 = vadd.f32 %v815, %v811
      %v818 = vadd.f32 %v816, %v813
      %819 = vst.msk [vmem:[#allocation2] sm:$0xff] %vm284, %v817
      %820 = vst.msk [vmem:[#allocation2 + $0x8] sm:$0xf] %vm288, %v818
      %821 = vrot.lane.b32.xlu0 %v425, 92
      %v822 = vpop.permute.xlu0 %821
      %823 = vrot.lane.b32.xlu0 %v426, 44
      %v824 = vpop.permute.xlu0 %823
      %v826 = vsel %vm430, %v822, 0
      %v829 = vsel %vm430, %v824, 0
      %831 = vmatpush.bf16.xpose.msra.mxu0 0
      %832 = vmatpush.bf16.xpose.msra.mxu0 0
      %833 = vmatpush.bf16.xpose.msra.mxu0 0
      %834 = vmatpush.bf16.xpose.msra.mxu0 0
      %835 = vmatpush.bf16.xpose.msra.mxu0 0
      %836 = vmatpush.bf16.xpose.msra.mxu0 0
      %837 = vmatpush.bf16.xpose.msra.mxu0 0
      %838 = vmatpush.bf16.xpose.msra.mxu0 %v829
      %839 = vmatmul.bf16.gmra.mxu0 %v826
      %v840 = vpop.f32.mrf.mxu0
      %v841 = vadd.f32 0.0, %v840
      %v842 = vpop.f32.mrf.mxu0
      %v843 = vadd.f32 0.0, %v842
      %844 = vdwg.mxu0
      %v845 = vsel %vm430, %v841, -inf
      %846 = vmax.xlane.f32.xlu0 %v845
      %v847 = vpop.xlane.xlu0 %846
      %v848 = vsel %vm454, %v843, -inf
      %849 = vmax.xlane.f32.xlu0 %v848
      %v850 = vpop.xlane.xlu0 %849
      %v851 = vsub.f32 %v841, %v847
      %v852 = vsub.f32 %v843, %v850
      %v853 = vmul.f32 %v851, 1.442695
      %v854 = vpow.pop %v853
      %v855 = vmul.f32 %v852, 1.442695
      %v856 = vpow.pop %v855
      %v857 = vsel %vm430, %v854, 0.0
      %858 = vadd.xlane.f32.xlu0 %v857
      %v859 = vpop.xlane.xlu0 %858
      %v860 = vsel %vm454, %v856, 0.0
      %861 = vadd.xlane.f32.xlu0 %v860
      %v862 = vpop.xlane.xlu0 %861
      %v863 = vrcp.pop %v859
      %v864 = vmul.f32 %v859, %v863
      %v865 = vsub.f32 1.0, %v864
      %v866 = vmul.f32 %v863, %v865
      %v867 = vadd.f32 %v863, %v866
      %vm868 = vweird.f32 %v859
      %vm869 = vweird.f32 %v863
      %vm870 = vmor %vm868, %vm869
      %v871 = vsel %vm870, %v863, %v867
      %v872 = vand.u32 2147483647, %v859
      %vm873 = vcmp.eq.f32.partialorder %v872, 8.507059e+37
      %v874 = vand.u32 %v859, 2147483648
      %v875 = vor.u32 1.1754944e-38, %v874
      %v876 = vsel %vm873, %v875, %v871
      %v877 = vmul.f32 %v854, %v876
      %v878 = vrcp.pop %v862
      %v879 = vmul.f32 %v862, %v878
      %v880 = vsub.f32 1.0, %v879
      %v881 = vmul.f32 %v878, %v880
      %v882 = vadd.f32 %v878, %v881
      %vm883 = vweird.f32 %v862
      %vm884 = vweird.f32 %v878
      %vm885 = vmor %vm883, %vm884
      %v886 = vsel %vm885, %v878, %v882
      %v887 = vand.u32 2147483647, %v862
      %vm888 = vcmp.eq.f32.partialorder %v887, 8.507059e+37
      %v889 = vand.u32 %v862, 2147483648
      %v890 = vor.u32 1.1754944e-38, %v889
      %v891 = vsel %vm888, %v890, %v886
      %v892 = vmul.f32 %v856, %v891
      %v893 = vpack.c.bf16 %v892, %v877
      %894 = vrot.lane.b32.xlu0 %v685, 124
      %v895 = vpop.permute.xlu0 %894
      %v897 = vsel %vm430, %v893, 0
      %v900 = vsel %vm506, %v895, 0
      %902 = vmatpush.bf16.msra.mxu0 0
      %903 = vmatpush.bf16.msra.mxu0 0
      %904 = vmatpush.bf16.msra.mxu0 0
      %905 = vmatpush.bf16.msra.mxu0 0
      %906 = vmatpush.bf16.msra.mxu0 0
      %907 = vmatpush.bf16.msra.mxu0 0
      %908 = vmatpush.bf16.msra.mxu0 0
      %909 = vmatpush.bf16.msra.mxu0 %v900
      %910 = vmatmul.bf16.gmra.mxu0 %v897
      %v911 = vpop.f32.mrf.mxu0
      %v912 = vadd.f32 0.0, %v911
      %v913 = vpop.f32.mrf.mxu0
      %v914 = vadd.f32 0.0, %v913
      %915 = vdwg.mxu0
      %v916 = vpack.c.bf16 %v914, %v912
      %s917 = scalar_lea.vmem %s3, 24
      %v918 = vld [vmem:[%s917] sm:$0xf]
      %v919 = vld [vmem:[%s917 + $0x4] sm:$0x3]
      %v922 = vunpack.c.l.b16 %v918
      %v923 = vunpack.c.l.b16 %v919
      %v924 = vpack.c.b16 %v923, %v922
      %v926 = vsel %vm430, %v916, 0
      %v929 = vsel %vm506, %v924, 0
      %931 = vmatpush.bf16.msra.mxu0 0
      %932 = vmatpush.bf16.msra.mxu0 0
      %933 = vmatpush.bf16.msra.mxu0 0
      %934 = vmatpush.bf16.msra.mxu0 0
      %935 = vmatpush.bf16.msra.mxu0 0
      %936 = vmatpush.bf16.msra.mxu0 0
      %937 = vmatpush.bf16.msra.mxu0 0
      %938 = vmatpush.bf16.msra.mxu0 %v929
      %939 = vmatmul.bf16.gmra.mxu0 %v926
      %v940 = vpop.f32.mrf.mxu0
      %v941 = vadd.f32 0.0, %v940
      %v942 = vpop.f32.mrf.mxu0
      %v943 = vadd.f32 0.0, %v942
      %944 = vdwg.mxu0
      %v945 = vld [vmem:[#allocation2] sm:$0xff]
      %v946 = vld [vmem:[#allocation2 + $0x8] sm:$0xf]
      %v947 = vadd.f32 %v945, %v941
      %v948 = vadd.f32 %v946, %v943
      %949 = vst.msk [vmem:[#allocation2] sm:$0xff] %vm284, %v947
      %950 = vst.msk [vmem:[#allocation2 + $0x8] sm:$0xf] %vm288, %v948
      %v951 = vld [vmem:[%s273] sm:$0xf]
      %v952 = vld [vmem:[%s273 + $0x4] sm:$0x3]
      %v953 = vunpack.c.l.bf16 %v951
      %v954 = vunpack.c.l.bf16 %v952
      %v955 = vld [vmem:[#allocation2] sm:$0xff]
      %v956 = vld [vmem:[#allocation2 + $0x8] sm:$0xf]
      %v957 = vadd.f32 %v953, %v955
      %v958 = vadd.f32 %v954, %v956
      %v959 = vld [vmem:[%s4] sm:$0x1]
      %v961 = vperm.slane %v959, 0
      %v963 = vadd.f32 %v957, %v961
      %v964 = vadd.f32 %v958, %v961
      %v965 = vpack.c.bf16 %v963, %v963
      %v966 = vpack.c.bf16 %v964, %v964
      %967 = vst.msk [vmem:[%s278] sm:$0xf] %vm288, %v965
      %vm968 = vcmask 386048
      %969 = vst.msk [vmem:[%s278 + $0x4] sm:$0x3] %vm968, %v966
      %p970 = scmp.lt.s32.totalorder %s18, 1
      %s971 = scalar_select %p970, %s18, 1
      %s972 = smul.addr %s971, 2
      %s973 = smul.addr %s972, 4
      %s974 = scalar_lea.vmem %s7, %s973
      // Predicated region
      $region49: #{_lambda_.15} parent=47 // pred_check
        %p975 = pneg %p188
      $region50: #{_lambda_.15} parent=47 // pred_check_branch
        %977 = sbr.rel (%p975) target = $region52
      $region51: #{_lambda_.15} parent=47 // pred_region
        _
      $region52: #{_lambda_.15} parent=47 // pred_fallthru
        _
    $region48: #{_lambda_.15} parent=5 // pred_fallthru
      _
    %p978 = scmp.le.s32.totalorder 2, %s13
    // Predicated region
    $region53: #{_lambda_.15} parent=5 // pred_check
      %p979 = pneg %p978
    $region54: #{_lambda_.15} parent=5 // pred_check_branch
      %981 = sbr.rel (%p979) target = $region56
    $region55: #{_lambda_.15} parent=5 // pred_region
      %s982 = ssub.s32 %s13, 2
      // Predicated region
      $region57: #{_lambda_.15} parent=55 // pred_check
        %p983 = pneg %p194
      $region58: #{_lambda_.15} parent=55 // pred_check_branch
        %985 = sbr.rel (%p983) target = $region60
      $region59: #{_lambda_.15} parent=55 // pred_region
        %p986 = scmp.lt.s32.totalorder %s19, 1
        %s987 = scalar_select %p986, %s19, 1
        %s988 = smul.addr %s987, 2
        %s989 = smul.addr %s988, 4
        %s990 = scalar_lea.vmem %s7, %s989
      $region60: #{_lambda_.15} parent=55 // pred_fallthru
        _
    $region56: #{_lambda_.15} parent=5 // pred_fallthru
      _
  $region6: #{_lambda_.15} parent=0 // loop_footer
    %s17 = sadd.s32 1, %s13
  $region7: #{_lambda_.15} parent=0 // loop_footer_branch
    %12 = sbr.rel target = $region3
  $region8: #{_lambda_.15} parent=0 // loop_exit
    _

// kernel: _lambda_.16
$region0: #{_lambda_.16}
  #allocation0 [shape = 'u32[]', space=smem, size = 0x4, offset = 0x4, fixed_abs, tag = 'smem constant byte address 0x4 - core index']
  #allocation1 [shape = 'u32[72,128]{1,0:T(1,128)}', space=vmem, size = 0x9000, scoped, tag = 'internal scratch']
  #allocation2 [shape = 'f32[24,96]{1,0:T(8,128)}', space=vmem, size = 0x3000, scoped, tag = 'scratch operand']
  %s0 = inlined_call_operand.vmem [shape: bf16[24,48], index: 0, kind: input, shape index: {}]
  %s1 = inlined_call_operand.vmem [shape: bf16[48,96], index: 1, kind: input, shape index: {}]
  %s2 = inlined_call_operand.vmem [shape: f32[1,96], index: 2, kind: input, shape index: {}]
  %s3 = inlined_call_operand.vmem [shape: f32[1,48], index: 3, kind: input, shape index: {}]
  %s4 = inlined_call_operand.vmem [shape: f32[1,48], index: 4, kind: input, shape index: {}]
  %s5 = inlined_call_operand.vmem [shape: bf16[24,96], index: 5, kind: output, shape index: {}]
  %s6 = sld [smem:[#allocation0]]
  $region38: #{_lambda_.16} parent=0
    _
  %s8 = ssub.s32 1, %s6
  %s9 = scalar_select 0, %s8, %s6
  // Predicated region
  $region2: #{_lambda_.16} parent=0 // pred_check
    _
  $region3: #{_lambda_.16} parent=0 // pred_check_branch
    %11 = sbr.rel (0) target = $region5
  $region4: #{_lambda_.16} parent=0 // pred_region
    _
  $region5: #{_lambda_.16} parent=0 // pred_fallthru
    _
  // Predicated region
  $region6: #{_lambda_.16} parent=0 // pred_check
    _
  $region7: #{_lambda_.16} parent=0 // pred_check_branch
    %13 = sbr.rel (0) target = $region9
  $region8: #{_lambda_.16} parent=0 // pred_region
    _
  $region9: #{_lambda_.16} parent=0 // pred_fallthru
    _
  // Predicated region
  $region10: #{_lambda_.16} parent=0 // pred_check
    _
  $region11: #{_lambda_.16} parent=0 // pred_check_branch
    %15 = sbr.rel (0) target = $region13
  $region12: #{_lambda_.16} parent=0 // pred_region
    _
  $region13: #{_lambda_.16} parent=0 // pred_fallthru
    _
  // Predicated region
  $region14: #{_lambda_.16} parent=0 // pred_check
    _
  $region15: #{_lambda_.16} parent=0 // pred_check_branch
    %17 = sbr.rel (0) target = $region17
  $region16: #{_lambda_.16} parent=0 // pred_region
    _
  $region17: #{_lambda_.16} parent=0 // pred_fallthru
    _
  // Predicated region
  $region18: #{_lambda_.16} parent=0 // pred_check
    _
  $region19: #{_lambda_.16} parent=0 // pred_check_branch
    %19 = sbr.rel (0) target = $region21
  $region20: #{_lambda_.16} parent=0 // pred_region
    _
  $region21: #{_lambda_.16} parent=0 // pred_fallthru
    _
  %p21 = scmp.eq.s32.totalorder 0, 0
  // Predicated region
  $region22: #{_lambda_.16} parent=0 // pred_check
    %p22 = pneg %p21
  $region23: #{_lambda_.16} parent=0 // pred_check_branch
    %24 = sbr.rel (%p22) target = $region25
  $region24: #{_lambda_.16} parent=0 // pred_region
    %vm25 = vcmask 785408
    %26 = vst.msk [vmem:[#allocation2] sm:$0xff] %vm25, 0.0
    %27 = vst.msk [vmem:[#allocation2 + $0x8] sm:$0xff] %vm25, 0.0
    %28 = vst.msk [vmem:[#allocation2 + $0x10] sm:$0xff] %vm25, 0.0
  $region25: #{_lambda_.16} parent=0 // pred_fallthru
    _
  %v29 = vld [vmem:[%s0] sm:$0xf]
  %v30 = vld [vmem:[%s0 + $0x4] sm:$0xf]
  %v31 = vld [vmem:[%s0 + $0x8] sm:$0xf]
  %v32 = vunpack.c.l.bf16 %v29
  %v33 = vunpack.c.l.bf16 %v30
  %v34 = vunpack.c.l.bf16 %v31
  %vm35 = vcmask 392192
  %v36 = vsel %vm35, %v32, 0.0
  %37 = vadd.xlane.f32.xlu0 %v36
  %v38 = vpop.xlane.xlu0 %37
  %v39 = vsel %vm35, %v33, 0.0
  %40 = vadd.xlane.f32.xlu0 %v39
  %v41 = vpop.xlane.xlu0 %40
  %v42 = vsel %vm35, %v34, 0.0
  %43 = vadd.xlane.f32.xlu0 %v42
  %v44 = vpop.xlane.xlu0 %43
  %v45 = vrcp.pop 48.0
  %v46 = vmul.f32 48.0, %v45
  %v47 = vsub.f32 1.0, %v46
  %v48 = vmul.f32 %v45, %v47
  %v49 = vadd.f32 %v45, %v48
  %vm50 = vweird.f32 %v45
  %v51 = vsel %vm50, %v45, %v49
  %v52 = vmul.f32 %v38, %v51
  %v53 = vmul.f32 %v41, %v51
  %v54 = vmul.f32 %v44, %v51
  %v55 = vsub.f32 %v32, %v52
  %v56 = vsub.f32 %v33, %v53
  %v57 = vsub.f32 %v34, %v54
  %v58 = vmul.f32 %v55, %v55
  %v59 = vmul.f32 %v56, %v56
  %v60 = vmul.f32 %v57, %v57
  %v61 = vsel %vm35, %v58, 0.0
  %62 = vadd.xlane.f32.xlu0 %v61
  %v63 = vpop.xlane.xlu0 %62
  %v64 = vsel %vm35, %v59, 0.0
  %65 = vadd.xlane.f32.xlu0 %v64
  %v66 = vpop.xlane.xlu0 %65
  %v67 = vsel %vm35, %v60, 0.0
  %68 = vadd.xlane.f32.xlu0 %v67
  %v69 = vpop.xlane.xlu0 %68
  %v70 = vmul.f32 %v63, %v51
  %v71 = vmul.f32 %v66, %v51
  %v72 = vmul.f32 %v69, %v51
  %v73 = vadd.f32 %v70, 1e-06
  %v74 = vadd.f32 %v71, 1e-06
  %v75 = vadd.f32 %v72, 1e-06
  %v76 = vrsqrt.pop %v73
  %v77 = vmul.f32 %v76, %v73
  %v78 = vmul.f32 %v77, %v76
  %v79 = vmul.f32 0.5, %v78
  %v80 = vsub.f32 1.5, %v79
  %v81 = vmul.f32 %v76, %v80
  %vm82 = vweird.f32 %v73
  %vm83 = vweird.f32 %v76
  %vm84 = vmor %vm82, %vm83
  %v85 = vsel %vm84, %v76, %v81
  %v86 = vrsqrt.pop %v74
  %v87 = vmul.f32 %v86, %v74
  %v88 = vmul.f32 %v87, %v86
  %v89 = vmul.f32 0.5, %v88
  %v90 = vsub.f32 1.5, %v89
  %v91 = vmul.f32 %v86, %v90
  %vm92 = vweird.f32 %v74
  %vm93 = vweird.f32 %v86
  %vm94 = vmor %vm92, %vm93
  %v95 = vsel %vm94, %v86, %v91
  %v96 = vrsqrt.pop %v75
  %v97 = vmul.f32 %v96, %v75
  %v98 = vmul.f32 %v97, %v96
  %v99 = vmul.f32 0.5, %v98
  %v100 = vsub.f32 1.5, %v99
  %v101 = vmul.f32 %v96, %v100
  %vm102 = vweird.f32 %v75
  %vm103 = vweird.f32 %v96
  %vm104 = vmor %vm102, %vm103
  %v105 = vsel %vm104, %v96, %v101
  %v106 = vmul.f32 %v55, %v85
  %v107 = vmul.f32 %v56, %v95
  %v108 = vmul.f32 %v57, %v105
  %v109 = vld [vmem:[%s3] sm:$0x1]
  %v111 = vperm.slane %v109, 0
  %v113 = vmul.f32 %v106, %v111
  %v114 = vmul.f32 %v107, %v111
  %v115 = vmul.f32 %v108, %v111
  %v116 = vld [vmem:[%s4] sm:$0x1]
  %v118 = vperm.slane %v116, 0
  %v120 = vadd.f32 %v113, %v118
  %v121 = vadd.f32 %v114, %v118
  %v122 = vadd.f32 %v115, %v118
  %v123 = vpack.c.bf16 %v121, %v120
  %v124 = vpack.c.bf16 %v122, %v122
  %v125 = vld [vmem:[#allocation2] sm:$0xff]
  %v126 = vld [vmem:[#allocation2 + $0x8] sm:$0xff]
  %v127 = vld [vmem:[#allocation2 + $0x10] sm:$0xff]
  %v128 = vld [vmem:[%s1] sm:$0xf]
  %v129 = vld [vmem:[%s1 + $0x4] sm:$0xf]
  %v130 = vld [vmem:[%s1 + $0x8] sm:$0xf]
  %v131 = vld [vmem:[%s1 + $0xc] sm:$0xf]
  %v132 = vld [vmem:[%s1 + $0x10] sm:$0xf]
  %v133 = vld [vmem:[%s1 + $0x14] sm:$0xf]
  %v140 = vunpack.c.l.b16 %v128
  %v141 = vunpack.c.l.b16 %v129
  %v142 = vunpack.c.l.b16 %v130
  %v143 = vunpack.c.l.b16 %v131
  %v144 = vunpack.c.l.b16 %v132
  %v145 = vunpack.c.l.b16 %v133
  %v146 = vpack.c.b16 %v141, %v140
  %v147 = vpack.c.b16 %v143, %v142
  %v148 = vpack.c.b16 %v145, %v144
  %v153 = vsel %vm35, %v123, 0
  %v156 = vsel %vm35, %v124, 0
  %158 = vmatpush.bf16.msra.mxu0 0
  %159 = vmatpush.bf16.msra.mxu0 0
  %160 = vmatpush.bf16.msra.mxu0 0
  %161 = vmatpush.bf16.msra.mxu0 0
  %162 = vmatpush.bf16.msra.mxu0 0
  %163 = vmatpush.bf16.msra.mxu0 %v148
  %164 = vmatpush.bf16.msra.mxu0 %v147
  %165 = vmatpush.bf16.msra.mxu0 %v146
  %166 = vmatmul.bf16.gmra.mxu0 %v153
  %v167 = vpop.f32.mrf.mxu0
  %v168 = vadd.f32 0.0, %v167
  %v169 = vpop.f32.mrf.mxu0
  %v170 = vadd.f32 0.0, %v169
  %171 = vmatmul.bf16.gmra.mxu0 %v156
  %v172 = vpop.f32.mrf.mxu0
  %v173 = vadd.f32 0.0, %v172
  %v174 = vpop.f32.mrf.mxu0
  %175 = vdwg.mxu0
  %v176 = vadd.f32 %v125, %v168
  %v177 = vadd.f32 %v126, %v170
  %v178 = vadd.f32 %v127, %v173
  %vm179 = vcmask 785408
  %180 = vst.msk [vmem:[#allocation2] sm:$0xff] %vm179, %v176
  %181 = vst.msk [vmem:[#allocation2 + $0x8] sm:$0xff] %vm179, %v177
  %182 = vst.msk [vmem:[#allocation2 + $0x10] sm:$0xff] %vm179, %v178
  // Predicated region
  $region26: #{_lambda_.16} parent=0 // pred_check
    %p183 = pneg %p21
  $region27: #{_lambda_.16} parent=0 // pred_check_branch
    %185 = sbr.rel (%p183) target = $region29
  $region28: #{_lambda_.16} parent=0 // pred_region
    %v186 = vld [vmem:[#allocation2] sm:$0xff]
    %v187 = vld [vmem:[#allocation2 + $0x8] sm:$0xff]
    %v188 = vld [vmem:[#allocation2 + $0x10] sm:$0xff]
    %v189 = vld [vmem:[%s2] sm:$0x1]
    %v191 = vperm.slane %v189, 0
    %v193 = vadd.f32 %v186, %v191
    %v194 = vadd.f32 %v187, %v191
    %v195 = vadd.f32 %v188, %v191
    %v196 = vmul.f32 %v193, 0.5
    %v197 = vmul.f32 %v194, 0.5
    %v198 = vmul.f32 %v195, 0.5
    %v199 = vmul.f32 %v193, 0.044715
    %v200 = vmul.f32 %v194, 0.044715
    %v201 = vmul.f32 %v195, 0.044715
    %v202 = vmul.f32 %v199, %v193
    %v203 = vmul.f32 %v200, %v194
    %v204 = vmul.f32 %v201, %v195
    %v205 = vmul.f32 %v202, %v193
    %v206 = vmul.f32 %v203, %v194
    %v207 = vmul.f32 %v204, %v195
    %v208 = vadd.f32 %v193, %v205
    %v209 = vadd.f32 %v194, %v206
    %v210 = vadd.f32 %v195, %v207
    %v211 = vmul.f32 %v208, 0.7978846
    %v212 = vmul.f32 %v209, 0.7978846
    %v213 = vmul.f32 %v210, 0.7978846
    %v214 = vtanh.pop %v211
    %v215 = vtanh.pop %v212
    %v216 = vtanh.pop %v213
    %v217 = vadd.f32 %v214, 1.0
    %v218 = vadd.f32 %v215, 1.0
    %v219 = vadd.f32 %v216, 1.0
    %v220 = vmul.f32 %v196, %v217
    %v221 = vmul.f32 %v197, %v218
    %v222 = vmul.f32 %v198, %v219
    %v223 = vpack.c.bf16 %v220, %v220
    %v224 = vpack.c.bf16 %v221, %v221
    %v225 = vpack.c.bf16 %v222, %v222
    %vm226 = vcmask 781312
    %227 = vst.msk [vmem:[%s5] sm:$0xf] %vm226, %v223
    %228 = vst.msk [vmem:[%s5 + $0x4] sm:$0xf] %vm226, %v224
    %229 = vst.msk [vmem:[%s5 + $0x8] sm:$0xf] %vm226, %v225
  $region29: #{_lambda_.16} parent=0 // pred_fallthru
    _
  // Predicated region
  $region30: #{_lambda_.16} parent=0 // pred_check
    _
  $region31: #{_lambda_.16} parent=0 // pred_check_branch
    %231 = sbr.rel (0) target = $region33
  $region32: #{_lambda_.16} parent=0 // pred_region
    _
  $region33: #{_lambda_.16} parent=0 // pred_fallthru
    _
  // Predicated region
  $region34: #{_lambda_.16} parent=0 // pred_check
    _
  $region35: #{_lambda_.16} parent=0 // pred_check_branch
    %233 = sbr.rel (0) target = $region37
  $region36: #{_lambda_.16} parent=0 // pred_region
    _
  $region37: #{_lambda_.16} parent=0 // pred_fallthru
    _

// kernel: _lambda_.17
$region0: #{_lambda_.17}
  #allocation0 [shape = 'u32[]', space=smem, size = 0x4, offset = 0x4, fixed_abs, tag = 'smem constant byte address 0x4 - core index']
  #allocation1 [shape = 'u32[72,128]{1,0:T(1,128)}', space=vmem, size = 0x9000, scoped, tag = 'internal scratch']
  #allocation2 [shape = 'f32[24,48]{1,0:T(8,128)}', space=vmem, size = 0x3000, scoped, tag = 'scratch operand']
  %s0 = inlined_call_operand.vmem [shape: bf16[24,96], index: 0, kind: input, shape index: {}]
  %s1 = inlined_call_operand.vmem [shape: bf16[96,48], index: 1, kind: input, shape index: {}]
  %s2 = inlined_call_operand.vmem [shape: f32[1,48], index: 2, kind: input, shape index: {}]
  %s3 = inlined_call_operand.vmem [shape: bf16[24,48], index: 3, kind: input, shape index: {}]
  %s4 = inlined_call_operand.vmem [shape: bf16[24,48], index: 4, kind: output, shape index: {}]
  %s5 = sld [smem:[#allocation0]]
  $region34: #{_lambda_.17} parent=0
    _
  %s7 = ssub.s32 1, %s5
  %s8 = scalar_select 0, %s7, %s5
  // Predicated region
  $region2: #{_lambda_.17} parent=0 // pred_check
    _
  $region3: #{_lambda_.17} parent=0 // pred_check_branch
    %10 = sbr.rel (0) target = $region5
  $region4: #{_lambda_.17} parent=0 // pred_region
    _
  $region5: #{_lambda_.17} parent=0 // pred_fallthru
    _
  // Predicated region
  $region6: #{_lambda_.17} parent=0 // pred_check
    _
  $region7: #{_lambda_.17} parent=0 // pred_check_branch
    %12 = sbr.rel (0) target = $region9
  $region8: #{_lambda_.17} parent=0 // pred_region
    _
  $region9: #{_lambda_.17} parent=0 // pred_fallthru
    _
  // Predicated region
  $region10: #{_lambda_.17} parent=0 // pred_check
    _
  $region11: #{_lambda_.17} parent=0 // pred_check_branch
    %14 = sbr.rel (0) target = $region13
  $region12: #{_lambda_.17} parent=0 // pred_region
    _
  $region13: #{_lambda_.17} parent=0 // pred_fallthru
    _
  // Predicated region
  $region14: #{_lambda_.17} parent=0 // pred_check
    _
  $region15: #{_lambda_.17} parent=0 // pred_check_branch
    %16 = sbr.rel (0) target = $region17
  $region16: #{_lambda_.17} parent=0 // pred_region
    _
  $region17: #{_lambda_.17} parent=0 // pred_fallthru
    _
  %p18 = scmp.eq.s32.totalorder 0, 0
  // Predicated region
  $region18: #{_lambda_.17} parent=0 // pred_check
    %p19 = pneg %p18
  $region19: #{_lambda_.17} parent=0 // pred_check_branch
    %21 = sbr.rel (%p19) target = $region21
  $region20: #{_lambda_.17} parent=0 // pred_region
    %vm22 = vcmask 392192
    %23 = vst.msk [vmem:[#allocation2] sm:$0xff] %vm22, 0.0
    %24 = vst.msk [vmem:[#allocation2 + $0x8] sm:$0xff] %vm22, 0.0
    %25 = vst.msk [vmem:[#allocation2 + $0x10] sm:$0xff] %vm22, 0.0
  $region21: #{_lambda_.17} parent=0 // pred_fallthru
    _
  %v26 = vld [vmem:[%s0] sm:$0xf]
  %v27 = vld [vmem:[%s0 + $0x4] sm:$0xf]
  %v28 = vld [vmem:[%s0 + $0x8] sm:$0xf]
  %v29 = vld [vmem:[#allocation2] sm:$0xff]
  %v30 = vld [vmem:[#allocation2 + $0x8] sm:$0xff]
  %v31 = vld [vmem:[#allocation2 + $0x10] sm:$0xff]
  %v32 = vld [vmem:[%s1] sm:$0xf]
  %v33 = vld [vmem:[%s1 + $0x4] sm:$0xf]
  %v34 = vld [vmem:[%s1 + $0x8] sm:$0xf]
  %v35 = vld [vmem:[%s1 + $0xc] sm:$0xf]
  %v36 = vld [vmem:[%s1 + $0x10] sm:$0xf]
  %v37 = vld [vmem:[%s1 + $0x14] sm:$0xf]
  %v38 = vld [vmem:[%s1 + $0x18] sm:$0xf]
  %v39 = vld [vmem:[%s1 + $0x1c] sm:$0xf]
  %v40 = vld [vmem:[%s1 + $0x20] sm:$0xf]
  %v41 = vld [vmem:[%s1 + $0x24] sm:$0xf]
  %v42 = vld [vmem:[%s1 + $0x28] sm:$0xf]
  %v43 = vld [vmem:[%s1 + $0x2c] sm:$0xf]
  %v47 = vunpack.c.l.b16 %v26
  %v48 = vunpack.c.l.b16 %v27
  %v49 = vunpack.c.l.b16 %v28
  %v50 = vpack.c.b16 %v48, %v47
  %v51 = vpack.c.b16 %v49, %v49
  %v64 = vunpack.c.l.b16 %v32
  %v65 = vunpack.c.l.b16 %v33
  %v66 = vunpack.c.l.b16 %v34
  %v67 = vunpack.c.l.b16 %v35
  %v68 = vunpack.c.l.b16 %v36
  %v69 = vunpack.c.l.b16 %v37
  %v70 = vunpack.c.l.b16 %v38
  %v71 = vunpack.c.l.b16 %v39
  %v72 = vunpack.c.l.b16 %v40
  %v73 = vunpack.c.l.b16 %v41
  %v74 = vunpack.c.l.b16 %v42
  %v75 = vunpack.c.l.b16 %v43
  %v76 = vpack.c.b16 %v65, %v64
  %v77 = vpack.c.b16 %v67, %v66
  %v78 = vpack.c.b16 %v69, %v68
  %v79 = vpack.c.b16 %v71, %v70
  %v80 = vpack.c.b16 %v73, %v72
  %v81 = vpack.c.b16 %v75, %v74
  %vm88 = vcmask 785408
  %v90 = vsel %vm88, %v50, 0
  %v93 = vsel %vm88, %v51, 0
  %95 = vmatpush.bf16.msra.mxu0 0
  %96 = vmatpush.bf16.msra.mxu0 0
  %97 = vmatpush.bf16.msra.mxu0 %v81
  %98 = vmatpush.bf16.msra.mxu0 %v80
  %99 = vmatpush.bf16.msra.mxu0 %v79
  %100 = vmatpush.bf16.msra.mxu0 %v78
  %101 = vmatpush.bf16.msra.mxu0 %v77
  %102 = vmatpush.bf16.msra.mxu0 %v76
  %103 = vmatmul.bf16.gmra.mxu0 %v90
  %v104 = vpop.f32.mrf.mxu0
  %v105 = vadd.f32 0.0, %v104
  %v106 = vpop.f32.mrf.mxu0
  %v107 = vadd.f32 0.0, %v106
  %108 = vmatmul.bf16.gmra.mxu0 %v93
  %v109 = vpop.f32.mrf.mxu0
  %v110 = vadd.f32 0.0, %v109
  %v111 = vpop.f32.mrf.mxu0
  %112 = vdwg.mxu0
  %v113 = vadd.f32 %v29, %v105
  %v114 = vadd.f32 %v30, %v107
  %v115 = vadd.f32 %v31, %v110
  %vm116 = vcmask 392192
  %117 = vst.msk [vmem:[#allocation2] sm:$0xff] %vm116, %v113
  %118 = vst.msk [vmem:[#allocation2 + $0x8] sm:$0xff] %vm116, %v114
  %119 = vst.msk [vmem:[#allocation2 + $0x10] sm:$0xff] %vm116, %v115
  // Predicated region
  $region22: #{_lambda_.17} parent=0 // pred_check
    %p120 = pneg %p18
  $region23: #{_lambda_.17} parent=0 // pred_check_branch
    %122 = sbr.rel (%p120) target = $region25
  $region24: #{_lambda_.17} parent=0 // pred_region
    %v123 = vld [vmem:[#allocation2] sm:$0xff]
    %v124 = vld [vmem:[#allocation2 + $0x8] sm:$0xff]
    %v125 = vld [vmem:[#allocation2 + $0x10] sm:$0xff]
    %v126 = vld [vmem:[%s2] sm:$0x1]
    %v128 = vperm.slane %v126, 0
    %v130 = vadd.f32 %v123, %v128
    %v131 = vadd.f32 %v124, %v128
    %v132 = vadd.f32 %v125, %v128
    %v133 = vld [vmem:[%s3] sm:$0xf]
    %v134 = vld [vmem:[%s3 + $0x4] sm:$0xf]
    %v135 = vld [vmem:[%s3 + $0x8] sm:$0xf]
    %v136 = vunpack.c.l.bf16 %v133
    %v137 = vunpack.c.l.bf16 %v134
    %v138 = vunpack.c.l.bf16 %v135
    %v139 = vadd.f32 %v130, %v136
    %v140 = vadd.f32 %v131, %v137
    %v141 = vadd.f32 %v132, %v138
    %v142 = vpack.c.bf16 %v139, %v139
    %v143 = vpack.c.bf16 %v140, %v140
    %v144 = vpack.c.bf16 %v141, %v141
    %vm145 = vcmask 388096
    %146 = vst.msk [vmem:[%s4] sm:$0xf] %vm145, %v142
    %147 = vst.msk [vmem:[%s4 + $0x4] sm:$0xf] %vm145, %v143
    %148 = vst.msk [vmem:[%s4 + $0x8] sm:$0xf] %vm145, %v144
  $region25: #{_lambda_.17} parent=0 // pred_fallthru
    _
  // Predicated region
  $region26: #{_lambda_.17} parent=0 // pred_check
    _
  $region27: #{_lambda_.17} parent=0 // pred_check_branch
    %150 = sbr.rel (0) target = $region29
  $region28: #{_lambda_.17} parent=0 // pred_region
    _
  $region29: #{_lambda_.17} parent=0 // pred_fallthru
    _
  // Predicated region
  $region30: #{_lambda_.17} parent=0 // pred_check
    _
  $region31: #{_lambda_.17} parent=0 // pred_check_branch
    %152 = sbr.rel (0) target = $region33
  $region32: #{_lambda_.17} parent=0 // pred_region
    _
  $region33: #{_lambda_.17} parent=0 // pred_fallthru
    _

// kernel: _lambda_.21
$region0: #{_lambda_.21}
  #allocation0 [shape = 'u32[]', space=smem, size = 0x4, offset = 0x4, fixed_abs, tag = 'smem constant byte address 0x4 - core index']
  #allocation1 [shape = 'u32[72,128]{1,0:T(1,128)}', space=vmem, size = 0x9000, scoped, tag = 'internal scratch']
  #allocation2 [shape = 'f32[2,10]{1,0:T(2,128)}', space=vmem, size = 0x400, scoped, tag = 'scratch operand']
  %s0 = inlined_call_operand.vmem [shape: bf16[2,48], index: 0, kind: input, shape index: {}]
  %s1 = inlined_call_operand.vmem [shape: bf16[48,10], index: 1, kind: input, shape index: {}]
  %s2 = inlined_call_operand.vmem [shape: f32[1,10], index: 2, kind: input, shape index: {}]
  %s3 = inlined_call_operand.vmem [shape: f32[1,48], index: 3, kind: input, shape index: {}]
  %s4 = inlined_call_operand.vmem [shape: f32[1,48], index: 4, kind: input, shape index: {}]
  %s5 = inlined_call_operand.hbm [shape: f32[2,10], index: 5, kind: output, shape index: {}]
  %s6 = sld [smem:[#allocation0]]
  $region38: #{_lambda_.21} parent=0
    _
  %s8 = ssub.s32 1, %s6
  %s9 = scalar_select 0, %s8, %s6
  $region1: #{_lambda_.21} parent=0
    #allocation3 [shape = 'u8[1024]{0}', space=vmem, size = 0x400, scoped, tag = 'output window, operand 0, single buffered']
    #allocation4 [shape = 's32[1]{0}', space=sflag, size = 0x4, scoped, tag = 'scoped memory for _lambda_.21']
    %10 = vsyncpa [#allocation4], 0
    // Predicated region
    $region2: #{_lambda_.21} parent=1 // pred_check
      _
    $region3: #{_lambda_.21} parent=1 // pred_check_branch
      %12 = sbr.rel (0) target = $region5
    $region4: #{_lambda_.21} parent=1 // pred_region
      _
    $region5: #{_lambda_.21} parent=1 // pred_fallthru
      _
    // Predicated region
    $region6: #{_lambda_.21} parent=1 // pred_check
      _
    $region7: #{_lambda_.21} parent=1 // pred_check_branch
      %14 = sbr.rel (0) target = $region9
    $region8: #{_lambda_.21} parent=1 // pred_region
      _
    $region9: #{_lambda_.21} parent=1 // pred_fallthru
      _
    // Predicated region
    $region10: #{_lambda_.21} parent=1 // pred_check
      _
    $region11: #{_lambda_.21} parent=1 // pred_check_branch
      %16 = sbr.rel (0) target = $region13
    $region12: #{_lambda_.21} parent=1 // pred_region
      _
    $region13: #{_lambda_.21} parent=1 // pred_fallthru
      _
    // Predicated region
    $region14: #{_lambda_.21} parent=1 // pred_check
      _
    $region15: #{_lambda_.21} parent=1 // pred_check_branch
      %18 = sbr.rel (0) target = $region17
    $region16: #{_lambda_.21} parent=1 // pred_region
      _
    $region17: #{_lambda_.21} parent=1 // pred_fallthru
      _
    // Predicated region
    $region18: #{_lambda_.21} parent=1 // pred_check
      _
    $region19: #{_lambda_.21} parent=1 // pred_check_branch
      %20 = sbr.rel (0) target = $region21
    $region20: #{_lambda_.21} parent=1 // pred_region
      _
    $region21: #{_lambda_.21} parent=1 // pred_fallthru
      _
    %p22 = scmp.eq.s32.totalorder 0, 0
    // Predicated region
    $region22: #{_lambda_.21} parent=1 // pred_check
      %p23 = pneg %p22
    $region23: #{_lambda_.21} parent=1 // pred_check_branch
      %25 = sbr.rel (%p23) target = $region25
    $region24: #{_lambda_.21} parent=1 // pred_region
      %vm26 = vcmask 74752
      %27 = vst.msk [vmem:[#allocation2] sm:$0x3] %vm26, 0.0
    $region25: #{_lambda_.21} parent=1 // pred_fallthru
      _
    %v28 = vld [vmem:[%s0] sm:$0x1]
    %v29 = vunpack.c.l.bf16 %v28
    %vm30 = vcmask 386048
    %v31 = vsel %vm30, %v29, 0.0
    %32 = vadd.xlane.f32.xlu0 %v31
    %v33 = vpop.xlane.xlu0 %32
    %v34 = vrcp.pop 48.0
    %v35 = vmul.f32 48.0, %v34
    %v36 = vsub.f32 1.0, %v35
    %v37 = vmul.f32 %v34, %v36
    %v38 = vadd.f32 %v34, %v37
    %vm39 = vweird.f32 %v34
    %v40 = vsel %vm39, %v34, %v38
    %v41 = vmul.f32 %v33, %v40
    %v42 = vsub.f32 %v29, %v41
    %v43 = vmul.f32 %v42, %v42
    %v44 = vsel %vm30, %v43, 0.0
    %45 = vadd.xlane.f32.xlu0 %v44
    %v46 = vpop.xlane.xlu0 %45
    %v47 = vmul.f32 %v46, %v40
    %v48 = vadd.f32 %v47, 1e-06
    %v49 = vrsqrt.pop %v48
    %v50 = vmul.f32 %v49, %v48
    %v51 = vmul.f32 %v50, %v49
    %v52 = vmul.f32 0.5, %v51
    %v53 = vsub.f32 1.5, %v52
    %v54 = vmul.f32 %v49, %v53
    %vm55 = vweird.f32 %v48
    %vm56 = vweird.f32 %v49
    %vm57 = vmor %vm55, %vm56
    %v58 = vsel %vm57, %v49, %v54
    %v59 = vmul.f32 %v42, %v58
    %v60 = vld [vmem:[%s3] sm:$0x1]
    %v62 = vperm.slane %v60, 0
    %v64 = vmul.f32 %v59, %v62
    %v65 = vld [vmem:[%s4] sm:$0x1]
    %v67 = vperm.slane %v65, 0
    %v69 = vadd.f32 %v64, %v67
    %v70 = vpack.c.bf16 %v69, %v69
    %v71 = vld [vmem:[#allocation2] sm:$0x3]
    %v72 = vld [vmem:[%s1] sm:$0xf]
    %v73 = vld [vmem:[%s1 + $0x4] sm:$0xf]
    %v74 = vld [vmem:[%s1 + $0x8] sm:$0xf]
    %v75 = vld [vmem:[%s1 + $0xc] sm:$0xf]
    %v76 = vld [vmem:[%s1 + $0x10] sm:$0xf]
    %v77 = vld [vmem:[%s1 + $0x14] sm:$0xf]
    %v84 = vunpack.c.l.b16 %v72
    %v85 = vunpack.c.l.b16 %v73
    %v86 = vunpack.c.l.b16 %v74
    %v87 = vunpack.c.l.b16 %v75
    %v88 = vunpack.c.l.b16 %v76
    %v89 = vunpack.c.l.b16 %v77
    %v90 = vpack.c.b16 %v85, %v84
    %v91 = vpack.c.b16 %v87, %v86
    %v92 = vpack.c.b16 %v89, %v88
    %vm96 = vcmask 392192
    %v98 = vsel %vm96, %v70, 0
    %100 = vmatpush.bf16.msra.mxu0 0
    %101 = vmatpush.bf16.msra.mxu0 0
    %102 = vmatpush.bf16.msra.mxu0 0
    %103 = vmatpush.bf16.msra.mxu0 0
    %104 = vmatpush.bf16.msra.mxu0 0
    %105 = vmatpush.bf16.msra.mxu0 %v92
    %106 = vmatpush.bf16.msra.mxu0 %v91
    %107 = vmatpush.bf16.msra.mxu0 %v90
    %108 = vmatmul.bf16.gmra.mxu0 %v98
    %v109 = vpop.f32.mrf.mxu0
    %v110 = vadd.f32 0.0, %v109
    %v111 = vpop.f32.mrf.mxu0
    %112 = vdwg.mxu0
    %v113 = vadd.f32 %v71, %v110
    %vm114 = vcmask 74752
    %115 = vst.msk [vmem:[#allocation2] sm:$0x3] %vm114, %v113
    // Predicated region
    $region26: #{_lambda_.21} parent=1 // pred_check
      %p116 = pneg %p22
    $region27: #{_lambda_.21} parent=1 // pred_check_branch
      %118 = sbr.rel (%p116) target = $region29
    $region28: #{_lambda_.21} parent=1 // pred_region
      %v119 = vld [vmem:[#allocation2] sm:$0x3]
      %v120 = vld [vmem:[%s2] sm:$0x1]
      %v122 = vperm.slane %v120, 0
      %v124 = vadd.f32 %v119, %v122
      %v125 = vsel %vm114, %v124, -inf
      %126 = vmax.xlane.f32.xlu0 %v125
      %v127 = vpop.xlane.xlu0 %126
      %v128 = vsub.f32 %v124, %v127
      %v129 = vmul.f32 %v128, 1.442695
      %v130 = vpow.pop %v129
      %v131 = vsel %vm114, %v130, 0.0
      %132 = vadd.xlane.f32.xlu0 %v131
      %v133 = vpop.xlane.xlu0 %132
      %v134 = vrcp.pop %v133
      %v135 = vmul.f32 %v133, %v134
      %v136 = vsub.f32 1.0, %v135
      %v137 = vmul.f32 %v134, %v136
      %v138 = vadd.f32 %v134, %v137
      %vm139 = vweird.f32 %v133
      %vm140 = vweird.f32 %v134
      %vm141 = vmor %vm139, %vm140
      %v142 = vsel %vm141, %v134, %v138
      %v143 = vand.u32 2147483647, %v133
      %vm144 = vcmp.eq.f32.partialorder %v143, 8.507059e+37
      %v145 = vand.u32 %v133, 2147483648
      %v146 = vor.u32 1.1754944e-38, %v145
      %v147 = vsel %vm144, %v146, %v142
      %v148 = vmul.f32 %v130, %v147
      %149 = vst.msk [vmem:[#allocation3] sm:$0x3] %vm114, %v148
    $region29: #{_lambda_.21} parent=1 // pred_fallthru
      _
    // Predicated region
    $region30: #{_lambda_.21} parent=1 // pred_check
      _
    $region31: #{_lambda_.21} parent=1 // pred_check_branch
      %151 = sbr.rel (0) target = $region33
    $region32: #{_lambda_.21} parent=1 // pred_region
      %153 = vsyncadd [#allocation4], 0
      %s155 = sshll.u32 [#allocation3], 4
      %s156 = int_to_ptr.vmem [resolvable:$true] %s155
      %s157 = sshll.u32 %s5, 4
      %s158 = int_to_ptr.hbm [resolvable:$true] %s157
      %160 = dma.vmem_to_hbm [thread:$0]  %s156, 32, %s158, [#allocation4]
    $region33: #{_lambda_.21} parent=1 // pred_fallthru
      _
    // Predicated region
    $region34: #{_lambda_.21} parent=1 // pred_check
      _
    $region35: #{_lambda_.21} parent=1 // pred_check_branch
      %162 = sbr.rel (0) target = $region37
    $region36: #{_lambda_.21} parent=1 // pred_region
      %164 = dma.done [#allocation4], 32
    $region37: #{_lambda_.21} parent=1 // pred_fallthru
      _
    %165 = vsyncpa [#allocation4], 1

</llo_original>
